<compile_context>
chip_gen: v7x
topology: tpu7x:2x2x1
jax: 0.10.0
libtpu: 0.0.40
codegen_flags: <defaults>
</compile_context>

<pallas_src>
import functools

import jax
import jax.numpy as jnp
from jax import lax
from jax.experimental import pallas as pl
from jax.experimental.pallas import tpu as pltpu

_NEG_BIG = -1e30


# ----------------------------------------------------------------------------
# Small helpers
# ----------------------------------------------------------------------------
def _round_up(x, m):
    return (x + m - 1) // m * m


def _cdiv(a, b):
    return (a + b - 1) // b


def _row_tile(M, target=512):
    """Row tile: multiple of 8, <= target, and (when possible) <= ceil(M/2) so
    every row grid has >= 2 programs and both v7x TensorCores get work."""
    return max(8, min(_round_up(target, 8), _round_up((M + 1) // 2, 8)))


def _seq_tile(T, target=256):
    for t in (target, 128, 64, 32, 16, 8):
        if t <= T and T % t == 0:
            return t
    return T


@functools.lru_cache(maxsize=None)
def _vmem_limit():
    """Generation-adaptive scoped-VMEM limit: ~3/4 of physical VMEM (capped at
    100 MiB) where the chip exposes it (128 MiB on v4/v5/v6 -> deeper buffering
    for the mem-bound linears); conservative 32 MiB fallback (v7x has 64 MiB)."""
    try:
        cap = pltpu.get_tpu_info().vmem_capacity_bytes
        return int(min(cap * 3 // 4, 100 * 1024 * 1024))
    except Exception:
        return 32 * 1024 * 1024


def _cparams(semantics):
    return pltpu.CompilerParams(dimension_semantics=semantics,
                                vmem_limit_bytes=_vmem_limit())


def _resident(shape):
    """Grid-invariant operand (weights / biases / LN params): constant index_map
    so it is fetched once, and single-buffered (pl.Buffered(1)) so the resident
    copy is not duplicated by the pipeline (VMEM headroom on v7x)."""
    idx = lambda *_: (0,) * len(shape)
    try:
        return pl.BlockSpec(shape, idx, pipeline_mode=pl.Buffered(1))
    except Exception:  # older jax without pipeline_mode: fall back to default
        return pl.BlockSpec(shape, idx)


# ----------------------------------------------------------------------------
# Fused frontend + QKV projection (h stays in VMEM for the QKV matmul)
# ----------------------------------------------------------------------------
def _frontend_qkv_kernel(x_ref, wi_ref, bi_ref, wq_ref, bq_ref, h_ref, qkv_ref):
    h = jnp.dot(x_ref[...], wi_ref[...],
                preferred_element_type=jnp.float32) + bi_ref[...]
    h = h.astype(jnp.bfloat16)
    h_ref[...] = h
    qkv = jnp.dot(h, wq_ref[...],
                  preferred_element_type=jnp.float32) + bq_ref[...]
    qkv_ref[...] = qkv.astype(qkv_ref.dtype)


def frontend_qkv_proj(x, w_in, b_in, w_qkv, b_qkv, row_tile=512):
    """h = x @ w_in + b_in (bf16 out for the residual); qkv = h @ w_qkv + b_qkv."""
    M, K = x.shape
    D = w_in.shape[1]
    N3 = w_qkv.shape[1]
    tm = _row_tile(M, row_tile)
    return pl.pallas_call(
        _frontend_qkv_kernel,
        out_shape=(jax.ShapeDtypeStruct((M, D), jnp.bfloat16),
                   jax.ShapeDtypeStruct((M, N3), jnp.bfloat16)),
        grid=(_cdiv(M, tm),),
        in_specs=[
            pl.BlockSpec((tm, K), lambda i: (i, 0)),
            _resident((K, D)), _resident((1, D)),
            _resident((D, N3)), _resident((1, N3)),
        ],
        out_specs=(pl.BlockSpec((tm, D), lambda i: (i, 0)),
                   pl.BlockSpec((tm, N3), lambda i: (i, 0))),
        compiler_params=_cparams(("parallel",)),
    )(x.astype(jnp.bfloat16), w_in.astype(jnp.bfloat16),
      b_in.reshape(1, D).astype(jnp.float32),
      w_qkv.astype(jnp.bfloat16), b_qkv.reshape(1, N3).astype(jnp.float32))


# ----------------------------------------------------------------------------
# Matmul + residual-add + LayerNorm epilogue (attention output projection)
# ----------------------------------------------------------------------------
def _linear_add_ln_kernel(x_ref, w_ref, b_ref, r_ref, g_ref, bt_ref, o_ref, *, eps):
    y = jnp.dot(x_ref[...], w_ref[...], preferred_element_type=jnp.float32)
    y = y + b_ref[...] + r_ref[...].astype(jnp.float32)
    mu = jnp.mean(y, axis=-1, keepdims=True)
    var = jnp.mean((y - mu) ** 2, axis=-1, keepdims=True)
    o_ref[...] = ((y - mu) * lax.rsqrt(var + eps) * g_ref[...]
                  + bt_ref[...]).astype(o_ref.dtype)


def linear_add_layernorm(x, w, b, res, gamma, beta, eps=1e-5,
                         out_dtype=jnp.bfloat16, row_tile=512):
    """LayerNorm(res + x @ w + b) over the last dim (post-norm transformer)."""
    M, K = x.shape
    N = w.shape[1]
    tm = _row_tile(M, row_tile)
    return pl.pallas_call(
        functools.partial(_linear_add_ln_kernel, eps=eps),
        out_shape=jax.ShapeDtypeStruct((M, N), out_dtype),
        grid=(_cdiv(M, tm),),
        in_specs=[
            pl.BlockSpec((tm, K), lambda i: (i, 0)),
            _resident((K, N)), _resident((1, N)),
            pl.BlockSpec((tm, N), lambda i: (i, 0)),
            _resident((1, N)), _resident((1, N)),
        ],
        out_specs=pl.BlockSpec((tm, N), lambda i: (i, 0)),
        compiler_params=_cparams(("parallel",)),
    )(x.astype(jnp.bfloat16), w.astype(jnp.bfloat16),
      b.reshape(1, N).astype(jnp.float32), res.astype(jnp.bfloat16),
      gamma.reshape(1, N).astype(jnp.float32),
      beta.reshape(1, N).astype(jnp.float32))


# ----------------------------------------------------------------------------
# Fully fused FFN: LayerNorm(x + relu(x @ w1 + b1) @ w2 + b2)
# ----------------------------------------------------------------------------
def _ffn_add_ln_kernel(x_ref, w1_ref, b1_ref, w2_ref, b2_ref, g_ref, bt_ref,
                       o_ref, *, eps):
    x = x_ref[...]                                              # (tm, D) bf16
    f = jnp.dot(x, w1_ref[...], preferred_element_type=jnp.float32) + b1_ref[...]
    f = jnp.maximum(f, 0.0).astype(jnp.bfloat16)                # (tm, d_ff)
    y = jnp.dot(f, w2_ref[...], preferred_element_type=jnp.float32)
    y = y + b2_ref[...] + x.astype(jnp.float32)
    mu = jnp.mean(y, axis=-1, keepdims=True)
    var = jnp.mean((y - mu) ** 2, axis=-1, keepdims=True)
    o_ref[...] = ((y - mu) * lax.rsqrt(var + eps) * g_ref[...]
                  + bt_ref[...]).astype(o_ref.dtype)


def ffn_add_layernorm(x, w1, b1, w2, b2, gamma, beta, eps=1e-5,
                      out_dtype=jnp.bfloat16, row_tile=512):
    """Both FFN matmuls in one kernel — the (M, d_ff) activation never hits HBM."""
    M, K = x.shape
    H = w1.shape[1]
    N = w2.shape[1]
    tm = _row_tile(M, row_tile)
    return pl.pallas_call(
        functools.partial(_ffn_add_ln_kernel, eps=eps),
        out_shape=jax.ShapeDtypeStruct((M, N), out_dtype),
        grid=(_cdiv(M, tm),),
        in_specs=[
            pl.BlockSpec((tm, K), lambda i: (i, 0)),
            _resident((K, H)), _resident((1, H)),
            _resident((H, N)), _resident((1, N)),
            _resident((1, N)), _resident((1, N)),
        ],
        out_specs=pl.BlockSpec((tm, N), lambda i: (i, 0)),
        compiler_params=_cparams(("parallel",)),
    )(x.astype(jnp.bfloat16), w1.astype(jnp.bfloat16),
      b1.reshape(1, H).astype(jnp.float32),
      w2.astype(jnp.bfloat16), b2.reshape(1, N).astype(jnp.float32),
      gamma.reshape(1, N).astype(jnp.float32),
      beta.reshape(1, N).astype(jnp.float32))


# ----------------------------------------------------------------------------
# CTC projection fused with log-softmax
# ----------------------------------------------------------------------------
def _logsoftmax_kernel(x_ref, w_ref, b_ref, o_ref):
    y = jnp.dot(x_ref[...], w_ref[...], preferred_element_type=jnp.float32)
    y = y + b_ref[...]
    m = jnp.max(y, axis=-1, keepdims=True)
    z = y - m
    lse = jnp.log(jnp.sum(jnp.exp(z), axis=-1, keepdims=True))
    o_ref[...] = (z - lse).astype(o_ref.dtype)


def _tiled_logsoftmax_kernel(x_ref, w_ref, b_ref, o_ref, m_sc, l_sc):
    # Two passes over the N tiles: pass 0 accumulates the online LSE stats,
    # pass 1 recomputes the tile and writes the normalized values.
    p = pl.program_id(1)
    j = pl.program_id(2)
    y = jnp.dot(x_ref[...], w_ref[...], preferred_element_type=jnp.float32)
    y = y + b_ref[...]

    @pl.when(jnp.logical_and(p == 0, j == 0))
    def _():
        m_sc[...] = jnp.full_like(m_sc, _NEG_BIG)
        l_sc[...] = jnp.zeros_like(l_sc)

    @pl.when(p == 0)
    def _():
        m_new = jnp.maximum(m_sc[...], jnp.max(y, axis=-1, keepdims=True))
        l_sc[...] = (l_sc[...] * jnp.exp(m_sc[...] - m_new)
                     + jnp.sum(jnp.exp(y - m_new), axis=-1, keepdims=True))
        m_sc[...] = m_new
        o_ref[...] = y                      # placeholder, rewritten in pass 1

    @pl.when(p == 1)
    def _():
        o_ref[...] = y - m_sc[...] - jnp.log(l_sc[...])


def linear_log_softmax(x, w, b, row_tile=512):
    """log_softmax(x @ w + b). Small vocab: single pass with the whole row
    resident. Large vocab: two-pass online-LSE over N tiles so the (tm, V) f32
    block never has to fit in VMEM (and the N axis gives extra grid work)."""
    M, K = x.shape
    N = w.shape[1]
    xb = x.astype(jnp.bfloat16)
    wb = w.astype(jnp.bfloat16)
    bb = b.reshape(1, N).astype(jnp.float32)

    tn = None
    if N > 2048:
        tn = next((t for t in (1024, 512, 256, 128) if N % t == 0), None)

    if tn is None:
        budget = 4 * 1024 * 1024                       # cap the (tm, N) f32 block
        tm = _row_tile(M, min(row_tile, max(8, budget // (4 * N))))
        return pl.pallas_call(
            _logsoftmax_kernel,
            out_shape=jax.ShapeDtypeStruct((M, N), jnp.float32),
            grid=(_cdiv(M, tm),),
            in_specs=[pl.BlockSpec((tm, K), lambda i: (i, 0)),
                      _resident((K, N)), _resident((1, N))],
            out_specs=pl.BlockSpec((tm, N), lambda i: (i, 0)),
            compiler_params=_cparams(("parallel",)),
        )(xb, wb, bb)

    tm = _row_tile(M, row_tile)
    return pl.pallas_call(
        _tiled_logsoftmax_kernel,
        out_shape=jax.ShapeDtypeStruct((M, N), jnp.float32),
        grid=(_cdiv(M, tm), 2, N // tn),
        in_specs=[pl.BlockSpec((tm, K), lambda i, p, j: (i, 0)),
                  pl.BlockSpec((K, tn), lambda i, p, j: (0, j)),
                  pl.BlockSpec((1, tn), lambda i, p, j: (0, j))],
        out_specs=pl.BlockSpec((tm, tn), lambda i, p, j: (i, j)),
        scratch_shapes=[pltpu.VMEM((tm, 1), jnp.float32),
                        pltpu.VMEM((tm, 1), jnp.float32)],
        compiler_params=_cparams(("parallel", "arbitrary", "arbitrary")),
    )(xb, wb, bb)


# ----------------------------------------------------------------------------
# Flash-style masked single-head self-attention reading the fused QKV tensor
# ----------------------------------------------------------------------------
def _flash_attn_kernel(q_ref, k_ref, v_ref, bias_ref, o_ref, m_sc, l_sc, acc_sc):
    kv = pl.program_id(2)

    @pl.when(kv == 0)
    def _():
        m_sc[...] = jnp.full_like(m_sc, _NEG_BIG)
        l_sc[...] = jnp.zeros_like(l_sc)
        acc_sc[...] = jnp.zeros_like(acc_sc)

    q = q_ref[0]                                      # (tq, D) bf16 (pre-scaled)
    k = k_ref[0]                                      # (tk, D) bf16
    v = v_ref[0]                                      # (tk, D) bf16
    # Contract the last dims of q and k (MXU "nt" form, no explicit transpose).
    # If profiling ever shows an in-loop vxpose here, carry K pre-transposed.
    s = lax.dot_general(q, k, (((1,), (1,)), ((), ())),
                        preferred_element_type=jnp.float32)          # (tq, tk)
    s = s + bias_ref[0]                # additive key mask: add, not cmp+select
    m_new = jnp.maximum(m_sc[...], jnp.max(s, axis=-1, keepdims=True))
    alpha = jnp.exp(m_sc[...] - m_new)
    p = jnp.exp(s - m_new)
    l_sc[...] = alpha * l_sc[...] + jnp.sum(p, axis=-1, keepdims=True)
    acc_sc[...] = alpha * acc_sc[...] + jnp.dot(
        p.astype(v.dtype), v, preferred_element_type=jnp.float32)
    m_sc[...] = m_new

    @pl.when(kv == pl.num_programs(2) - 1)
    def _():
        # TODO(synk): xlen == 0 (fully masked query row) would divide by l = 0;
        # callers guarantee xlens >= 1 (matches the PyTorch module's usage).
        o_ref[0] = (acc_sc[...] * pl.reciprocal(l_sc[...], approx=True)
                    ).astype(o_ref.dtype)


def self_attention_qkv(qkv, key_bias, out_dtype=jnp.bfloat16):
    """qkv: (B, T, 3D) fused projection (Q already scaled by 1/sqrt(D));
    key_bias: (B, 1, T) additive mask (0 = valid key, -1e30 = padded)."""
    B, T, D3 = qkv.shape
    D = D3 // 3
    tq = _seq_tile(T)
    tk = _seq_tile(T)
    return pl.pallas_call(
        _flash_attn_kernel,
        out_shape=jax.ShapeDtypeStruct((B, T, D), out_dtype),
        grid=(B, T // tq, T // tk),
        in_specs=[
            # Q/K/V are lane-blocks 0/1/2 of the fused qkv tensor — no jnp.split.
            pl.BlockSpec((1, tq, D), lambda b, qi, ki: (b, qi, 0)),
            pl.BlockSpec((1, tk, D), lambda b, qi, ki: (b, ki, 1)),
            pl.BlockSpec((1, tk, D), lambda b, qi, ki: (b, ki, 2)),
            pl.BlockSpec((1, 1, tk), lambda b, qi, ki: (b, 0, ki)),
        ],
        out_specs=pl.BlockSpec((1, tq, D), lambda b, qi, ki: (b, qi, 0)),
        scratch_shapes=[
            pltpu.VMEM((tq, 1), jnp.float32),   # running max
            pltpu.VMEM((tq, 1), jnp.float32),   # running denom
            pltpu.VMEM((tq, D), jnp.float32),   # output accumulator
        ],
        compiler_params=_cparams(("parallel", "parallel", "arbitrary")),
    )(qkv, qkv, qkv, key_bias.astype(jnp.float32))


# ----------------------------------------------------------------------------
# CTC loss (forward algorithm; label gather hoisted out of the scan)
# ----------------------------------------------------------------------------
def ctc_loss(log_probs, xlens, ys, ylens, blank=0):
    """log_probs: (B, T, V) log-softmax outputs. Matches torch.nn.CTCLoss with
    reduction='mean' (per-sample NLL / target length, then mean over batch)."""
    B, T, V = log_probs.shape
    L = ys.shape[1]
    S = 2 * L + 1
    neg_inf = jnp.float32(_NEG_BIG)

    ext = jnp.full((B, S), blank, dtype=jnp.int32)
    ext = ext.at[:, 1::2].set(ys.astype(jnp.int32))

    same_as_prev2 = jnp.concatenate(
        [jnp.ones((B, 2), dtype=bool), ext[:, 2:] == ext[:, :-2]], axis=1)
    allow_skip = jnp.logical_not((ext == blank) | same_as_prev2)      # (B, S)

    # One batched (B, T, S) gather instead of T serial gathers in the scan.
    ext_bt = jnp.broadcast_to(ext[:, None, :], (B, T, S))
    lp_labels = jnp.take_along_axis(log_probs, ext_bt, axis=2)        # (B, T, S)

    lp0 = lp_labels[:, 0]
    alpha = jnp.full((B, S), neg_inf)
    alpha = alpha.at[:, 0].set(lp0[:, 0])
    alpha = alpha.at[:, 1].set(jnp.where(ylens > 0, lp0[:, 1], neg_inf))

    def step(a, t):
        lp_t = lax.dynamic_index_in_dim(lp_labels, t, axis=1, keepdims=False)
        a1 = jnp.concatenate([jnp.full((B, 1), neg_inf), a[:, :-1]], axis=1)
        a2 = jnp.concatenate([jnp.full((B, 2), neg_inf), a[:, :-2]], axis=1)
        a2 = jnp.where(allow_skip, a2, neg_inf)
        new = jnp.logaddexp(jnp.logaddexp(a, a1), a2) + lp_t
        new = jnp.where((t < xlens)[:, None], new, a)   # freeze past xlen
        return new, None

    alpha, _ = lax.scan(step, alpha, jnp.arange(1, T))

    idx_last = (2 * ylens).astype(jnp.int32)
    idx_prev = jnp.maximum(idx_last - 1, 0)
    a_last = jnp.take_along_axis(alpha, idx_last[:, None], axis=1)[:, 0]
    a_prev = jnp.take_along_axis(alpha, idx_prev[:, None], axis=1)[:, 0]
    a_prev = jnp.where(ylens > 0, a_prev, neg_inf)
    nll = -jnp.logaddexp(a_last, a_prev)
    # TODO(synk): torch CTCLoss zero_infinity semantics not replicated.
    return jnp.mean(nll / jnp.maximum(ylens.astype(jnp.float32), 1.0))


# ----------------------------------------------------------------------------
# Model: parameters + forward (ASR.forward semantics)
# ----------------------------------------------------------------------------
def init_params(key, feat_dim, d_model, d_ff, vocab):
    keys = jax.random.split(key, 8)
    s = 0.1

    def w(k, shape):
        return (s * jax.random.normal(k, shape)).astype(jnp.float32)

    z = lambda n: jnp.zeros((n,), jnp.float32)
    o = lambda n: jnp.ones((n,), jnp.float32)
    return dict(
        w_in=w(keys[0], (feat_dim, d_model)), b_in=z(d_model),
        # Q|K|V fused into a single (D, 3D) projection.
        w_qkv=w(keys[1], (d_model, 3 * d_model)), b_qkv=z(3 * d_model),
        w_o=w(keys[2], (d_model, d_model)), b_o=z(d_model),
        ln1_g=o(d_model), ln1_b=z(d_model),
        w_ff1=w(keys[3], (d_model, d_ff)), b_ff1=z(d_ff),
        w_ff2=w(keys[4], (d_ff, d_model)), b_ff2=z(d_model),
        ln2_g=o(d_model), ln2_b=z(d_model),
        w_ctc=w(keys[5], (d_model, vocab)), b_ctc=z(vocab),
    )


def transformer_encoder(p, xs, xlens):
    B, T, F = xs.shape
    D = p["w_in"].shape[1]

    # Zero-pad the feature dim (e.g. 80 -> 128) once so the frontend
    # contraction is lane-dense and feeds full MXU columns.
    Fp = _round_up(F, 128)
    w_in = p["w_in"]
    if Fp != F:
        xs = jnp.pad(xs, ((0, 0), (0, 0), (0, Fp - F)))
        w_in = jnp.pad(w_in, ((0, Fp - F), (0, 0)))
    x2 = xs.reshape(B * T, Fp)

    # Fold the 1/sqrt(D) attention scale into the Q columns of the QKV weights
    # (removes O(tq*tk*num_kv) multiplies from the attention inner loop).
    scale = 1.0 / float(D) ** 0.5
    col_scale = jnp.concatenate([jnp.full((D,), scale, jnp.float32),
                                 jnp.ones((2 * D,), jnp.float32)])
    w_qkv = p["w_qkv"] * col_scale[None, :]
    b_qkv = p["b_qkv"] * col_scale

    # TODO(synk): the real TransformerEncoder (multi-layer, multi-head, conv
    # subsampling, positional encodings) is not instantiated; single layer,
    # single head, no subsampling here.
    h, qkv = frontend_qkv_proj(x2, w_in, p["b_in"], w_qkv, b_qkv)
    qkv = qkv.reshape(B, T, 3 * D)

    key_bias = jnp.where(jnp.arange(T)[None, :] < xlens[:, None],
                         0.0, _NEG_BIG).astype(jnp.float32)
    attn = self_attention_qkv(qkv, key_bias[:, None, :])              # (B, T, D)

    h1 = linear_add_layernorm(attn.reshape(B * T, D), p["w_o"], p["b_o"],
                              h, p["ln1_g"], p["ln1_b"])              # post-norm
    eouts2 = ffn_add_layernorm(h1, p["w_ff1"], p["b_ff1"],
                               p["w_ff2"], p["b_ff2"],
                               p["ln2_g"], p["ln2_b"])
    eouts = eouts2.reshape(B, T, D)
    elens = xlens                                                     # no subsampling
    eouts_inter = None
    return eouts, elens, eouts_inter


def ctc_decoder(p, eouts, elens, ys, ylens):
    B, T, D = eouts.shape
    log_probs = linear_log_softmax(eouts.reshape(B * T, D),
                                   p["w_ctc"], p["b_ctc"]).reshape(B, T, -1)
    loss = ctc_loss(log_probs, elens, ys, ylens, blank=0)
    loss_dict = {"loss_ctc": loss, "loss_total": loss}
    return loss, loss_dict, None


def asr_forward(p, xs, xlens, ys, ylens, ys_in, ys_out,
                soft_labels=None, ps=None, plens=None):
    """Mirrors ASR.forward. The PyTorch `xs[:, :max(xlens), :]` host-side slice
    is replaced by static padded shapes + key mask / xlens inside the kernels
    (identical loss, but jit-able with no device->host sync)."""
    # ys_in / ys_out are only consumed by attention / RNNT decoders (kept for parity).
    eouts, elens, eouts_inter = transformer_encoder(p, xs, xlens)
    loss, loss_dict, _ = ctc_decoder(p, eouts, elens, ys, ylens)
    return loss, loss_dict


# ----------------------------------------------------------------------------
if __name__ == "__main__":
    # 256-aligned hyperparameters (v6e/v7x MXU is 2x256x256); FEAT=80 is padded
    # to 128 inside the encoder. Shapes kept small for the demo.
    B, T, FEAT, D_MODEL, D_FF, VOCAB = 2, 16, 80, 256, 512, 256

    key = jax.random.PRNGKey(0)
    k_x, k_y, k_p = jax.random.split(key, 3)

    xs = jax.random.normal(k_x, (B, T, FEAT), dtype=jnp.float32)
    xlens = jnp.array([16, 12], dtype=jnp.int32)
    ys = jax.random.randint(k_y, (B, 5), 1, VOCAB, dtype=jnp.int32)   # labels 1..V-1
    ylens = jnp.array([4, 3], dtype=jnp.int32)
    # dummy sos/eos-augmented targets (only consumed by attention/RNNT decoders)
    ys_in = jnp.concatenate([jnp.zeros((B, 1), jnp.int32), ys], axis=1)
    ys_out = jnp.concatenate([ys, jnp.zeros((B, 1), jnp.int32)], axis=1)

    params = init_params(k_p, FEAT, D_MODEL, D_FF, VOCAB)

    fwd = jax.jit(asr_forward)
    loss, loss_dict = fwd(params, xs, xlens, ys, ylens, ys_in, ys_out)
    loss = jax.block_until_ready(loss)
    assert jnp.isfinite(loss), f"non-finite loss: {loss}"
    print("KERNEL_OK")
</pallas_src>

<mosaic_0001>
module attributes {stable_mosaic.version = 11 : i64} {
  func.func @_flash_attn_kernel(%arg0: i32, %arg1: i32, %arg2: i32, %arg3: memref<1x16x256xbf16, #tpu.memory_space<vmem>>, %arg4: memref<1x16x256xbf16, #tpu.memory_space<vmem>>, %arg5: memref<1x16x256xbf16, #tpu.memory_space<vmem>>, %arg6: memref<1x1x16xf32, #tpu.memory_space<vmem>>, %arg7: memref<1x16x256xbf16, #tpu.memory_space<vmem>>, %arg8: memref<16x1xf32, #tpu.memory_space<vmem>>, %arg9: memref<16x1xf32, #tpu.memory_space<vmem>>, %arg10: memref<16x256xf32, #tpu.memory_space<vmem>>) attributes {dimension_semantics = [#tpu.dimension_semantics<parallel>, #tpu.dimension_semantics<parallel>, #tpu.dimension_semantics<arbitrary>], iteration_bounds = array<i64: 2, 1, 1>, scalar_prefetch = 0 : i64, scratch_operands = 3 : i64, tpu.core_type = #tpu.core_type<tc>, window_params = [{transform_indices = @transform_0, window_bounds = array<i64: 1, 16, 256>}, {transform_indices = @transform_1, window_bounds = array<i64: 1, 16, 256>}, {transform_indices = @transform_2, window_bounds = array<i64: 1, 16, 256>}, {transform_indices = @transform_3, window_bounds = array<i64: 1, 1, 16>}, {transform_indices = @transform_4, window_bounds = array<i64: 1, 16, 256>}]} {
    %c0_i32 = arith.constant 0 : i32
    %0 = arith.cmpi eq, %arg2, %c0_i32 : i32
    %1 = arith.extui %0 : i1 to i32
    %c0_i32_0 = arith.constant 0 : i32
    %2 = arith.cmpi ne, %1, %c0_i32_0 : i32
    scf.if %2 {
      %cst_31 = arith.constant -1.000000e+30 : f32
      %41 = vector.broadcast %cst_31 : f32 to vector<16x1xf32>
      %c0_32 = arith.constant 0 : index
      %c0_33 = arith.constant 0 : index
      %42 = vector.load %arg8[%c0_32, %c0_33] : memref<16x1xf32, #tpu.memory_space<vmem>>, vector<16x1xf32>
      tpu.vector_store %arg8[%c0_32, %c0_33], %41 {strides = array<i32>} : memref<16x1xf32, #tpu.memory_space<vmem>>, vector<16x1xf32>,
      %cst_34 = arith.constant 0.000000e+00 : f32
      %43 = vector.broadcast %cst_34 : f32 to vector<16x1xf32>
      %c0_35 = arith.constant 0 : index
      %c0_36 = arith.constant 0 : index
      %44 = vector.load %arg9[%c0_35, %c0_36] : memref<16x1xf32, #tpu.memory_space<vmem>>, vector<16x1xf32>
      tpu.vector_store %arg9[%c0_35, %c0_36], %43 {strides = array<i32>} : memref<16x1xf32, #tpu.memory_space<vmem>>, vector<16x1xf32>,
      %cst_37 = arith.constant 0.000000e+00 : f32
      %45 = vector.broadcast %cst_37 : f32 to vector<16x256xf32>
      %c0_38 = arith.constant 0 : index
      %c0_39 = arith.constant 0 : index
      %46 = vector.load %arg10[%c0_38, %c0_39] : memref<16x256xf32, #tpu.memory_space<vmem>>, vector<16x256xf32>
      tpu.vector_store %arg10[%c0_38, %c0_39], %45 {strides = array<i32>} : memref<16x256xf32, #tpu.memory_space<vmem>>, vector<16x256xf32>,
    } else {
    }
    %c0 = arith.constant 0 : index
    %c0_1 = arith.constant 0 : index
    %c0_2 = arith.constant 0 : index
    %3 = vector.load %arg3[%c0, %c0_1, %c0_2] : memref<1x16x256xbf16, #tpu.memory_space<vmem>>, vector<1x16x256xbf16>
    %4 = vector.shape_cast %3 : vector<1x16x256xbf16> to vector<16x256xbf16>
    %c0_3 = arith.constant 0 : index
    %c0_4 = arith.constant 0 : index
    %c0_5 = arith.constant 0 : index
    %5 = vector.load %arg4[%c0_3, %c0_4, %c0_5] : memref<1x16x256xbf16, #tpu.memory_space<vmem>>, vector<1x16x256xbf16>
    %6 = vector.shape_cast %5 : vector<1x16x256xbf16> to vector<16x256xbf16>
    %c0_6 = arith.constant 0 : index
    %c0_7 = arith.constant 0 : index
    %c0_8 = arith.constant 0 : index
    %7 = vector.load %arg5[%c0_6, %c0_7, %c0_8] : memref<1x16x256xbf16, #tpu.memory_space<vmem>>, vector<1x16x256xbf16>
    %8 = vector.shape_cast %7 : vector<1x16x256xbf16> to vector<16x256xbf16>
    %cst = arith.constant dense<0.000000e+00> : vector<16x16xf32>
    %9 = tpu.matmul %4, %6, %cst {dimension_numbers = #tpu.dot_dimension_numbers<[1], [1], [0], [0], [0, 0, 1, 0], [], []>} : vector<16x256xbf16>, vector<16x256xbf16>, vector<16x16xf32> -> vector<16x16xf32>
    %c0_9 = arith.constant 0 : index
    %c0_10 = arith.constant 0 : index
    %c0_11 = arith.constant 0 : index
    %10 = vector.load %arg6[%c0_9, %c0_10, %c0_11] : memref<1x1x16xf32, #tpu.memory_space<vmem>>, vector<1x1x16xf32>
    %11 = vector.shape_cast %10 : vector<1x1x16xf32> to vector<1x16xf32>
    %12 = vector.broadcast %11 : vector<1x16xf32> to vector<16x16xf32>
    %13 = arith.addf %9, %12 : vector<16x16xf32>
    %c0_12 = arith.constant 0 : index
    %c0_13 = arith.constant 0 : index
    %14 = vector.load %arg8[%c0_12, %c0_13] : memref<16x1xf32, #tpu.memory_space<vmem>>, vector<16x1xf32>
    %cst_14 = arith.constant dense<0xFF800000> : vector<16xf32>
    %15 = vector.multi_reduction <maximumf>, %13, %cst_14 [1] : vector<16x16xf32> to vector<16xf32>
    %16 = vector.shape_cast %15 : vector<16xf32> to vector<16x1xf32>
    %17 = arith.maximumf %14, %16 : vector<16x1xf32>
    %c0_15 = arith.constant 0 : index
    %c0_16 = arith.constant 0 : index
    %18 = vector.load %arg8[%c0_15, %c0_16] : memref<16x1xf32, #tpu.memory_space<vmem>>, vector<16x1xf32>
    %19 = arith.subf %18, %17 : vector<16x1xf32>
    %20 = math.exp %19 : vector<16x1xf32>
    %21 = vector.broadcast %17 : vector<16x1xf32> to vector<16x16xf32>
    %22 = arith.subf %13, %21 : vector<16x16xf32>
    %23 = math.exp %22 : vector<16x16xf32>
    %c0_17 = arith.constant 0 : index
    %c0_18 = arith.constant 0 : index
    %24 = vector.load %arg9[%c0_17, %c0_18] : memref<16x1xf32, #tpu.memory_space<vmem>>, vector<16x1xf32>
    %25 = arith.mulf %20, %24 : vector<16x1xf32>
    %cst_19 = arith.constant dense<0.000000e+00> : vector<16xf32>
    %26 = vector.multi_reduction <add>, %23, %cst_19 [1] : vector<16x16xf32> to vector<16xf32>
    %27 = vector.shape_cast %26 : vector<16xf32> to vector<16x1xf32>
    %28 = arith.addf %25, %27 : vector<16x1xf32>
    %c0_20 = arith.constant 0 : index
    %c0_21 = arith.constant 0 : index
    %29 = vector.load %arg9[%c0_20, %c0_21] : memref<16x1xf32, #tpu.memory_space<vmem>>, vector<16x1xf32>
    tpu.vector_store %arg9[%c0_20, %c0_21], %28 {strides = array<i32>} : memref<16x1xf32, #tpu.memory_space<vmem>>, vector<16x1xf32>,
    %c0_22 = arith.constant 0 : index
    %c0_23 = arith.constant 0 : index
    %30 = vector.load %arg10[%c0_22, %c0_23] : memref<16x256xf32, #tpu.memory_space<vmem>>, vector<16x256xf32>
    %31 = vector.broadcast %20 : vector<16x1xf32> to vector<16x256xf32>
    %32 = arith.mulf %31, %30 : vector<16x256xf32>
    %33 = arith.truncf %23 : vector<16x16xf32> to vector<16x16xbf16>
    %cst_24 = arith.constant dense<0.000000e+00> : vector<16x256xf32>
    %34 = tpu.matmul %33, %8, %cst_24 {dimension_numbers = #tpu.dot_dimension_numbers<[1], [0], [0], [1], [0, 0, 1, 1], [], []>} : vector<16x16xbf16>, vector<16x256xbf16>, vector<16x256xf32> -> vector<16x256xf32>
    %35 = arith.addf %32, %34 : vector<16x256xf32>
    %c0_25 = arith.constant 0 : index
    %c0_26 = arith.constant 0 : index
    %36 = vector.load %arg10[%c0_25, %c0_26] : memref<16x256xf32, #tpu.memory_space<vmem>>, vector<16x256xf32>
    tpu.vector_store %arg10[%c0_25, %c0_26], %35 {strides = array<i32>} : memref<16x256xf32, #tpu.memory_space<vmem>>, vector<16x256xf32>,
    %c0_27 = arith.constant 0 : index
    %c0_28 = arith.constant 0 : index
    %37 = vector.load %arg8[%c0_27, %c0_28] : memref<16x1xf32, #tpu.memory_space<vmem>>, vector<16x1xf32>
    tpu.vector_store %arg8[%c0_27, %c0_28], %17 {strides = array<i32>} : memref<16x1xf32, #tpu.memory_space<vmem>>, vector<16x1xf32>,
    %c0_i32_29 = arith.constant 0 : i32
    %38 = arith.cmpi eq, %arg2, %c0_i32_29 : i32
    %39 = arith.extui %38 : i1 to i32
    %c0_i32_30 = arith.constant 0 : i32
    %40 = arith.cmpi ne, %39, %c0_i32_30 : i32
    scf.if %40 {
      %c0_31 = arith.constant 0 : index
      %c0_32 = arith.constant 0 : index
      %41 = vector.load %arg10[%c0_31, %c0_32] : memref<16x256xf32, #tpu.memory_space<vmem>>, vector<16x256xf32>
      %c0_33 = arith.constant 0 : index
      %c0_34 = arith.constant 0 : index
      %42 = vector.load %arg9[%c0_33, %c0_34] : memref<16x1xf32, #tpu.memory_space<vmem>>, vector<16x1xf32>
      %43 = tpu.reciprocal %42 {approx = true} : vector<16x1xf32> -> vector<16x1xf32>
      %44 = vector.broadcast %43 : vector<16x1xf32> to vector<16x256xf32>
      %45 = arith.mulf %41, %44 : vector<16x256xf32>
      %46 = arith.truncf %45 : vector<16x256xf32> to vector<16x256xbf16>
      %c0_35 = arith.constant 0 : index
      %c0_36 = arith.constant 0 : index
      %c0_37 = arith.constant 0 : index
      %47 = vector.load %arg7[%c0_35, %c0_36, %c0_37] : memref<1x16x256xbf16, #tpu.memory_space<vmem>>, vector<1x16x256xbf16>
      %48 = vector.shape_cast %47 : vector<1x16x256xbf16> to vector<16x256xbf16>
      %49 = vector.shape_cast %46 : vector<16x256xbf16> to vector<1x16x256xbf16>
      tpu.vector_store %arg7[%c0_35, %c0_36, %c0_37], %49 {strides = array<i32>} : memref<1x16x256xbf16, #tpu.memory_space<vmem>>, vector<1x16x256xbf16>,
    } else {
    }
    return
  }
  func.func @transform_0(%arg0: i32, %arg1: i32, %arg2: i32) -> (i32, i32, i32) {
    %c0_i32 = arith.constant 0 : i32
    %c0_i32_0 = arith.constant 0 : i32
    return %arg0, %arg1, %c0_i32 : i32, i32, i32
  }
  func.func @transform_1(%arg0: i32, %arg1: i32, %arg2: i32) -> (i32, i32, i32) {
    %c1_i32 = arith.constant 1 : i32
    %c0_i32 = arith.constant 0 : i32
    return %arg0, %arg2, %c1_i32 : i32, i32, i32
  }
  func.func @transform_2(%arg0: i32, %arg1: i32, %arg2: i32) -> (i32, i32, i32) {
    %c2_i32 = arith.constant 2 : i32
    %c0_i32 = arith.constant 0 : i32
    return %arg0, %arg2, %c2_i32 : i32, i32, i32
  }
  func.func @transform_3(%arg0: i32, %arg1: i32, %arg2: i32) -> (i32, i32, i32) {
    %c0_i32 = arith.constant 0 : i32
    %c0_i32_0 = arith.constant 0 : i32
    return %arg0, %c0_i32, %arg2 : i32, i32, i32
  }
  func.func @transform_4(%arg0: i32, %arg1: i32, %arg2: i32) -> (i32, i32, i32) {
    %c0_i32 = arith.constant 0 : i32
    %c0_i32_0 = arith.constant 0 : i32
    return %arg0, %arg1, %c0_i32 : i32, i32, i32
  }
}

module attributes {stable_mosaic.version = 11 : i64} {
  func.func @_frontend_qkv_kernel(%arg0: i32, %arg1: memref<16x128xbf16, #tpu.memory_space<vmem>>, %arg2: memref<128x256xbf16, #tpu.memory_space<vmem>>, %arg3: memref<1x256xf32, #tpu.memory_space<vmem>>, %arg4: memref<256x768xbf16, #tpu.memory_space<vmem>>, %arg5: memref<1x768xf32, #tpu.memory_space<vmem>>, %arg6: memref<16x256xbf16, #tpu.memory_space<vmem>>, %arg7: memref<16x768xbf16, #tpu.memory_space<vmem>>) attributes {dimension_semantics = [#tpu.dimension_semantics<parallel>], iteration_bounds = array<i64: 2>, scalar_prefetch = 0 : i64, scratch_operands = 0 : i64, tpu.core_type = #tpu.core_type<tc>, window_params = [{transform_indices = @transform_0, window_bounds = array<i64: 16, 128>}, {pipeline_mode = #tpu.pipeline_mode<synchronous>, transform_indices = @transform_1, window_bounds = array<i64: 128, 256>}, {pipeline_mode = #tpu.pipeline_mode<synchronous>, transform_indices = @transform_2, window_bounds = array<i64: 1, 256>}, {pipeline_mode = #tpu.pipeline_mode<synchronous>, transform_indices = @transform_3, window_bounds = array<i64: 256, 768>}, {pipeline_mode = #tpu.pipeline_mode<synchronous>, transform_indices = @transform_4, window_bounds = array<i64: 1, 768>}, {transform_indices = @transform_5, window_bounds = array<i64: 16, 256>}, {transform_indices = @transform_6, window_bounds = array<i64: 16, 768>}]} {
    %c0 = arith.constant 0 : index
    %c0_0 = arith.constant 0 : index
    %0 = vector.load %arg1[%c0, %c0_0] : memref<16x128xbf16, #tpu.memory_space<vmem>>, vector<16x128xbf16>
    %c0_1 = arith.constant 0 : index
    %c0_2 = arith.constant 0 : index
    %1 = vector.load %arg2[%c0_1, %c0_2] : memref<128x256xbf16, #tpu.memory_space<vmem>>, vector<128x256xbf16>
    %cst = arith.constant dense<0.000000e+00> : vector<16x256xf32>
    %2 = tpu.matmul %0, %1, %cst {dimension_numbers = #tpu.dot_dimension_numbers<[1], [0], [0], [1], [0, 0, 1, 1], [], []>} : vector<16x128xbf16>, vector<128x256xbf16>, vector<16x256xf32> -> vector<16x256xf32>
    %c0_3 = arith.constant 0 : index
    %c0_4 = arith.constant 0 : index
    %3 = vector.load %arg3[%c0_3, %c0_4] : memref<1x256xf32, #tpu.memory_space<vmem>>, vector<1x256xf32>
    %4 = vector.broadcast %3 : vector<1x256xf32> to vector<16x256xf32>
    %5 = arith.addf %2, %4 : vector<16x256xf32>
    %6 = arith.truncf %5 : vector<16x256xf32> to vector<16x256xbf16>
    %c0_5 = arith.constant 0 : index
    %c0_6 = arith.constant 0 : index
    %7 = vector.load %arg6[%c0_5, %c0_6] : memref<16x256xbf16, #tpu.memory_space<vmem>>, vector<16x256xbf16>
    tpu.vector_store %arg6[%c0_5, %c0_6], %6 {strides = array<i32>} : memref<16x256xbf16, #tpu.memory_space<vmem>>, vector<16x256xbf16>,
    %c0_7 = arith.constant 0 : index
    %c0_8 = arith.constant 0 : index
    %8 = vector.load %arg4[%c0_7, %c0_8] : memref<256x768xbf16, #tpu.memory_space<vmem>>, vector<256x768xbf16>
    %cst_9 = arith.constant dense<0.000000e+00> : vector<16x768xf32>
    %9 = tpu.matmul %6, %8, %cst_9 {dimension_numbers = #tpu.dot_dimension_numbers<[1], [0], [0], [1], [0, 0, 1, 1], [], []>} : vector<16x256xbf16>, vector<256x768xbf16>, vector<16x768xf32> -> vector<16x768xf32>
    %c0_10 = arith.constant 0 : index
    %c0_11 = arith.constant 0 : index
    %10 = vector.load %arg5[%c0_10, %c0_11] : memref<1x768xf32, #tpu.memory_space<vmem>>, vector<1x768xf32>
    %11 = vector.broadcast %10 : vector<1x768xf32> to vector<16x768xf32>
    %12 = arith.addf %9, %11 : vector<16x768xf32>
    %13 = arith.truncf %12 : vector<16x768xf32> to vector<16x768xbf16>
    %c0_12 = arith.constant 0 : index
    %c0_13 = arith.constant 0 : index
    %14 = vector.load %arg7[%c0_12, %c0_13] : memref<16x768xbf16, #tpu.memory_space<vmem>>, vector<16x768xbf16>
    tpu.vector_store %arg7[%c0_12, %c0_13], %13 {strides = array<i32>} : memref<16x768xbf16, #tpu.memory_space<vmem>>, vector<16x768xbf16>,
    return
  }
  func.func @transform_0(%arg0: i32) -> (i32, i32) {
    %c0_i32 = arith.constant 0 : i32
    %c0_i32_0 = arith.constant 0 : i32
    return %arg0, %c0_i32 : i32, i32
  }
  func.func @transform_1(%arg0: i32) -> (i32, i32) {
    %c0_i32 = arith.constant 0 : i32
    %c0_i32_0 = arith.constant 0 : i32
    %c0_i32_1 = arith.constant 0 : i32
    return %c0_i32, %c0_i32_0 : i32, i32
  }
  func.func @transform_2(%arg0: i32) -> (i32, i32) {
    %c0_i32 = arith.constant 0 : i32
    %c0_i32_0 = arith.constant 0 : i32
    %c0_i32_1 = arith.constant 0 : i32
    return %c0_i32, %c0_i32_0 : i32, i32
  }
  func.func @transform_3(%arg0: i32) -> (i32, i32) {
    %c0_i32 = arith.constant 0 : i32
    %c0_i32_0 = arith.constant 0 : i32
    %c0_i32_1 = arith.constant 0 : i32
    return %c0_i32, %c0_i32_0 : i32, i32
  }
  func.func @transform_4(%arg0: i32) -> (i32, i32) {
    %c0_i32 = arith.constant 0 : i32
    %c0_i32_0 = arith.constant 0 : i32
    %c0_i32_1 = arith.constant 0 : i32
    return %c0_i32, %c0_i32_0 : i32, i32
  }
  func.func @transform_5(%arg0: i32) -> (i32, i32) {
    %c0_i32 = arith.constant 0 : i32
    %c0_i32_0 = arith.constant 0 : i32
    return %arg0, %c0_i32 : i32, i32
  }
  func.func @transform_6(%arg0: i32) -> (i32, i32) {
    %c0_i32 = arith.constant 0 : i32
    %c0_i32_0 = arith.constant 0 : i32
    return %arg0, %c0_i32 : i32, i32
  }
}

module attributes {stable_mosaic.version = 11 : i64} {
  func.func @_linear_add_ln_kernel(%arg0: i32, %arg1: memref<16x256xbf16, #tpu.memory_space<vmem>>, %arg2: memref<256x256xbf16, #tpu.memory_space<vmem>>, %arg3: memref<1x256xf32, #tpu.memory_space<vmem>>, %arg4: memref<16x256xbf16, #tpu.memory_space<vmem>>, %arg5: memref<1x256xf32, #tpu.memory_space<vmem>>, %arg6: memref<1x256xf32, #tpu.memory_space<vmem>>, %arg7: memref<16x256xbf16, #tpu.memory_space<vmem>>) attributes {dimension_semantics = [#tpu.dimension_semantics<parallel>], iteration_bounds = array<i64: 2>, scalar_prefetch = 0 : i64, scratch_operands = 0 : i64, tpu.core_type = #tpu.core_type<tc>, window_params = [{transform_indices = @transform_0, window_bounds = array<i64: 16, 256>}, {pipeline_mode = #tpu.pipeline_mode<synchronous>, transform_indices = @transform_1, window_bounds = array<i64: 256, 256>}, {pipeline_mode = #tpu.pipeline_mode<synchronous>, transform_indices = @transform_2, window_bounds = array<i64: 1, 256>}, {transform_indices = @transform_3, window_bounds = array<i64: 16, 256>}, {pipeline_mode = #tpu.pipeline_mode<synchronous>, transform_indices = @transform_4, window_bounds = array<i64: 1, 256>}, {pipeline_mode = #tpu.pipeline_mode<synchronous>, transform_indices = @transform_5, window_bounds = array<i64: 1, 256>}, {transform_indices = @transform_6, window_bounds = array<i64: 16, 256>}]} {
    %c0 = arith.constant 0 : index
    %c0_0 = arith.constant 0 : index
    %0 = vector.load %arg1[%c0, %c0_0] : memref<16x256xbf16, #tpu.memory_space<vmem>>, vector<16x256xbf16>
    %c0_1 = arith.constant 0 : index
    %c0_2 = arith.constant 0 : index
    %1 = vector.load %arg2[%c0_1, %c0_2] : memref<256x256xbf16, #tpu.memory_space<vmem>>, vector<256x256xbf16>
    %cst = arith.constant dense<0.000000e+00> : vector<16x256xf32>
    %2 = tpu.matmul %0, %1, %cst {dimension_numbers = #tpu.dot_dimension_numbers<[1], [0], [0], [1], [0, 0, 1, 1], [], []>} : vector<16x256xbf16>, vector<256x256xbf16>, vector<16x256xf32> -> vector<16x256xf32>
    %c0_3 = arith.constant 0 : index
    %c0_4 = arith.constant 0 : index
    %3 = vector.load %arg3[%c0_3, %c0_4] : memref<1x256xf32, #tpu.memory_space<vmem>>, vector<1x256xf32>
    %4 = vector.broadcast %3 : vector<1x256xf32> to vector<16x256xf32>
    %5 = arith.addf %2, %4 : vector<16x256xf32>
    %c0_5 = arith.constant 0 : index
    %c0_6 = arith.constant 0 : index
    %6 = vector.load %arg4[%c0_5, %c0_6] : memref<16x256xbf16, #tpu.memory_space<vmem>>, vector<16x256xbf16>
    %7 = arith.extf %6 : vector<16x256xbf16> to vector<16x256xf32>
    %8 = arith.addf %5, %7 : vector<16x256xf32>
    %cst_7 = arith.constant dense<0.000000e+00> : vector<16xf32>
    %9 = vector.multi_reduction <add>, %8, %cst_7 [1] : vector<16x256xf32> to vector<16xf32>
    %10 = vector.shape_cast %9 : vector<16xf32> to vector<16x1xf32>
    %cst_8 = arith.constant 2.560000e+02 : f32
    %11 = vector.broadcast %cst_8 : f32 to vector<16x1xf32>
    %12 = arith.divf %10, %11 : vector<16x1xf32>
    %13 = vector.broadcast %12 : vector<16x1xf32> to vector<16x256xf32>
    %14 = arith.subf %8, %13 : vector<16x256xf32>
    %15 = arith.mulf %14, %14 : vector<16x256xf32>
    %cst_9 = arith.constant dense<0.000000e+00> : vector<16xf32>
    %16 = vector.multi_reduction <add>, %15, %cst_9 [1] : vector<16x256xf32> to vector<16xf32>
    %17 = vector.shape_cast %16 : vector<16xf32> to vector<16x1xf32>
    %cst_10 = arith.constant 2.560000e+02 : f32
    %18 = vector.broadcast %cst_10 : f32 to vector<16x1xf32>
    %19 = arith.divf %17, %18 : vector<16x1xf32>
    %20 = vector.broadcast %12 : vector<16x1xf32> to vector<16x256xf32>
    %21 = arith.subf %8, %20 : vector<16x256xf32>
    %cst_11 = arith.constant 9.99999974E-6 : f32
    %22 = vector.broadcast %cst_11 : f32 to vector<16x1xf32>
    %23 = arith.addf %19, %22 : vector<16x1xf32>
    %24 = math.rsqrt %23 : vector<16x1xf32>
    %25 = vector.broadcast %24 : vector<16x1xf32> to vector<16x256xf32>
    %26 = arith.mulf %21, %25 : vector<16x256xf32>
    %c0_12 = arith.constant 0 : index
    %c0_13 = arith.constant 0 : index
    %27 = vector.load %arg5[%c0_12, %c0_13] : memref<1x256xf32, #tpu.memory_space<vmem>>, vector<1x256xf32>
    %28 = vector.broadcast %27 : vector<1x256xf32> to vector<16x256xf32>
    %29 = arith.mulf %26, %28 : vector<16x256xf32>
    %c0_14 = arith.constant 0 : index
    %c0_15 = arith.constant 0 : index
    %30 = vector.load %arg6[%c0_14, %c0_15] : memref<1x256xf32, #tpu.memory_space<vmem>>, vector<1x256xf32>
    %31 = vector.broadcast %30 : vector<1x256xf32> to vector<16x256xf32>
    %32 = arith.addf %29, %31 : vector<16x256xf32>
    %33 = arith.truncf %32 : vector<16x256xf32> to vector<16x256xbf16>
    %c0_16 = arith.constant 0 : index
    %c0_17 = arith.constant 0 : index
    %34 = vector.load %arg7[%c0_16, %c0_17] : memref<16x256xbf16, #tpu.memory_space<vmem>>, vector<16x256xbf16>
    tpu.vector_store %arg7[%c0_16, %c0_17], %33 {strides = array<i32>} : memref<16x256xbf16, #tpu.memory_space<vmem>>, vector<16x256xbf16>,
    return
  }
  func.func @transform_0(%arg0: i32) -> (i32, i32) {
    %c0_i32 = arith.constant 0 : i32
    %c0_i32_0 = arith.constant 0 : i32
    return %arg0, %c0_i32 : i32, i32
  }
  func.func @transform_1(%arg0: i32) -> (i32, i32) {
    %c0_i32 = arith.constant 0 : i32
    %c0_i32_0 = arith.constant 0 : i32
    %c0_i32_1 = arith.constant 0 : i32
    return %c0_i32, %c0_i32_0 : i32, i32
  }
  func.func @transform_2(%arg0: i32) -> (i32, i32) {
    %c0_i32 = arith.constant 0 : i32
    %c0_i32_0 = arith.constant 0 : i32
    %c0_i32_1 = arith.constant 0 : i32
    return %c0_i32, %c0_i32_0 : i32, i32
  }
  func.func @transform_3(%arg0: i32) -> (i32, i32) {
    %c0_i32 = arith.constant 0 : i32
    %c0_i32_0 = arith.constant 0 : i32
    return %arg0, %c0_i32 : i32, i32
  }
  func.func @transform_4(%arg0: i32) -> (i32, i32) {
    %c0_i32 = arith.constant 0 : i32
    %c0_i32_0 = arith.constant 0 : i32
    %c0_i32_1 = arith.constant 0 : i32
    return %c0_i32, %c0_i32_0 : i32, i32
  }
  func.func @transform_5(%arg0: i32) -> (i32, i32) {
    %c0_i32 = arith.constant 0 : i32
    %c0_i32_0 = arith.constant 0 : i32
    %c0_i32_1 = arith.constant 0 : i32
    return %c0_i32, %c0_i32_0 : i32, i32
  }
  func.func @transform_6(%arg0: i32) -> (i32, i32) {
    %c0_i32 = arith.constant 0 : i32
    %c0_i32_0 = arith.constant 0 : i32
    return %arg0, %c0_i32 : i32, i32
  }
}

module attributes {stable_mosaic.version = 11 : i64} {
  func.func @_ffn_add_ln_kernel(%arg0: i32, %arg1: memref<16x256xbf16, #tpu.memory_space<vmem>>, %arg2: memref<256x512xbf16, #tpu.memory_space<vmem>>, %arg3: memref<1x512xf32, #tpu.memory_space<vmem>>, %arg4: memref<512x256xbf16, #tpu.memory_space<vmem>>, %arg5: memref<1x256xf32, #tpu.memory_space<vmem>>, %arg6: memref<1x256xf32, #tpu.memory_space<vmem>>, %arg7: memref<1x256xf32, #tpu.memory_space<vmem>>, %arg8: memref<16x256xbf16, #tpu.memory_space<vmem>>) attributes {dimension_semantics = [#tpu.dimension_semantics<parallel>], iteration_bounds = array<i64: 2>, scalar_prefetch = 0 : i64, scratch_operands = 0 : i64, tpu.core_type = #tpu.core_type<tc>, window_params = [{transform_indices = @transform_0, window_bounds = array<i64: 16, 256>}, {pipeline_mode = #tpu.pipeline_mode<synchronous>, transform_indices = @transform_1, window_bounds = array<i64: 256, 512>}, {pipeline_mode = #tpu.pipeline_mode<synchronous>, transform_indices = @transform_2, window_bounds = array<i64: 1, 512>}, {pipeline_mode = #tpu.pipeline_mode<synchronous>, transform_indices = @transform_3, window_bounds = array<i64: 512, 256>}, {pipeline_mode = #tpu.pipeline_mode<synchronous>, transform_indices = @transform_4, window_bounds = array<i64: 1, 256>}, {pipeline_mode = #tpu.pipeline_mode<synchronous>, transform_indices = @transform_5, window_bounds = array<i64: 1, 256>}, {pipeline_mode = #tpu.pipeline_mode<synchronous>, transform_indices = @transform_6, window_bounds = array<i64: 1, 256>}, {transform_indices = @transform_7, window_bounds = array<i64: 16, 256>}]} {
    %c0 = arith.constant 0 : index
    %c0_0 = arith.constant 0 : index
    %0 = vector.load %arg1[%c0, %c0_0] : memref<16x256xbf16, #tpu.memory_space<vmem>>, vector<16x256xbf16>
    %c0_1 = arith.constant 0 : index
    %c0_2 = arith.constant 0 : index
    %1 = vector.load %arg2[%c0_1, %c0_2] : memref<256x512xbf16, #tpu.memory_space<vmem>>, vector<256x512xbf16>
    %cst = arith.constant dense<0.000000e+00> : vector<16x512xf32>
    %2 = tpu.matmul %0, %1, %cst {dimension_numbers = #tpu.dot_dimension_numbers<[1], [0], [0], [1], [0, 0, 1, 1], [], []>} : vector<16x256xbf16>, vector<256x512xbf16>, vector<16x512xf32> -> vector<16x512xf32>
    %c0_3 = arith.constant 0 : index
    %c0_4 = arith.constant 0 : index
    %3 = vector.load %arg3[%c0_3, %c0_4] : memref<1x512xf32, #tpu.memory_space<vmem>>, vector<1x512xf32>
    %4 = vector.broadcast %3 : vector<1x512xf32> to vector<16x512xf32>
    %5 = arith.addf %2, %4 : vector<16x512xf32>
    %cst_5 = arith.constant 0.000000e+00 : f32
    %6 = vector.broadcast %cst_5 : f32 to vector<16x512xf32>
    %7 = arith.maximumf %5, %6 : vector<16x512xf32>
    %8 = arith.truncf %7 : vector<16x512xf32> to vector<16x512xbf16>
    %c0_6 = arith.constant 0 : index
    %c0_7 = arith.constant 0 : index
    %9 = vector.load %arg4[%c0_6, %c0_7] : memref<512x256xbf16, #tpu.memory_space<vmem>>, vector<512x256xbf16>
    %cst_8 = arith.constant dense<0.000000e+00> : vector<16x256xf32>
    %10 = tpu.matmul %8, %9, %cst_8 {dimension_numbers = #tpu.dot_dimension_numbers<[1], [0], [0], [1], [0, 0, 1, 1], [], []>} : vector<16x512xbf16>, vector<512x256xbf16>, vector<16x256xf32> -> vector<16x256xf32>
    %c0_9 = arith.constant 0 : index
    %c0_10 = arith.constant 0 : index
    %11 = vector.load %arg5[%c0_9, %c0_10] : memref<1x256xf32, #tpu.memory_space<vmem>>, vector<1x256xf32>
    %12 = vector.broadcast %11 : vector<1x256xf32> to vector<16x256xf32>
    %13 = arith.addf %10, %12 : vector<16x256xf32>
    %14 = arith.extf %0 : vector<16x256xbf16> to vector<16x256xf32>
    %15 = arith.addf %13, %14 : vector<16x256xf32>
    %cst_11 = arith.constant dense<0.000000e+00> : vector<16xf32>
    %16 = vector.multi_reduction <add>, %15, %cst_11 [1] : vector<16x256xf32> to vector<16xf32>
    %17 = vector.shape_cast %16 : vector<16xf32> to vector<16x1xf32>
    %cst_12 = arith.constant 2.560000e+02 : f32
    %18 = vector.broadcast %cst_12 : f32 to vector<16x1xf32>
    %19 = arith.divf %17, %18 : vector<16x1xf32>
    %20 = vector.broadcast %19 : vector<16x1xf32> to vector<16x256xf32>
    %21 = arith.subf %15, %20 : vector<16x256xf32>
    %22 = arith.mulf %21, %21 : vector<16x256xf32>
    %cst_13 = arith.constant dense<0.000000e+00> : vector<16xf32>
    %23 = vector.multi_reduction <add>, %22, %cst_13 [1] : vector<16x256xf32> to vector<16xf32>
    %24 = vector.shape_cast %23 : vector<16xf32> to vector<16x1xf32>
    %cst_14 = arith.constant 2.560000e+02 : f32
    %25 = vector.broadcast %cst_14 : f32 to vector<16x1xf32>
    %26 = arith.divf %24, %25 : vector<16x1xf32>
    %27 = vector.broadcast %19 : vector<16x1xf32> to vector<16x256xf32>
    %28 = arith.subf %15, %27 : vector<16x256xf32>
    %cst_15 = arith.constant 9.99999974E-6 : f32
    %29 = vector.broadcast %cst_15 : f32 to vector<16x1xf32>
    %30 = arith.addf %26, %29 : vector<16x1xf32>
    %31 = math.rsqrt %30 : vector<16x1xf32>
    %32 = vector.broadcast %31 : vector<16x1xf32> to vector<16x256xf32>
    %33 = arith.mulf %28, %32 : vector<16x256xf32>
    %c0_16 = arith.constant 0 : index
    %c0_17 = arith.constant 0 : index
    %34 = vector.load %arg6[%c0_16, %c0_17] : memref<1x256xf32, #tpu.memory_space<vmem>>, vector<1x256xf32>
    %35 = vector.broadcast %34 : vector<1x256xf32> to vector<16x256xf32>
    %36 = arith.mulf %33, %35 : vector<16x256xf32>
    %c0_18 = arith.constant 0 : index
    %c0_19 = arith.constant 0 : index
    %37 = vector.load %arg7[%c0_18, %c0_19] : memref<1x256xf32, #tpu.memory_space<vmem>>, vector<1x256xf32>
    %38 = vector.broadcast %37 : vector<1x256xf32> to vector<16x256xf32>
    %39 = arith.addf %36, %38 : vector<16x256xf32>
    %40 = arith.truncf %39 : vector<16x256xf32> to vector<16x256xbf16>
    %c0_20 = arith.constant 0 : index
    %c0_21 = arith.constant 0 : index
    %41 = vector.load %arg8[%c0_20, %c0_21] : memref<16x256xbf16, #tpu.memory_space<vmem>>, vector<16x256xbf16>
    tpu.vector_store %arg8[%c0_20, %c0_21], %40 {strides = array<i32>} : memref<16x256xbf16, #tpu.memory_space<vmem>>, vector<16x256xbf16>,
    return
  }
  func.func @transform_0(%arg0: i32) -> (i32, i32) {
    %c0_i32 = arith.constant 0 : i32
    %c0_i32_0 = arith.constant 0 : i32
    return %arg0, %c0_i32 : i32, i32
  }
  func.func @transform_1(%arg0: i32) -> (i32, i32) {
    %c0_i32 = arith.constant 0 : i32
    %c0_i32_0 = arith.constant 0 : i32
    %c0_i32_1 = arith.constant 0 : i32
    return %c0_i32, %c0_i32_0 : i32, i32
  }
  func.func @transform_2(%arg0: i32) -> (i32, i32) {
    %c0_i32 = arith.constant 0 : i32
    %c0_i32_0 = arith.constant 0 : i32
    %c0_i32_1 = arith.constant 0 : i32
    return %c0_i32, %c0_i32_0 : i32, i32
  }
  func.func @transform_3(%arg0: i32) -> (i32, i32) {
    %c0_i32 = arith.constant 0 : i32
    %c0_i32_0 = arith.constant 0 : i32
    %c0_i32_1 = arith.constant 0 : i32
    return %c0_i32, %c0_i32_0 : i32, i32
  }
  func.func @transform_4(%arg0: i32) -> (i32, i32) {
    %c0_i32 = arith.constant 0 : i32
    %c0_i32_0 = arith.constant 0 : i32
    %c0_i32_1 = arith.constant 0 : i32
    return %c0_i32, %c0_i32_0 : i32, i32
  }
  func.func @transform_5(%arg0: i32) -> (i32, i32) {
    %c0_i32 = arith.constant 0 : i32
    %c0_i32_0 = arith.constant 0 : i32
    %c0_i32_1 = arith.constant 0 : i32
    return %c0_i32, %c0_i32_0 : i32, i32
  }
  func.func @transform_6(%arg0: i32) -> (i32, i32) {
    %c0_i32 = arith.constant 0 : i32
    %c0_i32_0 = arith.constant 0 : i32
    %c0_i32_1 = arith.constant 0 : i32
    return %c0_i32, %c0_i32_0 : i32, i32
  }
  func.func @transform_7(%arg0: i32) -> (i32, i32) {
    %c0_i32 = arith.constant 0 : i32
    %c0_i32_0 = arith.constant 0 : i32
    return %arg0, %c0_i32 : i32, i32
  }
}

module attributes {stable_mosaic.version = 11 : i64} {
  func.func @_logsoftmax_kernel(%arg0: i32, %arg1: memref<16x256xbf16, #tpu.memory_space<vmem>>, %arg2: memref<256x256xbf16, #tpu.memory_space<vmem>>, %arg3: memref<1x256xf32, #tpu.memory_space<vmem>>, %arg4: memref<16x256xf32, #tpu.memory_space<vmem>>) attributes {dimension_semantics = [#tpu.dimension_semantics<parallel>], iteration_bounds = array<i64: 2>, scalar_prefetch = 0 : i64, scratch_operands = 0 : i64, tpu.core_type = #tpu.core_type<tc>, window_params = [{transform_indices = @transform_0, window_bounds = array<i64: 16, 256>}, {pipeline_mode = #tpu.pipeline_mode<synchronous>, transform_indices = @transform_1, window_bounds = array<i64: 256, 256>}, {pipeline_mode = #tpu.pipeline_mode<synchronous>, transform_indices = @transform_2, window_bounds = array<i64: 1, 256>}, {transform_indices = @transform_3, window_bounds = array<i64: 16, 256>}]} {
    %c0 = arith.constant 0 : index
    %c0_0 = arith.constant 0 : index
    %0 = vector.load %arg1[%c0, %c0_0] : memref<16x256xbf16, #tpu.memory_space<vmem>>, vector<16x256xbf16>
    %c0_1 = arith.constant 0 : index
    %c0_2 = arith.constant 0 : index
    %1 = vector.load %arg2[%c0_1, %c0_2] : memref<256x256xbf16, #tpu.memory_space<vmem>>, vector<256x256xbf16>
    %cst = arith.constant dense<0.000000e+00> : vector<16x256xf32>
    %2 = tpu.matmul %0, %1, %cst {dimension_numbers = #tpu.dot_dimension_numbers<[1], [0], [0], [1], [0, 0, 1, 1], [], []>} : vector<16x256xbf16>, vector<256x256xbf16>, vector<16x256xf32> -> vector<16x256xf32>
    %c0_3 = arith.constant 0 : index
    %c0_4 = arith.constant 0 : index
    %3 = vector.load %arg3[%c0_3, %c0_4] : memref<1x256xf32, #tpu.memory_space<vmem>>, vector<1x256xf32>
    %4 = vector.broadcast %3 : vector<1x256xf32> to vector<16x256xf32>
    %5 = arith.addf %2, %4 : vector<16x256xf32>
    %cst_5 = arith.constant dense<0xFF800000> : vector<16xf32>
    %6 = vector.multi_reduction <maximumf>, %5, %cst_5 [1] : vector<16x256xf32> to vector<16xf32>
    %7 = vector.shape_cast %6 : vector<16xf32> to vector<16x1xf32>
    %8 = vector.broadcast %7 : vector<16x1xf32> to vector<16x256xf32>
    %9 = arith.subf %5, %8 : vector<16x256xf32>
    %10 = math.exp %9 : vector<16x256xf32>
    %cst_6 = arith.constant dense<0.000000e+00> : vector<16xf32>
    %11 = vector.multi_reduction <add>, %10, %cst_6 [1] : vector<16x256xf32> to vector<16xf32>
    %12 = vector.shape_cast %11 : vector<16xf32> to vector<16x1xf32>
    %13 = math.log %12 : vector<16x1xf32>
    %14 = vector.broadcast %13 : vector<16x1xf32> to vector<16x256xf32>
    %15 = arith.subf %9, %14 : vector<16x256xf32>
    %c0_7 = arith.constant 0 : index
    %c0_8 = arith.constant 0 : index
    %16 = vector.load %arg4[%c0_7, %c0_8] : memref<16x256xf32, #tpu.memory_space<vmem>>, vector<16x256xf32>
    tpu.vector_store %arg4[%c0_7, %c0_8], %15 {strides = array<i32>} : memref<16x256xf32, #tpu.memory_space<vmem>>, vector<16x256xf32>,
    return
  }
  func.func @transform_0(%arg0: i32) -> (i32, i32) {
    %c0_i32 = arith.constant 0 : i32
    %c0_i32_0 = arith.constant 0 : i32
    return %arg0, %c0_i32 : i32, i32
  }
  func.func @transform_1(%arg0: i32) -> (i32, i32) {
    %c0_i32 = arith.constant 0 : i32
    %c0_i32_0 = arith.constant 0 : i32
    %c0_i32_1 = arith.constant 0 : i32
    return %c0_i32, %c0_i32_0 : i32, i32
  }
  func.func @transform_2(%arg0: i32) -> (i32, i32) {
    %c0_i32 = arith.constant 0 : i32
    %c0_i32_0 = arith.constant 0 : i32
    %c0_i32_1 = arith.constant 0 : i32
    return %c0_i32, %c0_i32_0 : i32, i32
  }
  func.func @transform_3(%arg0: i32) -> (i32, i32) {
    %c0_i32 = arith.constant 0 : i32
    %c0_i32_0 = arith.constant 0 : i32
    return %arg0, %c0_i32 : i32, i32
  }
}

</mosaic_0001>

<llo_original>
// kernel: mul.11
$region0: #{mul.11}
  #allocation0 [shape = 's32[1]{0}', space=sflag, size = 0x4, scoped, tag = 'scoped memory for mul.11']
  %s0 = inlined_call_operand.vmem [shape: f32[768], index: 0, kind: input, shape index: {}]
  %s1 = inlined_call_operand.vmem [shape: f32[768], index: 1, kind: input, shape index: {}]
  %s2 = inlined_call_operand.vmem [shape: f32[768], index: 2, kind: output, shape index: {}]
  %v3 = vld [vmem:[%s0] sm:$0x3f]
  %v4 = vld [vmem:[%s1] sm:$0x3f]
  %5 = xla_tuple %v3, %v4
  %6 = xla_tuple %5
  %v7 = vmul.f32 %v3, %v4
  %8 = xla_tuple %v7
  %9 = vst [vmem:[%s2] sm:$0xff] %v7

// kernel: asr_forward.6
$region0: #{asr_forward.6}
  #allocation0 [shape = 'u32[]', space=smem, size = 0x4, offset = 0x4, fixed_abs, tag = 'smem constant byte address 0x4 - core index']
  #allocation1 [shape = 'u32[144,128]{1,0:T(1,128)}', space=vmem, size = 0x12000, scoped, tag = 'internal scratch']
  #allocation2 [shape = 'f32[16,1]{1,0:T(8,128)}', space=vmem, size = 0x2000, scoped, tag = 'scratch operand']
  #allocation3 [shape = 'f32[16,1]{1,0:T(8,128)}', space=vmem, size = 0x2000, scoped, tag = 'scratch operand']
  #allocation4 [shape = 'f32[16,256]{1,0:T(8,128)}', space=vmem, size = 0x4000, scoped, tag = 'scratch operand']
  %s0 = inlined_call_operand.vmem [shape: bf16[2,16,768], index: 0, kind: input, shape index: {}, may-alias: {0,1,2}]
  %s1 = inlined_call_operand.vmem [shape: bf16[2,16,768], index: 1, kind: input, shape index: {}, may-alias: {0,1,2}]
  %s2 = inlined_call_operand.vmem [shape: bf16[2,16,768], index: 2, kind: input, shape index: {}, may-alias: {0,1,2}]
  %s3 = inlined_call_operand.vmem [shape: f32[2,1,16], index: 3, kind: input, shape index: {}]
  %s4 = inlined_call_operand.vmem [shape: bf16[2,16,256], index: 4, kind: output, shape index: {}]
  %s5 = sld [smem:[#allocation0]]
  $region171: #{asr_forward.6} parent=0
    _
  %s7 = ssub.s32 1, %s5
  %s8 = scalar_select 0, %s7, %s5
  $region1: #{asr_forward.6} parent=0
    #allocation5 [shape = 'u8[16384]{0}', space=vmem, size = 0x4000, scoped, tag = 'input window, operand 0']
    #allocation6 [shape = 'u8[16384]{0}', space=vmem, size = 0x4000, scoped, tag = 'input window, operand 1']
    #allocation7 [shape = 'u8[16384]{0}', space=vmem, size = 0x4000, scoped, tag = 'input window, operand 2']
    loop: start=0, step=1, limit=4
    $region2: #{asr_forward.6} parent=1 // loop_pre_header
      _
    $region3: #{asr_forward.6} parent=1 // loop_header
      %s10 = sphi 0, %s14
      %p11 = scmp.ge.s32.totalorder %s10, 4
      %s17 = sphi 0, %s36
      %s18 = sphi 0, %s32
      %s19 = sphi 0, %s28
      %s20 = sphi 0, %s17
      %s21 = sphi 0, %s18
      %s22 = sphi 0, %s19
      %s23 = sphi 0, %s20
      %s24 = sphi 0, %s21
      %s25 = sphi 0, %s22
      %s41 = sphi 0, %s43
      %s44 = sphi 0, %s41
      %s45 = sphi 0, %s44
      %s61 = sphi 0, %s45
      %s69 = sphi 0, %s71
      %s72 = sphi 0, %s69
      %s73 = sphi 0, %s72
      %s89 = sphi 0, %s73
      %s97 = sphi 0, %s99
      %s100 = sphi 0, %s97
      %s101 = sphi 0, %s100
      %s117 = sphi 0, %s101
      %s125 = sphi 0, %s127
      %s128 = sphi 0, %s125
      %s129 = sphi 0, %s128
      %s145 = sphi 0, %s129
      %s153 = sphi 0, %s155
      %s156 = sphi 0, %s153
      %s157 = sphi 0, %s156
      %s173 = sphi 0, %s157
    $region4: #{asr_forward.6} parent=1 // loop_header_branch
      %13 = sbr.rel (%p11) target = $region8
    $region5: #{asr_forward.6} parent=1 // loop_body
      %s15 = ssub.s32 %s10, 1
      %s16 = ssub.s32 %s10, 2
      %s26 = sadd.s32 1, %s19
      %p27 = scmp.ge.s32.totalorder %s26, 1
      %s28 = scalar_select %p27, 0, %s26
      %s29 = sadd.s32 1, %s18
      %s30 = scalar_select %p27, %s29, %s18
      %p31 = scmp.ge.s32.totalorder %s30, 1
      %s32 = scalar_select %p31, 0, %s30
      %s33 = sadd.s32 1, %s17
      %s34 = scalar_select %p31, %s33, %s17
      %p35 = scmp.ge.s32.totalorder %s34, 2
      %s36 = scalar_select %p35, 0, %s34
      %s37 = ssub.s32 %s17, %s36
      %s38 = ssub.s32 %s18, %s32
      %s39 = sor.u32 %s37, %s38
      %p40 = scmp.eq.s32.totalorder %s39, 0
      %s42 = sadd.s32 %s41, 1
      %s43 = scalar_select %p40, %s41, %s42
      %p46 = pneg %p40
      %p47 = scmp.eq.s32.totalorder %s10, 1
      %p48 = por %p46, %p47
      %p49 = scmp.ne.s32.totalorder %s41, %s44
      %p50 = scmp.eq.s32.totalorder %s10, 0
      %p51 = por %p49, %p50
      %p52 = scmp.ne.s32.totalorder %s41, %s44
      %p53 = scmp.eq.s32.totalorder %s15, 1
      %p54 = por %p52, %p53
      %p55 = scmp.ne.s32.totalorder %s44, %s45
      %p56 = scmp.eq.s32.totalorder %s15, 0
      %p57 = por %p55, %p56
      %p58 = scmp.ne.s32.totalorder %s44, %s45
      %p59 = scmp.eq.s32.totalorder %s16, 1
      %p60 = por %p58, %p59
      %p62 = scmp.ne.s32.totalorder %s45, %s61
      %p63 = scmp.eq.s32.totalorder %s16, 0
      %p64 = por %p62, %p63
      %s65 = ssub.s32 %s17, %s36
      %s66 = ssub.s32 %s19, %s28
      %s67 = sor.u32 %s65, %s66
      %p68 = scmp.eq.s32.totalorder %s67, 0
      %s70 = sadd.s32 %s69, 1
      %s71 = scalar_select %p68, %s69, %s70
      %p74 = pneg %p68
      %p75 = scmp.eq.s32.totalorder %s10, 1
      %p76 = por %p74, %p75
      %p77 = scmp.ne.s32.totalorder %s69, %s72
      %p78 = scmp.eq.s32.totalorder %s10, 0
      %p79 = por %p77, %p78
      %p80 = scmp.ne.s32.totalorder %s69, %s72
      %p81 = scmp.eq.s32.totalorder %s15, 1
      %p82 = por %p80, %p81
      %p83 = scmp.ne.s32.totalorder %s72, %s73
      %p84 = scmp.eq.s32.totalorder %s15, 0
      %p85 = por %p83, %p84
      %p86 = scmp.ne.s32.totalorder %s72, %s73
      %p87 = scmp.eq.s32.totalorder %s16, 1
      %p88 = por %p86, %p87
      %p90 = scmp.ne.s32.totalorder %s73, %s89
      %p91 = scmp.eq.s32.totalorder %s16, 0
      %p92 = por %p90, %p91
      %s93 = ssub.s32 %s17, %s36
      %s94 = ssub.s32 %s19, %s28
      %s95 = sor.u32 %s93, %s94
      %p96 = scmp.eq.s32.totalorder %s95, 0
      %s98 = sadd.s32 %s97, 1
      %s99 = scalar_select %p96, %s97, %s98
      %p102 = pneg %p96
      %p103 = scmp.eq.s32.totalorder %s10, 1
      %p104 = por %p102, %p103
      %p105 = scmp.ne.s32.totalorder %s97, %s100
      %p106 = scmp.eq.s32.totalorder %s10, 0
      %p107 = por %p105, %p106
      %p108 = scmp.ne.s32.totalorder %s97, %s100
      %p109 = scmp.eq.s32.totalorder %s15, 1
      %p110 = por %p108, %p109
      %p111 = scmp.ne.s32.totalorder %s100, %s101
      %p112 = scmp.eq.s32.totalorder %s15, 0
      %p113 = por %p111, %p112
      %p114 = scmp.ne.s32.totalorder %s100, %s101
      %p115 = scmp.eq.s32.totalorder %s16, 1
      %p116 = por %p114, %p115
      %p118 = scmp.ne.s32.totalorder %s101, %s117
      %p119 = scmp.eq.s32.totalorder %s16, 0
      %p120 = por %p118, %p119
      %s121 = ssub.s32 %s17, %s36
      %s122 = ssub.s32 %s19, %s28
      %s123 = sor.u32 %s121, %s122
      %p124 = scmp.eq.s32.totalorder %s123, 0
      %s126 = sadd.s32 %s125, 1
      %s127 = scalar_select %p124, %s125, %s126
      %p130 = pneg %p124
      %p131 = scmp.eq.s32.totalorder %s10, 1
      %p132 = por %p130, %p131
      %p133 = scmp.ne.s32.totalorder %s125, %s128
      %p134 = scmp.eq.s32.totalorder %s10, 0
      %p135 = por %p133, %p134
      %p136 = scmp.ne.s32.totalorder %s125, %s128
      %p137 = scmp.eq.s32.totalorder %s15, 1
      %p138 = por %p136, %p137
      %p139 = scmp.ne.s32.totalorder %s128, %s129
      %p140 = scmp.eq.s32.totalorder %s15, 0
      %p141 = por %p139, %p140
      %p142 = scmp.ne.s32.totalorder %s128, %s129
      %p143 = scmp.eq.s32.totalorder %s16, 1
      %p144 = por %p142, %p143
      %p146 = scmp.ne.s32.totalorder %s129, %s145
      %p147 = scmp.eq.s32.totalorder %s16, 0
      %p148 = por %p146, %p147
      %s149 = ssub.s32 %s17, %s36
      %s150 = ssub.s32 %s18, %s32
      %s151 = sor.u32 %s149, %s150
      %p152 = scmp.eq.s32.totalorder %s151, 0
      %s154 = sadd.s32 %s153, 1
      %s155 = scalar_select %p152, %s153, %s154
      %p158 = pneg %p152
      %p159 = scmp.eq.s32.totalorder %s10, 1
      %p160 = por %p158, %p159
      %p161 = scmp.ne.s32.totalorder %s153, %s156
      %p162 = scmp.eq.s32.totalorder %s10, 0
      %p163 = por %p161, %p162
      %p164 = scmp.ne.s32.totalorder %s153, %s156
      %p165 = scmp.eq.s32.totalorder %s15, 1
      %p166 = por %p164, %p165
      %p167 = scmp.ne.s32.totalorder %s156, %s157
      %p168 = scmp.eq.s32.totalorder %s15, 0
      %p169 = por %p167, %p168
      %p170 = scmp.ne.s32.totalorder %s156, %s157
      %p171 = scmp.eq.s32.totalorder %s16, 1
      %p172 = por %p170, %p171
      %p174 = scmp.ne.s32.totalorder %s157, %s173
      %p175 = scmp.eq.s32.totalorder %s16, 0
      %p176 = por %p174, %p175
      %p177 = scmp.le.s32.totalorder 1, %s10
      %p178 = scmp.lt.s32.totalorder %s10, 3
      %p179 = pnand %p177, %p178
      %p180 = pneg %p179
      // Predicated region
      $region9: #{asr_forward.6} parent=5 // pred_check
        _
      $region10: #{asr_forward.6} parent=5 // pred_check_branch
        %182 = sbr.rel (%p179) target = $region12
      $region11: #{asr_forward.6} parent=5 // pred_region
        %s183 = ssub.s32 %s10, 1
      $region12: #{asr_forward.6} parent=5 // pred_fallthru
        _
      %p184 = scmp.lt.s32.totalorder %s10, 2
      // Predicated region
      $region13: #{asr_forward.6} parent=5 // pred_check
        %p185 = pneg %p184
      $region14: #{asr_forward.6} parent=5 // pred_check_branch
        %187 = sbr.rel (%p185) target = $region16
      $region15: #{asr_forward.6} parent=5 // pred_region
        // Predicated region
        $region17: #{asr_forward.6} parent=15 // pred_check
          %p188 = pneg %p51
        $region18: #{asr_forward.6} parent=15 // pred_check_branch
          %190 = sbr.rel (%p188) target = $region20
        $region19: #{asr_forward.6} parent=15 // pred_region
          %s191 = sand.u32 %s41, 1
          %s192 = sand.u32 %s41, 1
          %s193 = smul.addr %s192, 16
          %s194 = scalar_lea.vmem [#allocation5], %s193
          %s195 = smul.u32 2, %s18
          %s196 = smul.addr %s195, 6
          %s197 = smul.addr %s17, 12
          %s198 = sadd.s32 %s196, %s197
          %s199 = smul.addr %s198, 4
          %s200 = scalar_lea.vmem %s0, %s199
          // Predicated region
          $region21: #{asr_forward.6} parent=19 // pred_check
            _
          $region22: #{asr_forward.6} parent=19 // pred_check_branch
            %202 = sbr.rel (0) target = $region24
          $region23: #{asr_forward.6} parent=19 // pred_region
            // Predicated region
            $region25: #{asr_forward.6} parent=23 // pred_check
              _
            $region26: #{asr_forward.6} parent=23 // pred_check_branch
              %204 = sbr.rel (0) target = $region28
            $region27: #{asr_forward.6} parent=23 // pred_region
              // Predicated region
              $region40: #{asr_forward.6} parent=27 // pred_check
                _
              $region41: #{asr_forward.6} parent=27 // pred_check_branch
                %221 = sbr.rel (0) target = $region43
              $region42: #{asr_forward.6} parent=27 // pred_region
                loop: start=0, step=1, limit=1
                $region44: #{asr_forward.6} parent=42 // loop_pre_header
                  _
                $region45: #{asr_forward.6} parent=42 // loop_header
                  %s223 = sphi 0, %s227
                  %p224 = scmp.ge.s32.totalorder %s223, 1
                  %s228 = sphi %s200, %s200
                  %s229 = sphi %s194, %s194
                $region46: #{asr_forward.6} parent=42 // loop_header_branch
                  %226 = sbr.rel (%p224) target = $region50
                $region47: #{asr_forward.6} parent=42 // loop_body
                  %v230 = vld [vmem:[%s228] sm:$0xff]
                  %231 = vst [vmem:[%s229] sm:$0xff] %v230
                  %v232 = vld [vmem:[%s228 + $0x18] sm:$0xff]
                  %233 = vst [vmem:[%s229 + $0x8] sm:$0xff] %v232
                $region48: #{asr_forward.6} parent=42 // loop_footer
                  %s227 = sadd.s32 1, %s223
                $region49: #{asr_forward.6} parent=42 // loop_footer_branch
                  %222 = sbr.rel target = $region45
                $region50: #{asr_forward.6} parent=42 // loop_exit
                  _
              $region43: #{asr_forward.6} parent=27 // pred_fallthru
                _
              // Predicated region
              $region51: #{asr_forward.6} parent=27 // pred_check
                _
              $region52: #{asr_forward.6} parent=27 // pred_check_branch
                %235 = sbr.rel target = $region54
              $region53: #{asr_forward.6} parent=27 // pred_region
                _
              $region54: #{asr_forward.6} parent=27 // pred_fallthru
                _
            $region28: #{asr_forward.6} parent=23 // pred_fallthru
              _
            // Predicated region
            $region29: #{asr_forward.6} parent=23 // pred_check
              _
            $region30: #{asr_forward.6} parent=23 // pred_check_branch
              %206 = sbr.rel target = $region32
            $region31: #{asr_forward.6} parent=23 // pred_region
              loop: start=0, step=1, limit=1
              $region33: #{asr_forward.6} parent=31 // loop_pre_header
                _
              $region34: #{asr_forward.6} parent=31 // loop_header
                %s209 = sphi 0, %s213
                %p210 = scmp.ge.s32.totalorder %s209, 1
                %s214 = sphi %s200, %s200
                %s215 = sphi %s194, %s194
              $region35: #{asr_forward.6} parent=31 // loop_header_branch
                %212 = sbr.rel (%p210) target = $region39
              $region36: #{asr_forward.6} parent=31 // loop_body
                %v216 = vld [vmem:[%s214] sm:$0xff]
                %217 = vst [vmem:[%s215] sm:$0xff] %v216
                %v218 = vld [vmem:[%s214 + $0x18] sm:$0xff]
                %219 = vst [vmem:[%s215 + $0x8] sm:$0xff] %v218
              $region37: #{asr_forward.6} parent=31 // loop_footer
                %s213 = sadd.s32 1, %s209
              $region38: #{asr_forward.6} parent=31 // loop_footer_branch
                %208 = sbr.rel target = $region34
              $region39: #{asr_forward.6} parent=31 // loop_exit
                _
            $region32: #{asr_forward.6} parent=23 // pred_fallthru
              _
          $region24: #{asr_forward.6} parent=19 // pred_fallthru
            _
          %236 = vnop
        $region20: #{asr_forward.6} parent=15 // pred_fallthru
          _
        // Predicated region
        $region55: #{asr_forward.6} parent=15 // pred_check
          %p237 = pneg %p79
        $region56: #{asr_forward.6} parent=15 // pred_check_branch
          %239 = sbr.rel (%p237) target = $region58
        $region57: #{asr_forward.6} parent=15 // pred_region
          %s240 = sand.u32 %s69, 1
          %s241 = sand.u32 %s69, 1
          %s242 = smul.addr %s241, 16
          %s243 = scalar_lea.vmem [#allocation6], %s242
          %s244 = smul.u32 2, %s19
          %s245 = smul.addr %s244, 6
          %s246 = sadd.s32 2, %s245
          %s247 = smul.addr %s17, 12
          %s248 = sadd.s32 %s246, %s247
          %s249 = smul.addr %s248, 4
          %s250 = scalar_lea.vmem %s1, %s249
          // Predicated region
          $region59: #{asr_forward.6} parent=57 // pred_check
            _
          $region60: #{asr_forward.6} parent=57 // pred_check_branch
            %252 = sbr.rel (0) target = $region62
          $region61: #{asr_forward.6} parent=57 // pred_region
            // Predicated region
            $region63: #{asr_forward.6} parent=61 // pred_check
              _
            $region64: #{asr_forward.6} parent=61 // pred_check_branch
              %254 = sbr.rel (0) target = $region66
            $region65: #{asr_forward.6} parent=61 // pred_region
              // Predicated region
              $region78: #{asr_forward.6} parent=65 // pred_check
                _
              $region79: #{asr_forward.6} parent=65 // pred_check_branch
                %271 = sbr.rel (0) target = $region81
              $region80: #{asr_forward.6} parent=65 // pred_region
                loop: start=0, step=1, limit=1
                $region82: #{asr_forward.6} parent=80 // loop_pre_header
                  _
                $region83: #{asr_forward.6} parent=80 // loop_header
                  %s273 = sphi 0, %s277
                  %p274 = scmp.ge.s32.totalorder %s273, 1
                  %s278 = sphi %s250, %s250
                  %s279 = sphi %s243, %s243
                $region84: #{asr_forward.6} parent=80 // loop_header_branch
                  %276 = sbr.rel (%p274) target = $region88
                $region85: #{asr_forward.6} parent=80 // loop_body
                  %v280 = vld [vmem:[%s278] sm:$0xff]
                  %281 = vst [vmem:[%s279] sm:$0xff] %v280
                  %v282 = vld [vmem:[%s278 + $0x18] sm:$0xff]
                  %283 = vst [vmem:[%s279 + $0x8] sm:$0xff] %v282
                $region86: #{asr_forward.6} parent=80 // loop_footer
                  %s277 = sadd.s32 1, %s273
                $region87: #{asr_forward.6} parent=80 // loop_footer_branch
                  %272 = sbr.rel target = $region83
                $region88: #{asr_forward.6} parent=80 // loop_exit
                  _
              $region81: #{asr_forward.6} parent=65 // pred_fallthru
                _
              // Predicated region
              $region89: #{asr_forward.6} parent=65 // pred_check
                _
              $region90: #{asr_forward.6} parent=65 // pred_check_branch
                %285 = sbr.rel target = $region92
              $region91: #{asr_forward.6} parent=65 // pred_region
                _
              $region92: #{asr_forward.6} parent=65 // pred_fallthru
                _
            $region66: #{asr_forward.6} parent=61 // pred_fallthru
              _
            // Predicated region
            $region67: #{asr_forward.6} parent=61 // pred_check
              _
            $region68: #{asr_forward.6} parent=61 // pred_check_branch
              %256 = sbr.rel target = $region70
            $region69: #{asr_forward.6} parent=61 // pred_region
              loop: start=0, step=1, limit=1
              $region71: #{asr_forward.6} parent=69 // loop_pre_header
                _
              $region72: #{asr_forward.6} parent=69 // loop_header
                %s259 = sphi 0, %s263
                %p260 = scmp.ge.s32.totalorder %s259, 1
                %s264 = sphi %s250, %s250
                %s265 = sphi %s243, %s243
              $region73: #{asr_forward.6} parent=69 // loop_header_branch
                %262 = sbr.rel (%p260) target = $region77
              $region74: #{asr_forward.6} parent=69 // loop_body
                %v266 = vld [vmem:[%s264] sm:$0xff]
                %267 = vst [vmem:[%s265] sm:$0xff] %v266
                %v268 = vld [vmem:[%s264 + $0x18] sm:$0xff]
                %269 = vst [vmem:[%s265 + $0x8] sm:$0xff] %v268
              $region75: #{asr_forward.6} parent=69 // loop_footer
                %s263 = sadd.s32 1, %s259
              $region76: #{asr_forward.6} parent=69 // loop_footer_branch
                %258 = sbr.rel target = $region72
              $region77: #{asr_forward.6} parent=69 // loop_exit
                _
            $region70: #{asr_forward.6} parent=61 // pred_fallthru
              _
          $region62: #{asr_forward.6} parent=57 // pred_fallthru
            _
          %286 = vnop
        $region58: #{asr_forward.6} parent=15 // pred_fallthru
          _
        // Predicated region
        $region93: #{asr_forward.6} parent=15 // pred_check
          %p287 = pneg %p107
        $region94: #{asr_forward.6} parent=15 // pred_check_branch
          %289 = sbr.rel (%p287) target = $region96
        $region95: #{asr_forward.6} parent=15 // pred_region
          %s290 = sand.u32 %s97, 1
          %s291 = sand.u32 %s97, 1
          %s292 = smul.addr %s291, 16
          %s293 = scalar_lea.vmem [#allocation7], %s292
          %s294 = smul.u32 2, %s19
          %s295 = smul.addr %s294, 6
          %s296 = sadd.s32 4, %s295
          %s297 = smul.addr %s17, 12
          %s298 = sadd.s32 %s296, %s297
          %s299 = smul.addr %s298, 4
          %s300 = scalar_lea.vmem %s2, %s299
          // Predicated region
          $region97: #{asr_forward.6} parent=95 // pred_check
            _
          $region98: #{asr_forward.6} parent=95 // pred_check_branch
            %302 = sbr.rel (0) target = $region100
          $region99: #{asr_forward.6} parent=95 // pred_region
            // Predicated region
            $region101: #{asr_forward.6} parent=99 // pred_check
              _
            $region102: #{asr_forward.6} parent=99 // pred_check_branch
              %304 = sbr.rel (0) target = $region104
            $region103: #{asr_forward.6} parent=99 // pred_region
              // Predicated region
              $region116: #{asr_forward.6} parent=103 // pred_check
                _
              $region117: #{asr_forward.6} parent=103 // pred_check_branch
                %321 = sbr.rel (0) target = $region119
              $region118: #{asr_forward.6} parent=103 // pred_region
                loop: start=0, step=1, limit=1
                $region120: #{asr_forward.6} parent=118 // loop_pre_header
                  _
                $region121: #{asr_forward.6} parent=118 // loop_header
                  %s323 = sphi 0, %s327
                  %p324 = scmp.ge.s32.totalorder %s323, 1
                  %s328 = sphi %s300, %s300
                  %s329 = sphi %s293, %s293
                $region122: #{asr_forward.6} parent=118 // loop_header_branch
                  %326 = sbr.rel (%p324) target = $region126
                $region123: #{asr_forward.6} parent=118 // loop_body
                  %v330 = vld [vmem:[%s328] sm:$0xff]
                  %331 = vst [vmem:[%s329] sm:$0xff] %v330
                  %v332 = vld [vmem:[%s328 + $0x18] sm:$0xff]
                  %333 = vst [vmem:[%s329 + $0x8] sm:$0xff] %v332
                $region124: #{asr_forward.6} parent=118 // loop_footer
                  %s327 = sadd.s32 1, %s323
                $region125: #{asr_forward.6} parent=118 // loop_footer_branch
                  %322 = sbr.rel target = $region121
                $region126: #{asr_forward.6} parent=118 // loop_exit
                  _
              $region119: #{asr_forward.6} parent=103 // pred_fallthru
                _
              // Predicated region
              $region127: #{asr_forward.6} parent=103 // pred_check
                _
              $region128: #{asr_forward.6} parent=103 // pred_check_branch
                %335 = sbr.rel target = $region130
              $region129: #{asr_forward.6} parent=103 // pred_region
                _
              $region130: #{asr_forward.6} parent=103 // pred_fallthru
                _
            $region104: #{asr_forward.6} parent=99 // pred_fallthru
              _
            // Predicated region
            $region105: #{asr_forward.6} parent=99 // pred_check
              _
            $region106: #{asr_forward.6} parent=99 // pred_check_branch
              %306 = sbr.rel target = $region108
            $region107: #{asr_forward.6} parent=99 // pred_region
              loop: start=0, step=1, limit=1
              $region109: #{asr_forward.6} parent=107 // loop_pre_header
                _
              $region110: #{asr_forward.6} parent=107 // loop_header
                %s309 = sphi 0, %s313
                %p310 = scmp.ge.s32.totalorder %s309, 1
                %s314 = sphi %s300, %s300
                %s315 = sphi %s293, %s293
              $region111: #{asr_forward.6} parent=107 // loop_header_branch
                %312 = sbr.rel (%p310) target = $region115
              $region112: #{asr_forward.6} parent=107 // loop_body
                %v316 = vld [vmem:[%s314] sm:$0xff]
                %317 = vst [vmem:[%s315] sm:$0xff] %v316
                %v318 = vld [vmem:[%s314 + $0x18] sm:$0xff]
                %319 = vst [vmem:[%s315 + $0x8] sm:$0xff] %v318
              $region113: #{asr_forward.6} parent=107 // loop_footer
                %s313 = sadd.s32 1, %s309
              $region114: #{asr_forward.6} parent=107 // loop_footer_branch
                %308 = sbr.rel target = $region110
              $region115: #{asr_forward.6} parent=107 // loop_exit
                _
            $region108: #{asr_forward.6} parent=99 // pred_fallthru
              _
          $region100: #{asr_forward.6} parent=95 // pred_fallthru
            _
          %336 = vnop
        $region96: #{asr_forward.6} parent=15 // pred_fallthru
          _
        // Predicated region
        $region131: #{asr_forward.6} parent=15 // pred_check
          %p337 = pneg %p135
        $region132: #{asr_forward.6} parent=15 // pred_check_branch
          %339 = sbr.rel (%p337) target = $region134
        $region133: #{asr_forward.6} parent=15 // pred_region
          %p340 = scmp.lt.s32.totalorder %s17, 1
          %s341 = scalar_select %p340, %s17, 1
          %p342 = scmp.lt.s32.totalorder %s19, 0
          %s343 = scalar_select %p342, %s19, 0
          %s344 = sadd.s32 %s343, %s341
          %s345 = scalar_lea.vmem %s3, %s344
        $region134: #{asr_forward.6} parent=15 // pred_fallthru
          _
      $region16: #{asr_forward.6} parent=5 // pred_fallthru
        _
      %p346 = scmp.le.s32.totalorder 1, %s10
      %p347 = scmp.lt.s32.totalorder %s10, 3
      %p348 = pnand %p346, %p347
      %p349 = pneg %p348
      // Predicated region
      $region135: #{asr_forward.6} parent=5 // pred_check
        _
      $region136: #{asr_forward.6} parent=5 // pred_check_branch
        %351 = sbr.rel (%p348) target = $region138
      $region137: #{asr_forward.6} parent=5 // pred_region
        %s352 = ssub.s32 %s10, 1
        %s353 = sand.u32 %s44, 1
        %s354 = sand.u32 %s44, 1
        %s355 = smul.addr %s354, 16
        %s356 = scalar_lea.vmem [#allocation5], %s355
        // Predicated region
        $region139: #{asr_forward.6} parent=137 // pred_check
          %p357 = pneg %p57
        $region140: #{asr_forward.6} parent=137 // pred_check_branch
          %359 = sbr.rel (%p357) target = $region142
        $region141: #{asr_forward.6} parent=137 // pred_region
          _
        $region142: #{asr_forward.6} parent=137 // pred_fallthru
          _
        %s360 = sand.u32 %s72, 1
        %s361 = sand.u32 %s72, 1
        %s362 = smul.addr %s361, 16
        %s363 = scalar_lea.vmem [#allocation6], %s362
        // Predicated region
        $region143: #{asr_forward.6} parent=137 // pred_check
          %p364 = pneg %p85
        $region144: #{asr_forward.6} parent=137 // pred_check_branch
          %366 = sbr.rel (%p364) target = $region146
        $region145: #{asr_forward.6} parent=137 // pred_region
          _
        $region146: #{asr_forward.6} parent=137 // pred_fallthru
          _
        %s367 = sand.u32 %s100, 1
        %s368 = sand.u32 %s100, 1
        %s369 = smul.addr %s368, 16
        %s370 = scalar_lea.vmem [#allocation7], %s369
        // Predicated region
        $region147: #{asr_forward.6} parent=137 // pred_check
          %p371 = pneg %p113
        $region148: #{asr_forward.6} parent=137 // pred_check_branch
          %373 = sbr.rel (%p371) target = $region150
        $region149: #{asr_forward.6} parent=137 // pred_region
          _
        $region150: #{asr_forward.6} parent=137 // pred_fallthru
          _
        %s374 = sand.u32 %s44, 1
        %s375 = sand.u32 %s44, 1
        %s376 = smul.addr %s375, 16
        %s377 = scalar_lea.vmem [#allocation5], %s376
        %p378 = pneg %p57
        %p379 = pneg %p54
        %s380 = sand.u32 %s72, 1
        %s381 = sand.u32 %s72, 1
        %s382 = smul.addr %s381, 16
        %s383 = scalar_lea.vmem [#allocation6], %s382
        %p384 = pneg %p85
        %p385 = pneg %p82
        %s386 = sand.u32 %s100, 1
        %s387 = sand.u32 %s100, 1
        %s388 = smul.addr %s387, 16
        %s389 = scalar_lea.vmem [#allocation7], %s388
        %p390 = pneg %p113
        %p391 = pneg %p110
        %p392 = scmp.lt.s32.totalorder %s20, 1
        %s393 = scalar_select %p392, %s20, 1
        %p394 = scmp.lt.s32.totalorder %s22, 0
        %s395 = scalar_select %p394, %s22, 0
        %s396 = sadd.s32 %s395, %s393
        %s397 = scalar_lea.vmem %s3, %s396
        %p398 = pneg %p141
        %p399 = pneg %p138
        %p400 = pneg %p169
        %p401 = pneg %p166
        %s402 = smul.u32 2, %s21
        %p403 = scmp.lt.s32.totalorder %s20, 1
        %s404 = scalar_select %p403, %s20, 1
        %p405 = scmp.lt.s32.totalorder %s402, 1
        %s406 = scalar_select %p405, %s402, 1
        %s407 = smul.addr %s406, 2
        %s408 = smul.addr %s404, 4
        %s409 = sadd.s32 %s407, %s408
        %s410 = smul.addr %s409, 4
        %s411 = scalar_lea.vmem %s4, %s410
        %s412 = smul.u32 2, %s21
        %s413 = smul.u32 2, %s22
        %s414 = smul.u32 2, %s22
        %p415 = scmp.lt.s32.totalorder %s20, 1
        %s416 = scalar_select %p415, %s20, 1
        %p417 = scmp.lt.s32.totalorder %s22, 0
        %s418 = scalar_select %p417, %s22, 0
        %s419 = sadd.s32 %s418, %s416
        %s420 = scalar_lea.vmem %s3, %s419
        %s421 = smul.u32 2, %s21
        %p422 = scmp.lt.s32.totalorder %s20, 1
        %s423 = scalar_select %p422, %s20, 1
        %p424 = scmp.lt.s32.totalorder %s421, 1
        %s425 = scalar_select %p424, %s421, 1
        %s426 = smul.addr %s425, 2
        %s427 = smul.addr %s423, 4
        %s428 = sadd.s32 %s426, %s427
        %s429 = smul.addr %s428, 4
        %s430 = scalar_lea.vmem %s4, %s429
        %s431 = smul.u32 2, %s21
        %p433 = scmp.eq.s32.totalorder %s22, 0
        // Predicated region
        $region151: #{asr_forward.6} parent=137 // pred_check
          %p434 = pneg %p433
        $region152: #{asr_forward.6} parent=137 // pred_check_branch
          %436 = sbr.rel (%p434) target = $region154
        $region153: #{asr_forward.6} parent=137 // pred_region
          %vm437 = vcmask 7168
          %438 = vst.msk [vmem:[#allocation2] sm:$0xff] %vm437, -1e+30
          %439 = vst.msk [vmem:[#allocation2 + $0x8] sm:$0xff] %vm437, -1e+30
          %440 = vst.msk [vmem:[#allocation3] sm:$0xff] %vm437, 0.0
          %441 = vst.msk [vmem:[#allocation3 + $0x8] sm:$0xff] %vm437, 0.0
          %442 = vst [vmem:[#allocation4] sm:$0xff] 0.0
          %443 = vst [vmem:[#allocation4 + $0x8] sm:$0xff] 0.0
          %444 = vst [vmem:[#allocation4 + $0x10] sm:$0xff] 0.0
          %445 = vst [vmem:[#allocation4 + $0x18] sm:$0xff] 0.0
        $region154: #{asr_forward.6} parent=137 // pred_fallthru
          _
        %v446 = vld [vmem:[%s356] sm:$0xff]
        %v447 = vld [vmem:[%s356 + $0x8] sm:$0xff]
        %v448 = vld [vmem:[%s363] sm:$0xff]
        %v449 = vld [vmem:[%s363 + $0x8] sm:$0xff]
        %v450 = vld [vmem:[%s370] sm:$0xff]
        %v451 = vld [vmem:[%s370 + $0x8] sm:$0xff]
        %v452 = vld [vmem:[%s420] sm:$0x1]
        %v454 = vlaneseq
        %v455 = vshrl.u32 %v454, 7
        %v456 = vsub.s32 0, %v455
        %v457 = vrot.slane %v452, %v456
        %v461 = vunpack.c.l.b16 %v446
        %v462 = vunpack.c.h.b16 %v446
        %v463 = vunpack.c.l.b16 %v447
        %v464 = vunpack.c.h.b16 %v447
        %v465 = vpack.c.b16 %v463, %v461
        %v466 = vpack.c.b16 %v464, %v462
        %v471 = vunpack.c.l.b16 %v448
        %v472 = vunpack.c.h.b16 %v448
        %v473 = vunpack.c.l.b16 %v449
        %v474 = vunpack.c.h.b16 %v449
        %v475 = vpack.c.b16 %v473, %v471
        %v476 = vpack.c.b16 %v474, %v472
        %479 = vmatprep.subr.bf16.mxu0 %v476
        %480 = vmatpush1.bf16.xpose.msra.mxu0 %v475
        %481 = vmatprep.subr.bf16.mxu0 0
        %482 = vmatpush1.bf16.xpose.msra.mxu0 0
        %483 = vmatprep.subr.bf16.mxu0 0
        %484 = vmatpush1.bf16.xpose.msra.mxu0 0
        %485 = vmatprep.subr.bf16.mxu0 0
        %486 = vmatpush1.bf16.xpose.msra.mxu0 0
        %487 = vmatprep.subr.bf16.mxu0 0
        %488 = vmatpush1.bf16.xpose.msra.mxu0 0
        %489 = vmatprep.subr.bf16.mxu0 0
        %490 = vmatpush1.bf16.xpose.msra.mxu0 0
        %491 = vmatprep.subr.bf16.mxu0 0
        %492 = vmatpush1.bf16.xpose.msra.mxu0 0
        %493 = vmatprep.subr.bf16.mxu0 0
        %494 = vmatpush1.bf16.xpose.msra.mxu0 0
        %495 = vmatprep.subr.bf16.mxu0 0
        %496 = vmatpush1.bf16.xpose.msra.mxu0 0
        %497 = vmatprep.subr.bf16.mxu0 0
        %498 = vmatpush1.bf16.xpose.msra.mxu0 0
        %499 = vmatprep.subr.bf16.mxu0 0
        %500 = vmatpush1.bf16.xpose.msra.mxu0 0
        %501 = vmatprep.subr.bf16.mxu0 0
        %502 = vmatpush1.bf16.xpose.msra.mxu0 0
        %503 = vmatprep.subr.bf16.mxu0 0
        %504 = vmatpush1.bf16.xpose.msra.mxu0 0
        %505 = vmatprep.subr.bf16.mxu0 0
        %506 = vmatpush1.bf16.xpose.msra.mxu0 0
        %507 = vmatprep.subr.bf16.mxu0 0
        %508 = vmatpush1.bf16.xpose.msra.mxu0 0
        %509 = vmatprep.subr.bf16.mxu0 0
        %510 = vmatpush1.bf16.xpose.msra.mxu0 0
        %511 = vmatprep.mubr.bf16.mxu0 %v466
        %512 = vmatmul.mubr.bf16.gmra.mrb[0].mxu0 %v465
        %v513 = vpop.f32.mrb[0].mxu0
        %v514 = vadd.f32 %v457, %v513
        %v515 = vpop.f32.mrb[0].mxu0
        %v516 = vpop.f32.mrb[0].mxu0
        %v517 = vadd.f32 %v457, %v516
        %v518 = vpop.f32.mrb[0].mxu0
        %519 = vdwg.mxu0
        %v520 = vld [vmem:[#allocation2] sm:$0xff]
        %v521 = vld [vmem:[#allocation2 + $0x8] sm:$0xff]
        %vm522 = vcmask 130048
        %v523 = vsel %vm522, %v514, -inf
        %524 = vmax.xlane.f32.xlu0 %v523
        %v525 = vpop.xlane.xlu0 %524
        %v526 = vsel %vm522, %v517, -inf
        %527 = vmax.xlane.f32.xlu0 %v526
        %v528 = vpop.xlane.xlu0 %527
        %v529 = vmax.f32 %v520, %v525
        %v530 = vmax.f32 %v521, %v528
        %v531 = vsub.f32 %v520, %v529
        %v532 = vsub.f32 %v521, %v530
        %v533 = vmul.f32 %v531, 1.442695
        %v534 = vpow.pop %v533
        %v535 = vmul.f32 %v532, 1.442695
        %v536 = vpow.pop %v535
        %538 = vset.pattern.permute.xlu0 0
        %539 = vperm.xlu0 %538, %v529
        %v540 = vpop.permute.xlu0 %539
        %543 = vset.pattern.permute.xlu0 0
        %544 = vperm.xlu0 %543, %v530
        %v545 = vpop.permute.xlu0 %544
        %v547 = vsub.f32 %v514, %v540
        %v548 = vsub.f32 %v517, %v545
        %v549 = vmul.f32 %v547, 1.442695
        %v550 = vpow.pop %v549
        %v551 = vmul.f32 %v548, 1.442695
        %v552 = vpow.pop %v551
        %v553 = vld [vmem:[#allocation3] sm:$0xff]
        %v554 = vld [vmem:[#allocation3 + $0x8] sm:$0xff]
        %v555 = vmul.f32 %v534, %v553
        %v556 = vmul.f32 %v536, %v554
        %v557 = vsel %vm522, %v550, 0.0
        %558 = vadd.xlane.f32.xlu0 %v557
        %v559 = vpop.xlane.xlu0 %558
        %v560 = vsel %vm522, %v552, 0.0
        %561 = vadd.xlane.f32.xlu0 %v560
        %v562 = vpop.xlane.xlu0 %561
        %v563 = vadd.f32 %v555, %v559
        %v564 = vadd.f32 %v556, %v562
        %vm565 = vcmask 7168
        %566 = vst.msk [vmem:[#allocation3] sm:$0xff] %vm565, %v563
        %567 = vst.msk [vmem:[#allocation3 + $0x8] sm:$0xff] %vm565, %v564
        %v568 = vld [vmem:[#allocation4] sm:$0xff]
        %v569 = vld [vmem:[#allocation4 + $0x8] sm:$0xff]
        %v570 = vld [vmem:[#allocation4 + $0x10] sm:$0xff]
        %v571 = vld [vmem:[#allocation4 + $0x18] sm:$0xff]
        %573 = vset.pattern.permute.xlu0 0
        %574 = vperm.xlu0 %573, %v534
        %v575 = vpop.permute.xlu0 %574
        %578 = vset.pattern.permute.xlu0 0
        %579 = vperm.xlu0 %578, %v536
        %v580 = vpop.permute.xlu0 %579
        %v582 = vmul.f32 %v575, %v568
        %v583 = vmul.f32 %v575, %v569
        %v584 = vmul.f32 %v580, %v570
        %v585 = vmul.f32 %v580, %v571
        %v586 = vpack.c.bf16 %v552, %v550
        %v589 = vunpack.c.l.b16 %v450
        %v590 = vunpack.c.h.b16 %v450
        %v591 = vunpack.c.l.b16 %v451
        %v592 = vunpack.c.h.b16 %v451
        %v593 = vpack.c.b16 %v591, %v589
        %v594 = vpack.c.b16 %v592, %v590
        %v598 = vsel %vm522, %v586, 0
        %600 = vmatprep.subr.bf16.mxu0 %v594
        %601 = vmatpush1.bf16.msra.mxu0 %v593
        %602 = vmatprep.subr.bf16.mxu0 0
        %603 = vmatpush1.bf16.msra.mxu0 0
        %604 = vmatprep.subr.bf16.mxu0 0
        %605 = vmatpush1.bf16.msra.mxu0 0
        %606 = vmatprep.subr.bf16.mxu0 0
        %607 = vmatpush1.bf16.msra.mxu0 0
        %608 = vmatprep.subr.bf16.mxu0 0
        %609 = vmatpush1.bf16.msra.mxu0 0
        %610 = vmatprep.subr.bf16.mxu0 0
        %611 = vmatpush1.bf16.msra.mxu0 0
        %612 = vmatprep.subr.bf16.mxu0 0
        %613 = vmatpush1.bf16.msra.mxu0 0
        %614 = vmatprep.subr.bf16.mxu0 0
        %615 = vmatpush1.bf16.msra.mxu0 0
        %616 = vmatprep.subr.bf16.mxu0 0
        %617 = vmatpush1.bf16.msra.mxu0 0
        %618 = vmatprep.subr.bf16.mxu0 0
        %619 = vmatpush1.bf16.msra.mxu0 0
        %620 = vmatprep.subr.bf16.mxu0 0
        %621 = vmatpush1.bf16.msra.mxu0 0
        %622 = vmatprep.subr.bf16.mxu0 0
        %623 = vmatpush1.bf16.msra.mxu0 0
        %624 = vmatprep.subr.bf16.mxu0 0
        %625 = vmatpush1.bf16.msra.mxu0 0
        %626 = vmatprep.subr.bf16.mxu0 0
        %627 = vmatpush1.bf16.msra.mxu0 0
        %628 = vmatprep.subr.bf16.mxu0 0
        %629 = vmatpush1.bf16.msra.mxu0 0
        %630 = vmatprep.subr.bf16.mxu0 0
        %631 = vmatpush1.bf16.msra.mxu0 0
        %632 = vmatprep.mubr.bf16.mxu0 0
        %633 = vmatmul.mubr.bf16.gmra.mrb[0].mxu0 %v598
        %v634 = vpop.f32.mrb[0].mxu0
        %v635 = vadd.f32 0.0, %v634
        %v636 = vpop.f32.mrb[0].mxu0
        %v637 = vadd.f32 0.0, %v636
        %v638 = vpop.f32.mrb[0].mxu0
        %v639 = vadd.f32 0.0, %v638
        %v640 = vpop.f32.mrb[0].mxu0
        %v641 = vadd.f32 0.0, %v640
        %642 = vdwg.mxu0
        %v643 = vadd.f32 %v582, %v635
        %v644 = vadd.f32 %v583, %v637
        %v645 = vadd.f32 %v584, %v639
        %v646 = vadd.f32 %v585, %v641
        %647 = vst [vmem:[#allocation4] sm:$0xff] %v643
        %648 = vst [vmem:[#allocation4 + $0x8] sm:$0xff] %v644
        %649 = vst [vmem:[#allocation4 + $0x10] sm:$0xff] %v645
        %650 = vst [vmem:[#allocation4 + $0x18] sm:$0xff] %v646
        %651 = vst.msk [vmem:[#allocation2] sm:$0xff] %vm565, %v529
        %652 = vst.msk [vmem:[#allocation2 + $0x8] sm:$0xff] %vm565, %v530
        // Predicated region
        $region155: #{asr_forward.6} parent=137 // pred_check
          %p653 = pneg %p433
        $region156: #{asr_forward.6} parent=137 // pred_check_branch
          %655 = sbr.rel (%p653) target = $region158
        $region157: #{asr_forward.6} parent=137 // pred_region
          %v656 = vld [vmem:[#allocation4] sm:$0xff]
          %v657 = vld [vmem:[#allocation4 + $0x8] sm:$0xff]
          %v658 = vld [vmem:[#allocation4 + $0x10] sm:$0xff]
          %v659 = vld [vmem:[#allocation4 + $0x18] sm:$0xff]
          %v660 = vld [vmem:[#allocation3] sm:$0xff]
          %v661 = vld [vmem:[#allocation3 + $0x8] sm:$0xff]
          %v662 = vrcp.pop %v660
          %v663 = vrcp.pop %v661
          %665 = vset.pattern.permute.xlu0 0
          %666 = vperm.xlu0 %665, %v662
          %v667 = vpop.permute.xlu0 %666
          %670 = vset.pattern.permute.xlu0 0
          %671 = vperm.xlu0 %670, %v663
          %v672 = vpop.permute.xlu0 %671
          %v674 = vmul.f32 %v656, %v667
          %v675 = vmul.f32 %v657, %v667
          %v676 = vmul.f32 %v658, %v672
          %v677 = vmul.f32 %v659, %v672
          %v678 = vpack.c.bf16 %v676, %v674
          %v679 = vpack.c.bf16 %v677, %v675
          %v682 = vunpack.c.l.b16 %v678
          %v683 = vunpack.c.l.b16 %v679
          %v684 = vunpack.c.h.b16 %v678
          %v685 = vunpack.c.h.b16 %v679
          %v686 = vpack.c.b16 %v683, %v682
          %v687 = vpack.c.b16 %v685, %v684
          %690 = vst [vmem:[%s430] sm:$0xff] %v686
          %691 = vst [vmem:[%s430 + $0x8] sm:$0xff] %v687
        $region158: #{asr_forward.6} parent=137 // pred_fallthru
          _
        %s692 = smul.u32 2, %s21
        %p693 = scmp.lt.s32.totalorder %s20, 1
        %s694 = scalar_select %p693, %s20, 1
        %p695 = scmp.lt.s32.totalorder %s692, 1
        %s696 = scalar_select %p695, %s692, 1
        %s697 = smul.addr %s696, 2
        %s698 = smul.addr %s694, 4
        %s699 = sadd.s32 %s697, %s698
        %s700 = smul.addr %s699, 4
        %s701 = scalar_lea.vmem %s4, %s700
        // Predicated region
        $region159: #{asr_forward.6} parent=137 // pred_check
          %p702 = pneg %p166
        $region160: #{asr_forward.6} parent=137 // pred_check_branch
          %704 = sbr.rel (%p702) target = $region162
        $region161: #{asr_forward.6} parent=137 // pred_region
          %s705 = smul.u32 2, %s21
        $region162: #{asr_forward.6} parent=137 // pred_fallthru
          _
      $region138: #{asr_forward.6} parent=5 // pred_fallthru
        _
      %p706 = scmp.le.s32.totalorder 2, %s10
      // Predicated region
      $region163: #{asr_forward.6} parent=5 // pred_check
        %p707 = pneg %p706
      $region164: #{asr_forward.6} parent=5 // pred_check_branch
        %709 = sbr.rel (%p707) target = $region166
      $region165: #{asr_forward.6} parent=5 // pred_region
        %s710 = ssub.s32 %s10, 2
        // Predicated region
        $region167: #{asr_forward.6} parent=165 // pred_check
          %p711 = pneg %p172
        $region168: #{asr_forward.6} parent=165 // pred_check_branch
          %713 = sbr.rel (%p711) target = $region170
        $region169: #{asr_forward.6} parent=165 // pred_region
          %s714 = smul.u32 2, %s24
          %p715 = scmp.lt.s32.totalorder %s23, 1
          %s716 = scalar_select %p715, %s23, 1
          %p717 = scmp.lt.s32.totalorder %s714, 1
          %s718 = scalar_select %p717, %s714, 1
          %s719 = smul.addr %s718, 2
          %s720 = smul.addr %s716, 4
          %s721 = sadd.s32 %s719, %s720
          %s722 = smul.addr %s721, 4
          %s723 = scalar_lea.vmem %s4, %s722
        $region170: #{asr_forward.6} parent=165 // pred_fallthru
          _
      $region166: #{asr_forward.6} parent=5 // pred_fallthru
        _
    $region6: #{asr_forward.6} parent=1 // loop_footer
      %s14 = sadd.s32 1, %s10
    $region7: #{asr_forward.6} parent=1 // loop_footer_branch
      %9 = sbr.rel target = $region3
    $region8: #{asr_forward.6} parent=1 // loop_exit
      _

// kernel: asr_forward.7
$region0: #{asr_forward.7}
  #allocation0 [shape = 'u32[]', space=smem, size = 0x4, offset = 0x4, fixed_abs, tag = 'smem constant byte address 0x4 - core index']
  #allocation1 [shape = 'u32[144,128]{1,0:T(1,128)}', space=vmem, size = 0x12000, scoped, tag = 'internal scratch']
  %s0 = inlined_call_operand.vmem [shape: bf16[32,256], index: 0, kind: input, shape index: {}]
  %s1 = inlined_call_operand.vmem [shape: bf16[256,256], index: 1, kind: input, shape index: {}]
  %s2 = inlined_call_operand.vmem [shape: f32[1,256], index: 2, kind: input, shape index: {}]
  %s3 = inlined_call_operand.vmem [shape: bf16[32,256], index: 3, kind: input, shape index: {}]
  %s4 = inlined_call_operand.vmem [shape: f32[1,256], index: 4, kind: input, shape index: {}]
  %s5 = inlined_call_operand.vmem [shape: f32[1,256], index: 5, kind: input, shape index: {}]
  %s6 = inlined_call_operand.vmem [shape: bf16[32,256], index: 6, kind: output, shape index: {}]
  %s7 = sld [smem:[#allocation0]]
  $region57: #{asr_forward.7} parent=0
    _
  %s9 = ssub.s32 1, %s7
  %s10 = scalar_select 0, %s9, %s7
  loop: start=0, step=1, limit=4
  $region2: #{asr_forward.7} parent=0 // loop_pre_header
    _
  $region3: #{asr_forward.7} parent=0 // loop_header
    %s12 = sphi 0, %s16
    %p13 = scmp.ge.s32.totalorder %s12, 4
    %s22 = sphi 0, %s24
    %s25 = sphi 0, %s22
    %s26 = sphi 0, %s25
    %s42 = sphi 0, %s26
    %s46 = sphi 0, %s46
    %s48 = sphi 0, %s46
    %s49 = sphi 0, %s48
    %s63 = sphi 0, %s49
    %s67 = sphi 0, %s67
    %s69 = sphi 0, %s67
    %s70 = sphi 0, %s69
    %s84 = sphi 0, %s70
    %s90 = sphi 0, %s92
    %s93 = sphi 0, %s90
    %s94 = sphi 0, %s93
    %s110 = sphi 0, %s94
    %s114 = sphi 0, %s114
    %s116 = sphi 0, %s114
    %s117 = sphi 0, %s116
    %s131 = sphi 0, %s117
    %s135 = sphi 0, %s135
    %s137 = sphi 0, %s135
    %s138 = sphi 0, %s137
    %s152 = sphi 0, %s138
    %s158 = sphi 0, %s160
    %s161 = sphi 0, %s158
    %s162 = sphi 0, %s161
    %s178 = sphi 0, %s162
  $region4: #{asr_forward.7} parent=0 // loop_header_branch
    %15 = sbr.rel (%p13) target = $region8
  $region5: #{asr_forward.7} parent=0 // loop_body
    %s17 = ssub.s32 %s12, 1
    %s18 = ssub.s32 %s12, 2
    %s19 = sadd.s32 %s12, 1
    %s20 = ssub.s32 %s12, %s19
    %p21 = scmp.eq.s32.totalorder %s20, 0
    %s23 = sadd.s32 %s22, 1
    %s24 = scalar_select %p21, %s22, %s23
    %p27 = pneg %p21
    %p28 = scmp.eq.s32.totalorder %s12, 1
    %p29 = por %p27, %p28
    %p30 = scmp.ne.s32.totalorder %s22, %s25
    %p31 = scmp.eq.s32.totalorder %s12, 0
    %p32 = por %p30, %p31
    %p33 = scmp.ne.s32.totalorder %s22, %s25
    %p34 = scmp.eq.s32.totalorder %s17, 1
    %p35 = por %p33, %p34
    %p36 = scmp.ne.s32.totalorder %s25, %s26
    %p37 = scmp.eq.s32.totalorder %s17, 0
    %p38 = por %p36, %p37
    %p39 = scmp.ne.s32.totalorder %s25, %s26
    %p40 = scmp.eq.s32.totalorder %s18, 1
    %p41 = por %p39, %p40
    %p43 = scmp.ne.s32.totalorder %s26, %s42
    %p44 = scmp.eq.s32.totalorder %s18, 0
    %p45 = por %p43, %p44
    %s47 = sadd.s32 %s46, 1
    %p50 = scmp.eq.s32.totalorder %s12, 1
    %p51 = scmp.ne.s32.totalorder %s46, %s48
    %p52 = scmp.eq.s32.totalorder %s12, 0
    %p53 = por %p51, %p52
    %p54 = scmp.ne.s32.totalorder %s46, %s48
    %p55 = scmp.eq.s32.totalorder %s17, 1
    %p56 = por %p54, %p55
    %p57 = scmp.ne.s32.totalorder %s48, %s49
    %p58 = scmp.eq.s32.totalorder %s17, 0
    %p59 = por %p57, %p58
    %p60 = scmp.ne.s32.totalorder %s48, %s49
    %p61 = scmp.eq.s32.totalorder %s18, 1
    %p62 = por %p60, %p61
    %p64 = scmp.ne.s32.totalorder %s49, %s63
    %p65 = scmp.eq.s32.totalorder %s18, 0
    %p66 = por %p64, %p65
    %s68 = sadd.s32 %s67, 1
    %p71 = scmp.eq.s32.totalorder %s12, 1
    %p72 = scmp.ne.s32.totalorder %s67, %s69
    %p73 = scmp.eq.s32.totalorder %s12, 0
    %p74 = por %p72, %p73
    %p75 = scmp.ne.s32.totalorder %s67, %s69
    %p76 = scmp.eq.s32.totalorder %s17, 1
    %p77 = por %p75, %p76
    %p78 = scmp.ne.s32.totalorder %s69, %s70
    %p79 = scmp.eq.s32.totalorder %s17, 0
    %p80 = por %p78, %p79
    %p81 = scmp.ne.s32.totalorder %s69, %s70
    %p82 = scmp.eq.s32.totalorder %s18, 1
    %p83 = por %p81, %p82
    %p85 = scmp.ne.s32.totalorder %s70, %s84
    %p86 = scmp.eq.s32.totalorder %s18, 0
    %p87 = por %p85, %p86
    %s88 = ssub.s32 %s12, %s19
    %p89 = scmp.eq.s32.totalorder %s88, 0
    %s91 = sadd.s32 %s90, 1
    %s92 = scalar_select %p89, %s90, %s91
    %p95 = pneg %p89
    %p96 = scmp.eq.s32.totalorder %s12, 1
    %p97 = por %p95, %p96
    %p98 = scmp.ne.s32.totalorder %s90, %s93
    %p99 = scmp.eq.s32.totalorder %s12, 0
    %p100 = por %p98, %p99
    %p101 = scmp.ne.s32.totalorder %s90, %s93
    %p102 = scmp.eq.s32.totalorder %s17, 1
    %p103 = por %p101, %p102
    %p104 = scmp.ne.s32.totalorder %s93, %s94
    %p105 = scmp.eq.s32.totalorder %s17, 0
    %p106 = por %p104, %p105
    %p107 = scmp.ne.s32.totalorder %s93, %s94
    %p108 = scmp.eq.s32.totalorder %s18, 1
    %p109 = por %p107, %p108
    %p111 = scmp.ne.s32.totalorder %s94, %s110
    %p112 = scmp.eq.s32.totalorder %s18, 0
    %p113 = por %p111, %p112
    %s115 = sadd.s32 %s114, 1
    %p118 = scmp.eq.s32.totalorder %s12, 1
    %p119 = scmp.ne.s32.totalorder %s114, %s116
    %p120 = scmp.eq.s32.totalorder %s12, 0
    %p121 = por %p119, %p120
    %p122 = scmp.ne.s32.totalorder %s114, %s116
    %p123 = scmp.eq.s32.totalorder %s17, 1
    %p124 = por %p122, %p123
    %p125 = scmp.ne.s32.totalorder %s116, %s117
    %p126 = scmp.eq.s32.totalorder %s17, 0
    %p127 = por %p125, %p126
    %p128 = scmp.ne.s32.totalorder %s116, %s117
    %p129 = scmp.eq.s32.totalorder %s18, 1
    %p130 = por %p128, %p129
    %p132 = scmp.ne.s32.totalorder %s117, %s131
    %p133 = scmp.eq.s32.totalorder %s18, 0
    %p134 = por %p132, %p133
    %s136 = sadd.s32 %s135, 1
    %p139 = scmp.eq.s32.totalorder %s12, 1
    %p140 = scmp.ne.s32.totalorder %s135, %s137
    %p141 = scmp.eq.s32.totalorder %s12, 0
    %p142 = por %p140, %p141
    %p143 = scmp.ne.s32.totalorder %s135, %s137
    %p144 = scmp.eq.s32.totalorder %s17, 1
    %p145 = por %p143, %p144
    %p146 = scmp.ne.s32.totalorder %s137, %s138
    %p147 = scmp.eq.s32.totalorder %s17, 0
    %p148 = por %p146, %p147
    %p149 = scmp.ne.s32.totalorder %s137, %s138
    %p150 = scmp.eq.s32.totalorder %s18, 1
    %p151 = por %p149, %p150
    %p153 = scmp.ne.s32.totalorder %s138, %s152
    %p154 = scmp.eq.s32.totalorder %s18, 0
    %p155 = por %p153, %p154
    %s156 = ssub.s32 %s12, %s19
    %p157 = scmp.eq.s32.totalorder %s156, 0
    %s159 = sadd.s32 %s158, 1
    %s160 = scalar_select %p157, %s158, %s159
    %p163 = pneg %p157
    %p164 = scmp.eq.s32.totalorder %s12, 1
    %p165 = por %p163, %p164
    %p166 = scmp.ne.s32.totalorder %s158, %s161
    %p167 = scmp.eq.s32.totalorder %s12, 0
    %p168 = por %p166, %p167
    %p169 = scmp.ne.s32.totalorder %s158, %s161
    %p170 = scmp.eq.s32.totalorder %s17, 1
    %p171 = por %p169, %p170
    %p172 = scmp.ne.s32.totalorder %s161, %s162
    %p173 = scmp.eq.s32.totalorder %s17, 0
    %p174 = por %p172, %p173
    %p175 = scmp.ne.s32.totalorder %s161, %s162
    %p176 = scmp.eq.s32.totalorder %s18, 1
    %p177 = por %p175, %p176
    %p179 = scmp.ne.s32.totalorder %s162, %s178
    %p180 = scmp.eq.s32.totalorder %s18, 0
    %p181 = por %p179, %p180
    %p182 = scmp.le.s32.totalorder 1, %s12
    %p183 = scmp.lt.s32.totalorder %s12, 3
    %p184 = pnand %p182, %p183
    %p185 = pneg %p184
    // Predicated region
    $region9: #{asr_forward.7} parent=5 // pred_check
      _
    $region10: #{asr_forward.7} parent=5 // pred_check_branch
      %187 = sbr.rel (%p184) target = $region12
    $region11: #{asr_forward.7} parent=5 // pred_region
      %s188 = ssub.s32 %s12, 1
      // Predicated region
      $region13: #{asr_forward.7} parent=11 // pred_check
        %p189 = pneg %p59
      $region14: #{asr_forward.7} parent=11 // pred_check_branch
        %191 = sbr.rel (%p189) target = $region16
      $region15: #{asr_forward.7} parent=11 // pred_region
        _
      $region16: #{asr_forward.7} parent=11 // pred_fallthru
        _
      // Predicated region
      $region17: #{asr_forward.7} parent=11 // pred_check
        %p192 = pneg %p80
      $region18: #{asr_forward.7} parent=11 // pred_check_branch
        %194 = sbr.rel (%p192) target = $region20
      $region19: #{asr_forward.7} parent=11 // pred_region
        _
      $region20: #{asr_forward.7} parent=11 // pred_fallthru
        _
      // Predicated region
      $region21: #{asr_forward.7} parent=11 // pred_check
        %p195 = pneg %p127
      $region22: #{asr_forward.7} parent=11 // pred_check_branch
        %197 = sbr.rel (%p195) target = $region24
      $region23: #{asr_forward.7} parent=11 // pred_region
        _
      $region24: #{asr_forward.7} parent=11 // pred_fallthru
        _
      // Predicated region
      $region25: #{asr_forward.7} parent=11 // pred_check
        %p198 = pneg %p148
      $region26: #{asr_forward.7} parent=11 // pred_check_branch
        %200 = sbr.rel (%p198) target = $region28
      $region27: #{asr_forward.7} parent=11 // pred_region
        _
      $region28: #{asr_forward.7} parent=11 // pred_fallthru
        _
    $region12: #{asr_forward.7} parent=5 // pred_fallthru
      _
    %p201 = scmp.lt.s32.totalorder %s12, 2
    // Predicated region
    $region29: #{asr_forward.7} parent=5 // pred_check
      %p202 = pneg %p201
    $region30: #{asr_forward.7} parent=5 // pred_check_branch
      %204 = sbr.rel (%p202) target = $region32
    $region31: #{asr_forward.7} parent=5 // pred_region
      // Predicated region
      $region33: #{asr_forward.7} parent=31 // pred_check
        %p205 = pneg %p32
      $region34: #{asr_forward.7} parent=31 // pred_check_branch
        %207 = sbr.rel (%p205) target = $region36
      $region35: #{asr_forward.7} parent=31 // pred_region
        %s208 = smul.u32 2, %s12
        %p209 = scmp.lt.s32.totalorder %s208, 3
        %s210 = scalar_select %p209, %s208, 3
        %s211 = smul.addr %s210, 2
        %s212 = smul.addr %s211, 4
        %s213 = scalar_lea.vmem %s0, %s212
        %s214 = smul.u32 2, %s12
      $region36: #{asr_forward.7} parent=31 // pred_fallthru
        _
      // Predicated region
      $region37: #{asr_forward.7} parent=31 // pred_check
        %p215 = pneg %p100
      $region38: #{asr_forward.7} parent=31 // pred_check_branch
        %217 = sbr.rel (%p215) target = $region40
      $region39: #{asr_forward.7} parent=31 // pred_region
        %s218 = smul.u32 2, %s12
        %p219 = scmp.lt.s32.totalorder %s218, 3
        %s220 = scalar_select %p219, %s218, 3
        %s221 = smul.addr %s220, 2
        %s222 = smul.addr %s221, 4
        %s223 = scalar_lea.vmem %s3, %s222
        %s224 = smul.u32 2, %s12
      $region40: #{asr_forward.7} parent=31 // pred_fallthru
        _
    $region32: #{asr_forward.7} parent=5 // pred_fallthru
      _
    %p225 = scmp.le.s32.totalorder 1, %s12
    %p226 = scmp.lt.s32.totalorder %s12, 3
    %p227 = pnand %p225, %p226
    %p228 = pneg %p227
    // Predicated region
    $region41: #{asr_forward.7} parent=5 // pred_check
      _
    $region42: #{asr_forward.7} parent=5 // pred_check_branch
      %230 = sbr.rel (%p227) target = $region44
    $region43: #{asr_forward.7} parent=5 // pred_region
      %s231 = ssub.s32 %s12, 1
      %s232 = smul.u32 2, %s17
      %p233 = scmp.lt.s32.totalorder %s232, 3
      %s234 = scalar_select %p233, %s232, 3
      %s235 = smul.addr %s234, 2
      %s236 = smul.addr %s235, 4
      %s237 = scalar_lea.vmem %s0, %s236
      %p238 = pneg %p38
      %p239 = pneg %p35
      %p240 = pneg %p59
      %p241 = pneg %p56
      %p242 = pneg %p80
      %p243 = pneg %p77
      %s244 = smul.u32 2, %s17
      %p245 = scmp.lt.s32.totalorder %s244, 3
      %s246 = scalar_select %p245, %s244, 3
      %s247 = smul.addr %s246, 2
      %s248 = smul.addr %s247, 4
      %s249 = scalar_lea.vmem %s3, %s248
      %p250 = pneg %p106
      %p251 = pneg %p103
      %p252 = pneg %p127
      %p253 = pneg %p124
      %p254 = pneg %p148
      %p255 = pneg %p145
      %p256 = pneg %p174
      %p257 = pneg %p171
      %s258 = smul.u32 2, %s17
      %p259 = scmp.lt.s32.totalorder %s258, 3
      %s260 = scalar_select %p259, %s258, 3
      %s261 = smul.addr %s260, 2
      %s262 = smul.addr %s261, 4
      %s263 = scalar_lea.vmem %s6, %s262
      %s264 = smul.u32 2, %s17
      %p265 = scmp.lt.s32.totalorder %s264, 3
      %s266 = scalar_select %p265, %s264, 3
      %s267 = smul.addr %s266, 2
      %s268 = smul.addr %s267, 4
      %s269 = scalar_lea.vmem %s0, %s268
      %s270 = smul.u32 2, %s17
      %s271 = smul.u32 2, %s17
      %p272 = scmp.lt.s32.totalorder %s271, 3
      %s273 = scalar_select %p272, %s271, 3
      %s274 = smul.addr %s273, 2
      %s275 = smul.addr %s274, 4
      %s276 = scalar_lea.vmem %s3, %s275
      %s277 = smul.u32 2, %s17
      %s278 = smul.u32 2, %s17
      %p279 = scmp.lt.s32.totalorder %s278, 3
      %s280 = scalar_select %p279, %s278, 3
      %s281 = smul.addr %s280, 2
      %s282 = smul.addr %s281, 4
      %s283 = scalar_lea.vmem %s6, %s282
      %s284 = smul.u32 2, %s17
      %v285 = vld [vmem:[%s269] sm:$0xff]
      %v286 = vld [vmem:[%s269 + $0x8] sm:$0xff]
      %v287 = vld [vmem:[%s1] sm:$0xff]
      %v288 = vld [vmem:[%s1 + $0x8] sm:$0xff]
      %v289 = vld [vmem:[%s1 + $0x10] sm:$0xff]
      %v290 = vld [vmem:[%s1 + $0x18] sm:$0xff]
      %v291 = vld [vmem:[%s1 + $0x20] sm:$0xff]
      %v292 = vld [vmem:[%s1 + $0x28] sm:$0xff]
      %v293 = vld [vmem:[%s1 + $0x30] sm:$0xff]
      %v294 = vld [vmem:[%s1 + $0x38] sm:$0xff]
      %v295 = vld [vmem:[%s1 + $0x40] sm:$0xff]
      %v296 = vld [vmem:[%s1 + $0x48] sm:$0xff]
      %v297 = vld [vmem:[%s1 + $0x50] sm:$0xff]
      %v298 = vld [vmem:[%s1 + $0x58] sm:$0xff]
      %v299 = vld [vmem:[%s1 + $0x60] sm:$0xff]
      %v300 = vld [vmem:[%s1 + $0x68] sm:$0xff]
      %v301 = vld [vmem:[%s1 + $0x70] sm:$0xff]
      %v302 = vld [vmem:[%s1 + $0x78] sm:$0xff]
      %v303 = vld [vmem:[%s1 + $0x80] sm:$0xff]
      %v304 = vld [vmem:[%s1 + $0x88] sm:$0xff]
      %v305 = vld [vmem:[%s1 + $0x90] sm:$0xff]
      %v306 = vld [vmem:[%s1 + $0x98] sm:$0xff]
      %v307 = vld [vmem:[%s1 + $0xa0] sm:$0xff]
      %v308 = vld [vmem:[%s1 + $0xa8] sm:$0xff]
      %v309 = vld [vmem:[%s1 + $0xb0] sm:$0xff]
      %v310 = vld [vmem:[%s1 + $0xb8] sm:$0xff]
      %v311 = vld [vmem:[%s1 + $0xc0] sm:$0xff]
      %v312 = vld [vmem:[%s1 + $0xc8] sm:$0xff]
      %v313 = vld [vmem:[%s1 + $0xd0] sm:$0xff]
      %v314 = vld [vmem:[%s1 + $0xd8] sm:$0xff]
      %v315 = vld [vmem:[%s1 + $0xe0] sm:$0xff]
      %v316 = vld [vmem:[%s1 + $0xe8] sm:$0xff]
      %v317 = vld [vmem:[%s1 + $0xf0] sm:$0xff]
      %v318 = vld [vmem:[%s1 + $0xf8] sm:$0xff]
      %v319 = vld [vmem:[%s2] sm:$0x3]
      %v321 = vlaneseq
      %v322 = vshrl.u32 %v321, 7
      %v323 = vsub.s32 0, %v322
      %v324 = vrot.slane %v319, %v323
      %v325 = vlaneseq
      %v326 = vshrl.u32 %v325, 7
      %v327 = vsub.s32 1, %v326
      %v328 = vrot.slane %v319, %v327
      %v333 = vunpack.c.l.b16 %v285
      %v334 = vunpack.c.h.b16 %v285
      %v335 = vunpack.c.l.b16 %v286
      %v336 = vunpack.c.h.b16 %v286
      %v337 = vpack.c.b16 %v335, %v333
      %v338 = vpack.c.b16 %v336, %v334
      %v373 = vunpack.c.l.b16 %v287
      %v374 = vunpack.c.h.b16 %v287
      %v375 = vunpack.c.l.b16 %v288
      %v376 = vunpack.c.h.b16 %v288
      %v377 = vunpack.c.l.b16 %v289
      %v378 = vunpack.c.h.b16 %v289
      %v379 = vunpack.c.l.b16 %v290
      %v380 = vunpack.c.h.b16 %v290
      %v381 = vunpack.c.l.b16 %v291
      %v382 = vunpack.c.h.b16 %v291
      %v383 = vunpack.c.l.b16 %v292
      %v384 = vunpack.c.h.b16 %v292
      %v385 = vunpack.c.l.b16 %v293
      %v386 = vunpack.c.h.b16 %v293
      %v387 = vunpack.c.l.b16 %v294
      %v388 = vunpack.c.h.b16 %v294
      %v389 = vunpack.c.l.b16 %v295
      %v390 = vunpack.c.h.b16 %v295
      %v391 = vunpack.c.l.b16 %v296
      %v392 = vunpack.c.h.b16 %v296
      %v393 = vunpack.c.l.b16 %v297
      %v394 = vunpack.c.h.b16 %v297
      %v395 = vunpack.c.l.b16 %v298
      %v396 = vunpack.c.h.b16 %v298
      %v397 = vunpack.c.l.b16 %v299
      %v398 = vunpack.c.h.b16 %v299
      %v399 = vunpack.c.l.b16 %v300
      %v400 = vunpack.c.h.b16 %v300
      %v401 = vunpack.c.l.b16 %v301
      %v402 = vunpack.c.h.b16 %v301
      %v403 = vunpack.c.l.b16 %v302
      %v404 = vunpack.c.h.b16 %v302
      %v405 = vunpack.c.l.b16 %v303
      %v406 = vunpack.c.h.b16 %v303
      %v407 = vunpack.c.l.b16 %v304
      %v408 = vunpack.c.h.b16 %v304
      %v409 = vunpack.c.l.b16 %v305
      %v410 = vunpack.c.h.b16 %v305
      %v411 = vunpack.c.l.b16 %v306
      %v412 = vunpack.c.h.b16 %v306
      %v413 = vunpack.c.l.b16 %v307
      %v414 = vunpack.c.h.b16 %v307
      %v415 = vunpack.c.l.b16 %v308
      %v416 = vunpack.c.h.b16 %v308
      %v417 = vunpack.c.l.b16 %v309
      %v418 = vunpack.c.h.b16 %v309
      %v419 = vunpack.c.l.b16 %v310
      %v420 = vunpack.c.h.b16 %v310
      %v421 = vunpack.c.l.b16 %v311
      %v422 = vunpack.c.h.b16 %v311
      %v423 = vunpack.c.l.b16 %v312
      %v424 = vunpack.c.h.b16 %v312
      %v425 = vunpack.c.l.b16 %v313
      %v426 = vunpack.c.h.b16 %v313
      %v427 = vunpack.c.l.b16 %v314
      %v428 = vunpack.c.h.b16 %v314
      %v429 = vunpack.c.l.b16 %v315
      %v430 = vunpack.c.h.b16 %v315
      %v431 = vunpack.c.l.b16 %v316
      %v432 = vunpack.c.h.b16 %v316
      %v433 = vunpack.c.l.b16 %v317
      %v434 = vunpack.c.h.b16 %v317
      %v435 = vunpack.c.l.b16 %v318
      %v436 = vunpack.c.h.b16 %v318
      %v437 = vpack.c.b16 %v375, %v373
      %v438 = vpack.c.b16 %v376, %v374
      %v439 = vpack.c.b16 %v379, %v377
      %v440 = vpack.c.b16 %v380, %v378
      %v441 = vpack.c.b16 %v383, %v381
      %v442 = vpack.c.b16 %v384, %v382
      %v443 = vpack.c.b16 %v387, %v385
      %v444 = vpack.c.b16 %v388, %v386
      %v445 = vpack.c.b16 %v391, %v389
      %v446 = vpack.c.b16 %v392, %v390
      %v447 = vpack.c.b16 %v395, %v393
      %v448 = vpack.c.b16 %v396, %v394
      %v449 = vpack.c.b16 %v399, %v397
      %v450 = vpack.c.b16 %v400, %v398
      %v451 = vpack.c.b16 %v403, %v401
      %v452 = vpack.c.b16 %v404, %v402
      %v453 = vpack.c.b16 %v407, %v405
      %v454 = vpack.c.b16 %v408, %v406
      %v455 = vpack.c.b16 %v411, %v409
      %v456 = vpack.c.b16 %v412, %v410
      %v457 = vpack.c.b16 %v415, %v413
      %v458 = vpack.c.b16 %v416, %v414
      %v459 = vpack.c.b16 %v419, %v417
      %v460 = vpack.c.b16 %v420, %v418
      %v461 = vpack.c.b16 %v423, %v421
      %v462 = vpack.c.b16 %v424, %v422
      %v463 = vpack.c.b16 %v427, %v425
      %v464 = vpack.c.b16 %v428, %v426
      %v465 = vpack.c.b16 %v431, %v429
      %v466 = vpack.c.b16 %v432, %v430
      %v467 = vpack.c.b16 %v435, %v433
      %v468 = vpack.c.b16 %v436, %v434
      %501 = vmatprep.subr.bf16.mxu0 %v438
      %502 = vmatpush1.bf16.msra.mxu0 %v437
      %503 = vmatprep.subr.bf16.mxu0 %v440
      %504 = vmatpush1.bf16.msra.mxu0 %v439
      %505 = vmatprep.subr.bf16.mxu0 %v442
      %506 = vmatpush1.bf16.msra.mxu0 %v441
      %507 = vmatprep.subr.bf16.mxu0 %v444
      %508 = vmatpush1.bf16.msra.mxu0 %v443
      %509 = vmatprep.subr.bf16.mxu0 %v446
      %510 = vmatpush1.bf16.msra.mxu0 %v445
      %511 = vmatprep.subr.bf16.mxu0 %v448
      %512 = vmatpush1.bf16.msra.mxu0 %v447
      %513 = vmatprep.subr.bf16.mxu0 %v450
      %514 = vmatpush1.bf16.msra.mxu0 %v449
      %515 = vmatprep.subr.bf16.mxu0 %v452
      %516 = vmatpush1.bf16.msra.mxu0 %v451
      %517 = vmatprep.subr.bf16.mxu0 %v454
      %518 = vmatpush1.bf16.msra.mxu0 %v453
      %519 = vmatprep.subr.bf16.mxu0 %v456
      %520 = vmatpush1.bf16.msra.mxu0 %v455
      %521 = vmatprep.subr.bf16.mxu0 %v458
      %522 = vmatpush1.bf16.msra.mxu0 %v457
      %523 = vmatprep.subr.bf16.mxu0 %v460
      %524 = vmatpush1.bf16.msra.mxu0 %v459
      %525 = vmatprep.subr.bf16.mxu0 %v462
      %526 = vmatpush1.bf16.msra.mxu0 %v461
      %527 = vmatprep.subr.bf16.mxu0 %v464
      %528 = vmatpush1.bf16.msra.mxu0 %v463
      %529 = vmatprep.subr.bf16.mxu0 %v466
      %530 = vmatpush1.bf16.msra.mxu0 %v465
      %531 = vmatprep.subr.bf16.mxu0 %v468
      %532 = vmatpush1.bf16.msra.mxu0 %v467
      %533 = vmatprep.mubr.bf16.mxu0 %v338
      %534 = vmatmul.mubr.bf16.gmra.mrb[0].mxu0 %v337
      %v535 = vpop.f32.mrb[0].mxu0
      %v536 = vadd.f32 %v324, %v535
      %v537 = vpop.f32.mrb[0].mxu0
      %v538 = vadd.f32 %v328, %v537
      %v539 = vpop.f32.mrb[0].mxu0
      %v540 = vadd.f32 %v324, %v539
      %v541 = vpop.f32.mrb[0].mxu0
      %v542 = vadd.f32 %v328, %v541
      %543 = vdwg.mxu0
      %v544 = vld [vmem:[%s276] sm:$0xff]
      %v545 = vld [vmem:[%s276 + $0x8] sm:$0xff]
      %v546 = vunpack.c.l.bf16 %v544
      %v547 = vunpack.c.h.bf16 %v544
      %v548 = vunpack.c.l.bf16 %v545
      %v549 = vunpack.c.h.bf16 %v545
      %v550 = vadd.f32 %v536, %v546
      %v551 = vadd.f32 %v538, %v547
      %v552 = vadd.f32 %v540, %v548
      %v553 = vadd.f32 %v542, %v549
      %v554 = vadd.f32 %v550, %v551
      %555 = vadd.xlane.f32.xlu0 %v554
      %v556 = vpop.xlane.xlu0 %555
      %v557 = vadd.f32 %v552, %v553
      %558 = vadd.xlane.f32.xlu0 %v557
      %v559 = vpop.xlane.xlu0 %558
      %v560 = vrcp.pop 256.0
      %v561 = vmul.f32 %v556, %v560
      %v562 = vmul.f32 %v559, %v560
      %v563 = vsub.f32 %v550, %v561
      %v564 = vsub.f32 %v551, %v561
      %v565 = vsub.f32 %v552, %v562
      %v566 = vsub.f32 %v553, %v562
      %v567 = vmul.f32 %v563, %v563
      %v568 = vmul.f32 %v564, %v564
      %v569 = vmul.f32 %v565, %v565
      %v570 = vmul.f32 %v566, %v566
      %v571 = vadd.f32 %v567, %v568
      %572 = vadd.xlane.f32.xlu0 %v571
      %v573 = vpop.xlane.xlu0 %572
      %v574 = vadd.f32 %v569, %v570
      %575 = vadd.xlane.f32.xlu0 %v574
      %v576 = vpop.xlane.xlu0 %575
      %v577 = vmul.f32 %v573, %v560
      %v578 = vmul.f32 %v576, %v560
      %v579 = vadd.f32 %v577, 1e-05
      %v580 = vadd.f32 %v578, 1e-05
      %v581 = vrsqrt.pop %v579
      %v582 = vrsqrt.pop %v580
      %v583 = vmul.f32 %v563, %v581
      %v584 = vmul.f32 %v564, %v581
      %v585 = vmul.f32 %v565, %v582
      %v586 = vmul.f32 %v566, %v582
      %v587 = vld [vmem:[%s4] sm:$0x3]
      %v589 = vlaneseq
      %v590 = vshrl.u32 %v589, 7
      %v591 = vsub.s32 0, %v590
      %v592 = vrot.slane %v587, %v591
      %v593 = vlaneseq
      %v594 = vshrl.u32 %v593, 7
      %v595 = vsub.s32 1, %v594
      %v596 = vrot.slane %v587, %v595
      %v599 = vmul.f32 %v583, %v592
      %v600 = vmul.f32 %v584, %v596
      %v601 = vmul.f32 %v585, %v592
      %v602 = vmul.f32 %v586, %v596
      %v603 = vld [vmem:[%s5] sm:$0x3]
      %v605 = vlaneseq
      %v606 = vshrl.u32 %v605, 7
      %v607 = vsub.s32 0, %v606
      %v608 = vrot.slane %v603, %v607
      %v609 = vlaneseq
      %v610 = vshrl.u32 %v609, 7
      %v611 = vsub.s32 1, %v610
      %v612 = vrot.slane %v603, %v611
      %v615 = vadd.f32 %v599, %v608
      %v616 = vadd.f32 %v600, %v612
      %v617 = vadd.f32 %v601, %v608
      %v618 = vadd.f32 %v602, %v612
      %v619 = vpack.c.bf16 %v617, %v615
      %v620 = vpack.c.bf16 %v618, %v616
      %v623 = vunpack.c.l.b16 %v619
      %v624 = vunpack.c.l.b16 %v620
      %v625 = vunpack.c.h.b16 %v619
      %v626 = vunpack.c.h.b16 %v620
      %v627 = vpack.c.b16 %v624, %v623
      %v628 = vpack.c.b16 %v626, %v625
      %631 = vst [vmem:[%s283] sm:$0xff] %v627
      %632 = vst [vmem:[%s283 + $0x8] sm:$0xff] %v628
      %s633 = smul.u32 2, %s17
      %p634 = scmp.lt.s32.totalorder %s633, 3
      %s635 = scalar_select %p634, %s633, 3
      %s636 = smul.addr %s635, 2
      %s637 = smul.addr %s636, 4
      %s638 = scalar_lea.vmem %s6, %s637
      // Predicated region
      $region45: #{asr_forward.7} parent=43 // pred_check
        %p639 = pneg %p171
      $region46: #{asr_forward.7} parent=43 // pred_check_branch
        %641 = sbr.rel (%p639) target = $region48
      $region47: #{asr_forward.7} parent=43 // pred_region
        %s642 = smul.u32 2, %s17
      $region48: #{asr_forward.7} parent=43 // pred_fallthru
        _
    $region44: #{asr_forward.7} parent=5 // pred_fallthru
      _
    %p643 = scmp.le.s32.totalorder 2, %s12
    // Predicated region
    $region49: #{asr_forward.7} parent=5 // pred_check
      %p644 = pneg %p643
    $region50: #{asr_forward.7} parent=5 // pred_check_branch
      %646 = sbr.rel (%p644) target = $region52
    $region51: #{asr_forward.7} parent=5 // pred_region
      %s647 = ssub.s32 %s12, 2
      // Predicated region
      $region53: #{asr_forward.7} parent=51 // pred_check
        %p648 = pneg %p177
      $region54: #{asr_forward.7} parent=51 // pred_check_branch
        %650 = sbr.rel (%p648) target = $region56
      $region55: #{asr_forward.7} parent=51 // pred_region
        %s651 = smul.u32 2, %s18
        %p652 = scmp.lt.s32.totalorder %s651, 3
        %s653 = scalar_select %p652, %s651, 3
        %s654 = smul.addr %s653, 2
        %s655 = smul.addr %s654, 4
        %s656 = scalar_lea.vmem %s6, %s655
      $region56: #{asr_forward.7} parent=51 // pred_fallthru
        _
    $region52: #{asr_forward.7} parent=5 // pred_fallthru
      _
  $region6: #{asr_forward.7} parent=0 // loop_footer
    %s16 = sadd.s32 1, %s12
  $region7: #{asr_forward.7} parent=0 // loop_footer_branch
    %11 = sbr.rel target = $region3
  $region8: #{asr_forward.7} parent=0 // loop_exit
    _

// kernel: asr_forward.5
$region0: #{asr_forward.5}
  #allocation0 [shape = 'u32[]', space=smem, size = 0x4, offset = 0x4, fixed_abs, tag = 'smem constant byte address 0x4 - core index']
  #allocation1 [shape = 'u32[144,128]{1,0:T(1,128)}', space=vmem, size = 0x12000, scoped, tag = 'internal scratch']
  %s0 = inlined_call_operand.vmem [shape: bf16[32,128], index: 0, kind: input, shape index: {}]
  %s1 = inlined_call_operand.vmem [shape: bf16[128,256], index: 1, kind: input, shape index: {}]
  %s2 = inlined_call_operand.vmem [shape: f32[1,256], index: 2, kind: input, shape index: {}]
  %s3 = inlined_call_operand.vmem [shape: bf16[256,768], index: 3, kind: input, shape index: {}]
  %s4 = inlined_call_operand.vmem [shape: f32[1,768], index: 4, kind: input, shape index: {}]
  %s5 = inlined_call_operand.vmem [shape: bf16[32,256], index: 5, kind: output, shape index: {0}]
  %s6 = inlined_call_operand.vmem [shape: bf16[32,768], index: 6, kind: output, shape index: {1}]
  %7 = xla_tuple %s5, %s6
  %s8 = sld [smem:[#allocation0]]
  $region61: #{asr_forward.5} parent=0
    _
  %s10 = ssub.s32 1, %s8
  %s11 = scalar_select 0, %s10, %s8
  loop: start=0, step=1, limit=4
  $region2: #{asr_forward.5} parent=0 // loop_pre_header
    _
  $region3: #{asr_forward.5} parent=0 // loop_header
    %s13 = sphi 0, %s17
    %p14 = scmp.ge.s32.totalorder %s13, 4
    %s23 = sphi 0, %s25
    %s26 = sphi 0, %s23
    %s27 = sphi 0, %s26
    %s43 = sphi 0, %s27
    %s47 = sphi 0, %s47
    %s49 = sphi 0, %s47
    %s50 = sphi 0, %s49
    %s64 = sphi 0, %s50
    %s68 = sphi 0, %s68
    %s70 = sphi 0, %s68
    %s71 = sphi 0, %s70
    %s85 = sphi 0, %s71
    %s89 = sphi 0, %s89
    %s91 = sphi 0, %s89
    %s92 = sphi 0, %s91
    %s106 = sphi 0, %s92
    %s110 = sphi 0, %s110
    %s112 = sphi 0, %s110
    %s113 = sphi 0, %s112
    %s127 = sphi 0, %s113
    %s133 = sphi 0, %s135
    %s136 = sphi 0, %s133
    %s137 = sphi 0, %s136
    %s153 = sphi 0, %s137
    %s159 = sphi 0, %s161
    %s162 = sphi 0, %s159
    %s163 = sphi 0, %s162
    %s179 = sphi 0, %s163
  $region4: #{asr_forward.5} parent=0 // loop_header_branch
    %16 = sbr.rel (%p14) target = $region8
  $region5: #{asr_forward.5} parent=0 // loop_body
    %s18 = ssub.s32 %s13, 1
    %s19 = ssub.s32 %s13, 2
    %s20 = sadd.s32 %s13, 1
    %s21 = ssub.s32 %s13, %s20
    %p22 = scmp.eq.s32.totalorder %s21, 0
    %s24 = sadd.s32 %s23, 1
    %s25 = scalar_select %p22, %s23, %s24
    %p28 = pneg %p22
    %p29 = scmp.eq.s32.totalorder %s13, 1
    %p30 = por %p28, %p29
    %p31 = scmp.ne.s32.totalorder %s23, %s26
    %p32 = scmp.eq.s32.totalorder %s13, 0
    %p33 = por %p31, %p32
    %p34 = scmp.ne.s32.totalorder %s23, %s26
    %p35 = scmp.eq.s32.totalorder %s18, 1
    %p36 = por %p34, %p35
    %p37 = scmp.ne.s32.totalorder %s26, %s27
    %p38 = scmp.eq.s32.totalorder %s18, 0
    %p39 = por %p37, %p38
    %p40 = scmp.ne.s32.totalorder %s26, %s27
    %p41 = scmp.eq.s32.totalorder %s19, 1
    %p42 = por %p40, %p41
    %p44 = scmp.ne.s32.totalorder %s27, %s43
    %p45 = scmp.eq.s32.totalorder %s19, 0
    %p46 = por %p44, %p45
    %s48 = sadd.s32 %s47, 1
    %p51 = scmp.eq.s32.totalorder %s13, 1
    %p52 = scmp.ne.s32.totalorder %s47, %s49
    %p53 = scmp.eq.s32.totalorder %s13, 0
    %p54 = por %p52, %p53
    %p55 = scmp.ne.s32.totalorder %s47, %s49
    %p56 = scmp.eq.s32.totalorder %s18, 1
    %p57 = por %p55, %p56
    %p58 = scmp.ne.s32.totalorder %s49, %s50
    %p59 = scmp.eq.s32.totalorder %s18, 0
    %p60 = por %p58, %p59
    %p61 = scmp.ne.s32.totalorder %s49, %s50
    %p62 = scmp.eq.s32.totalorder %s19, 1
    %p63 = por %p61, %p62
    %p65 = scmp.ne.s32.totalorder %s50, %s64
    %p66 = scmp.eq.s32.totalorder %s19, 0
    %p67 = por %p65, %p66
    %s69 = sadd.s32 %s68, 1
    %p72 = scmp.eq.s32.totalorder %s13, 1
    %p73 = scmp.ne.s32.totalorder %s68, %s70
    %p74 = scmp.eq.s32.totalorder %s13, 0
    %p75 = por %p73, %p74
    %p76 = scmp.ne.s32.totalorder %s68, %s70
    %p77 = scmp.eq.s32.totalorder %s18, 1
    %p78 = por %p76, %p77
    %p79 = scmp.ne.s32.totalorder %s70, %s71
    %p80 = scmp.eq.s32.totalorder %s18, 0
    %p81 = por %p79, %p80
    %p82 = scmp.ne.s32.totalorder %s70, %s71
    %p83 = scmp.eq.s32.totalorder %s19, 1
    %p84 = por %p82, %p83
    %p86 = scmp.ne.s32.totalorder %s71, %s85
    %p87 = scmp.eq.s32.totalorder %s19, 0
    %p88 = por %p86, %p87
    %s90 = sadd.s32 %s89, 1
    %p93 = scmp.eq.s32.totalorder %s13, 1
    %p94 = scmp.ne.s32.totalorder %s89, %s91
    %p95 = scmp.eq.s32.totalorder %s13, 0
    %p96 = por %p94, %p95
    %p97 = scmp.ne.s32.totalorder %s89, %s91
    %p98 = scmp.eq.s32.totalorder %s18, 1
    %p99 = por %p97, %p98
    %p100 = scmp.ne.s32.totalorder %s91, %s92
    %p101 = scmp.eq.s32.totalorder %s18, 0
    %p102 = por %p100, %p101
    %p103 = scmp.ne.s32.totalorder %s91, %s92
    %p104 = scmp.eq.s32.totalorder %s19, 1
    %p105 = por %p103, %p104
    %p107 = scmp.ne.s32.totalorder %s92, %s106
    %p108 = scmp.eq.s32.totalorder %s19, 0
    %p109 = por %p107, %p108
    %s111 = sadd.s32 %s110, 1
    %p114 = scmp.eq.s32.totalorder %s13, 1
    %p115 = scmp.ne.s32.totalorder %s110, %s112
    %p116 = scmp.eq.s32.totalorder %s13, 0
    %p117 = por %p115, %p116
    %p118 = scmp.ne.s32.totalorder %s110, %s112
    %p119 = scmp.eq.s32.totalorder %s18, 1
    %p120 = por %p118, %p119
    %p121 = scmp.ne.s32.totalorder %s112, %s113
    %p122 = scmp.eq.s32.totalorder %s18, 0
    %p123 = por %p121, %p122
    %p124 = scmp.ne.s32.totalorder %s112, %s113
    %p125 = scmp.eq.s32.totalorder %s19, 1
    %p126 = por %p124, %p125
    %p128 = scmp.ne.s32.totalorder %s113, %s127
    %p129 = scmp.eq.s32.totalorder %s19, 0
    %p130 = por %p128, %p129
    %s131 = ssub.s32 %s13, %s20
    %p132 = scmp.eq.s32.totalorder %s131, 0
    %s134 = sadd.s32 %s133, 1
    %s135 = scalar_select %p132, %s133, %s134
    %p138 = pneg %p132
    %p139 = scmp.eq.s32.totalorder %s13, 1
    %p140 = por %p138, %p139
    %p141 = scmp.ne.s32.totalorder %s133, %s136
    %p142 = scmp.eq.s32.totalorder %s13, 0
    %p143 = por %p141, %p142
    %p144 = scmp.ne.s32.totalorder %s133, %s136
    %p145 = scmp.eq.s32.totalorder %s18, 1
    %p146 = por %p144, %p145
    %p147 = scmp.ne.s32.totalorder %s136, %s137
    %p148 = scmp.eq.s32.totalorder %s18, 0
    %p149 = por %p147, %p148
    %p150 = scmp.ne.s32.totalorder %s136, %s137
    %p151 = scmp.eq.s32.totalorder %s19, 1
    %p152 = por %p150, %p151
    %p154 = scmp.ne.s32.totalorder %s137, %s153
    %p155 = scmp.eq.s32.totalorder %s19, 0
    %p156 = por %p154, %p155
    %s157 = ssub.s32 %s13, %s20
    %p158 = scmp.eq.s32.totalorder %s157, 0
    %s160 = sadd.s32 %s159, 1
    %s161 = scalar_select %p158, %s159, %s160
    %p164 = pneg %p158
    %p165 = scmp.eq.s32.totalorder %s13, 1
    %p166 = por %p164, %p165
    %p167 = scmp.ne.s32.totalorder %s159, %s162
    %p168 = scmp.eq.s32.totalorder %s13, 0
    %p169 = por %p167, %p168
    %p170 = scmp.ne.s32.totalorder %s159, %s162
    %p171 = scmp.eq.s32.totalorder %s18, 1
    %p172 = por %p170, %p171
    %p173 = scmp.ne.s32.totalorder %s162, %s163
    %p174 = scmp.eq.s32.totalorder %s18, 0
    %p175 = por %p173, %p174
    %p176 = scmp.ne.s32.totalorder %s162, %s163
    %p177 = scmp.eq.s32.totalorder %s19, 1
    %p178 = por %p176, %p177
    %p180 = scmp.ne.s32.totalorder %s163, %s179
    %p181 = scmp.eq.s32.totalorder %s19, 0
    %p182 = por %p180, %p181
    %p183 = scmp.le.s32.totalorder 1, %s13
    %p184 = scmp.lt.s32.totalorder %s13, 3
    %p185 = pnand %p183, %p184
    %p186 = pneg %p185
    // Predicated region
    $region9: #{asr_forward.5} parent=5 // pred_check
      _
    $region10: #{asr_forward.5} parent=5 // pred_check_branch
      %188 = sbr.rel (%p185) target = $region12
    $region11: #{asr_forward.5} parent=5 // pred_region
      %s189 = ssub.s32 %s13, 1
      // Predicated region
      $region13: #{asr_forward.5} parent=11 // pred_check
        %p190 = pneg %p60
      $region14: #{asr_forward.5} parent=11 // pred_check_branch
        %192 = sbr.rel (%p190) target = $region16
      $region15: #{asr_forward.5} parent=11 // pred_region
        _
      $region16: #{asr_forward.5} parent=11 // pred_fallthru
        _
      // Predicated region
      $region17: #{asr_forward.5} parent=11 // pred_check
        %p193 = pneg %p81
      $region18: #{asr_forward.5} parent=11 // pred_check_branch
        %195 = sbr.rel (%p193) target = $region20
      $region19: #{asr_forward.5} parent=11 // pred_region
        _
      $region20: #{asr_forward.5} parent=11 // pred_fallthru
        _
      // Predicated region
      $region21: #{asr_forward.5} parent=11 // pred_check
        %p196 = pneg %p102
      $region22: #{asr_forward.5} parent=11 // pred_check_branch
        %198 = sbr.rel (%p196) target = $region24
      $region23: #{asr_forward.5} parent=11 // pred_region
        _
      $region24: #{asr_forward.5} parent=11 // pred_fallthru
        _
      // Predicated region
      $region25: #{asr_forward.5} parent=11 // pred_check
        %p199 = pneg %p123
      $region26: #{asr_forward.5} parent=11 // pred_check_branch
        %201 = sbr.rel (%p199) target = $region28
      $region27: #{asr_forward.5} parent=11 // pred_region
        _
      $region28: #{asr_forward.5} parent=11 // pred_fallthru
        _
    $region12: #{asr_forward.5} parent=5 // pred_fallthru
      _
    %p202 = scmp.lt.s32.totalorder %s13, 2
    // Predicated region
    $region29: #{asr_forward.5} parent=5 // pred_check
      %p203 = pneg %p202
    $region30: #{asr_forward.5} parent=5 // pred_check_branch
      %205 = sbr.rel (%p203) target = $region32
    $region31: #{asr_forward.5} parent=5 // pred_region
      // Predicated region
      $region33: #{asr_forward.5} parent=31 // pred_check
        %p206 = pneg %p33
      $region34: #{asr_forward.5} parent=31 // pred_check_branch
        %208 = sbr.rel (%p206) target = $region36
      $region35: #{asr_forward.5} parent=31 // pred_region
        %s209 = smul.u32 2, %s13
        %p210 = scmp.lt.s32.totalorder %s209, 3
        %s211 = scalar_select %p210, %s209, 3
        %s212 = smul.addr %s211, 4
        %s213 = scalar_lea.vmem %s0, %s212
        %s214 = smul.u32 2, %s13
      $region36: #{asr_forward.5} parent=31 // pred_fallthru
        _
    $region32: #{asr_forward.5} parent=5 // pred_fallthru
      _
    %p215 = scmp.le.s32.totalorder 1, %s13
    %p216 = scmp.lt.s32.totalorder %s13, 3
    %p217 = pnand %p215, %p216
    %p218 = pneg %p217
    // Predicated region
    $region37: #{asr_forward.5} parent=5 // pred_check
      _
    $region38: #{asr_forward.5} parent=5 // pred_check_branch
      %220 = sbr.rel (%p217) target = $region40
    $region39: #{asr_forward.5} parent=5 // pred_region
      %s221 = ssub.s32 %s13, 1
      %s222 = smul.u32 2, %s18
      %p223 = scmp.lt.s32.totalorder %s222, 3
      %s224 = scalar_select %p223, %s222, 3
      %s225 = smul.addr %s224, 4
      %s226 = scalar_lea.vmem %s0, %s225
      %p227 = pneg %p39
      %p228 = pneg %p36
      %p229 = pneg %p60
      %p230 = pneg %p57
      %p231 = pneg %p81
      %p232 = pneg %p78
      %p233 = pneg %p102
      %p234 = pneg %p99
      %p235 = pneg %p123
      %p236 = pneg %p120
      %p237 = pneg %p149
      %p238 = pneg %p146
      %s239 = smul.u32 2, %s18
      %p240 = scmp.lt.s32.totalorder %s239, 3
      %s241 = scalar_select %p240, %s239, 3
      %s242 = smul.addr %s241, 2
      %s243 = smul.addr %s242, 4
      %s244 = scalar_lea.vmem %s5, %s243
      %p245 = pneg %p175
      %p246 = pneg %p172
      %s247 = smul.u32 2, %s18
      %p248 = scmp.lt.s32.totalorder %s247, 3
      %s249 = scalar_select %p248, %s247, 3
      %s250 = smul.addr %s249, 6
      %s251 = smul.addr %s250, 4
      %s252 = scalar_lea.vmem %s6, %s251
      %s253 = smul.u32 2, %s18
      %p254 = scmp.lt.s32.totalorder %s253, 3
      %s255 = scalar_select %p254, %s253, 3
      %s256 = smul.addr %s255, 4
      %s257 = scalar_lea.vmem %s0, %s256
      %s258 = smul.u32 2, %s18
      %s259 = smul.u32 2, %s18
      %p260 = scmp.lt.s32.totalorder %s259, 3
      %s261 = scalar_select %p260, %s259, 3
      %s262 = smul.addr %s261, 2
      %s263 = smul.addr %s262, 4
      %s264 = scalar_lea.vmem %s5, %s263
      %s265 = smul.u32 2, %s18
      %s266 = smul.u32 2, %s18
      %p267 = scmp.lt.s32.totalorder %s266, 3
      %s268 = scalar_select %p267, %s266, 3
      %s269 = smul.addr %s268, 6
      %s270 = smul.addr %s269, 4
      %s271 = scalar_lea.vmem %s6, %s270
      %s272 = smul.u32 2, %s18
      %v274 = vld [vmem:[%s257] sm:$0xf]
      %v275 = vld [vmem:[%s257 + $0x4] sm:$0xf]
      %v276 = vld [vmem:[%s1] sm:$0xff]
      %v277 = vld [vmem:[%s1 + $0x8] sm:$0xff]
      %v278 = vld [vmem:[%s1 + $0x10] sm:$0xff]
      %v279 = vld [vmem:[%s1 + $0x18] sm:$0xff]
      %v280 = vld [vmem:[%s1 + $0x20] sm:$0xff]
      %v281 = vld [vmem:[%s1 + $0x28] sm:$0xff]
      %v282 = vld [vmem:[%s1 + $0x30] sm:$0xff]
      %v283 = vld [vmem:[%s1 + $0x38] sm:$0xff]
      %v284 = vld [vmem:[%s1 + $0x40] sm:$0xff]
      %v285 = vld [vmem:[%s1 + $0x48] sm:$0xff]
      %v286 = vld [vmem:[%s1 + $0x50] sm:$0xff]
      %v287 = vld [vmem:[%s1 + $0x58] sm:$0xff]
      %v288 = vld [vmem:[%s1 + $0x60] sm:$0xff]
      %v289 = vld [vmem:[%s1 + $0x68] sm:$0xff]
      %v290 = vld [vmem:[%s1 + $0x70] sm:$0xff]
      %v291 = vld [vmem:[%s1 + $0x78] sm:$0xff]
      %v292 = vld [vmem:[%s2] sm:$0x3]
      %v294 = vlaneseq
      %v295 = vshrl.u32 %v294, 7
      %v296 = vsub.s32 0, %v295
      %v297 = vrot.slane %v292, %v296
      %v298 = vlaneseq
      %v299 = vshrl.u32 %v298, 7
      %v300 = vsub.s32 1, %v299
      %v301 = vrot.slane %v292, %v300
      %v306 = vunpack.c.l.b16 %v274
      %v307 = vunpack.c.l.b16 %v275
      %v308 = vpack.c.b16 %v307, %v306
      %v326 = vunpack.c.l.b16 %v276
      %v327 = vunpack.c.h.b16 %v276
      %v328 = vunpack.c.l.b16 %v277
      %v329 = vunpack.c.h.b16 %v277
      %v330 = vunpack.c.l.b16 %v278
      %v331 = vunpack.c.h.b16 %v278
      %v332 = vunpack.c.l.b16 %v279
      %v333 = vunpack.c.h.b16 %v279
      %v334 = vunpack.c.l.b16 %v280
      %v335 = vunpack.c.h.b16 %v280
      %v336 = vunpack.c.l.b16 %v281
      %v337 = vunpack.c.h.b16 %v281
      %v338 = vunpack.c.l.b16 %v282
      %v339 = vunpack.c.h.b16 %v282
      %v340 = vunpack.c.l.b16 %v283
      %v341 = vunpack.c.h.b16 %v283
      %v342 = vunpack.c.l.b16 %v284
      %v343 = vunpack.c.h.b16 %v284
      %v344 = vunpack.c.l.b16 %v285
      %v345 = vunpack.c.h.b16 %v285
      %v346 = vunpack.c.l.b16 %v286
      %v347 = vunpack.c.h.b16 %v286
      %v348 = vunpack.c.l.b16 %v287
      %v349 = vunpack.c.h.b16 %v287
      %v350 = vunpack.c.l.b16 %v288
      %v351 = vunpack.c.h.b16 %v288
      %v352 = vunpack.c.l.b16 %v289
      %v353 = vunpack.c.h.b16 %v289
      %v354 = vunpack.c.l.b16 %v290
      %v355 = vunpack.c.h.b16 %v290
      %v356 = vunpack.c.l.b16 %v291
      %v357 = vunpack.c.h.b16 %v291
      %v358 = vpack.c.b16 %v328, %v326
      %v359 = vpack.c.b16 %v329, %v327
      %v360 = vpack.c.b16 %v332, %v330
      %v361 = vpack.c.b16 %v333, %v331
      %v362 = vpack.c.b16 %v336, %v334
      %v363 = vpack.c.b16 %v337, %v335
      %v364 = vpack.c.b16 %v340, %v338
      %v365 = vpack.c.b16 %v341, %v339
      %v366 = vpack.c.b16 %v344, %v342
      %v367 = vpack.c.b16 %v345, %v343
      %v368 = vpack.c.b16 %v348, %v346
      %v369 = vpack.c.b16 %v349, %v347
      %v370 = vpack.c.b16 %v352, %v350
      %v371 = vpack.c.b16 %v353, %v351
      %v372 = vpack.c.b16 %v356, %v354
      %v373 = vpack.c.b16 %v357, %v355
      %390 = vmatprep.subr.bf16.mxu0 %v359
      %391 = vmatpush1.bf16.msra.mxu0 %v358
      %392 = vmatprep.subr.bf16.mxu0 %v361
      %393 = vmatpush1.bf16.msra.mxu0 %v360
      %394 = vmatprep.subr.bf16.mxu0 %v363
      %395 = vmatpush1.bf16.msra.mxu0 %v362
      %396 = vmatprep.subr.bf16.mxu0 %v365
      %397 = vmatpush1.bf16.msra.mxu0 %v364
      %398 = vmatprep.subr.bf16.mxu0 %v367
      %399 = vmatpush1.bf16.msra.mxu0 %v366
      %400 = vmatprep.subr.bf16.mxu0 %v369
      %401 = vmatpush1.bf16.msra.mxu0 %v368
      %402 = vmatprep.subr.bf16.mxu0 %v371
      %403 = vmatpush1.bf16.msra.mxu0 %v370
      %404 = vmatprep.subr.bf16.mxu0 %v373
      %405 = vmatpush1.bf16.msra.mxu0 %v372
      %406 = vmatprep.subr.bf16.mxu0 0
      %407 = vmatpush1.bf16.msra.mxu0 0
      %408 = vmatprep.subr.bf16.mxu0 0
      %409 = vmatpush1.bf16.msra.mxu0 0
      %410 = vmatprep.subr.bf16.mxu0 0
      %411 = vmatpush1.bf16.msra.mxu0 0
      %412 = vmatprep.subr.bf16.mxu0 0
      %413 = vmatpush1.bf16.msra.mxu0 0
      %414 = vmatprep.subr.bf16.mxu0 0
      %415 = vmatpush1.bf16.msra.mxu0 0
      %416 = vmatprep.subr.bf16.mxu0 0
      %417 = vmatpush1.bf16.msra.mxu0 0
      %418 = vmatprep.subr.bf16.mxu0 0
      %419 = vmatpush1.bf16.msra.mxu0 0
      %420 = vmatprep.subr.bf16.mxu0 0
      %421 = vmatpush1.bf16.msra.mxu0 0
      %422 = vmatprep.mubr.bf16.mxu0 0
      %423 = vmatmul.mubr.bf16.gmra.mrb[0].mxu0 %v308
      %v424 = vpop.f32.mrb[0].mxu0
      %v425 = vadd.f32 %v297, %v424
      %v426 = vpop.f32.mrb[0].mxu0
      %v427 = vadd.f32 %v301, %v426
      %v428 = vpop.f32.mrb[0].mxu0
      %v429 = vadd.f32 %v297, %v428
      %v430 = vpop.f32.mrb[0].mxu0
      %v431 = vadd.f32 %v301, %v430
      %432 = vdwg.mxu0
      %v433 = vpack.c.bf16 %v429, %v425
      %v434 = vpack.c.bf16 %v431, %v427
      %v437 = vunpack.c.l.b16 %v433
      %v438 = vunpack.c.l.b16 %v434
      %v439 = vunpack.c.h.b16 %v433
      %v440 = vunpack.c.h.b16 %v434
      %v441 = vpack.c.b16 %v438, %v437
      %v442 = vpack.c.b16 %v440, %v439
      %445 = vst [vmem:[%s264] sm:$0xff] %v441
      %446 = vst [vmem:[%s264 + $0x8] sm:$0xff] %v442
      %v447 = vld [vmem:[%s3] sm:$0xff]
      %v448 = vld [vmem:[%s3 + $0x8] sm:$0xff]
      %v449 = vld [vmem:[%s3 + $0x10] sm:$0xff]
      %v450 = vld [vmem:[%s3 + $0x18] sm:$0xff]
      %v451 = vld [vmem:[%s3 + $0x20] sm:$0xff]
      %v452 = vld [vmem:[%s3 + $0x28] sm:$0xff]
      %v453 = vld [vmem:[%s3 + $0x30] sm:$0xff]
      %v454 = vld [vmem:[%s3 + $0x38] sm:$0xff]
      %v455 = vld [vmem:[%s3 + $0x40] sm:$0xff]
      %v456 = vld [vmem:[%s3 + $0x48] sm:$0xff]
      %v457 = vld [vmem:[%s3 + $0x50] sm:$0xff]
      %v458 = vld [vmem:[%s3 + $0x58] sm:$0xff]
      %v459 = vld [vmem:[%s3 + $0x60] sm:$0xff]
      %v460 = vld [vmem:[%s3 + $0x68] sm:$0xff]
      %v461 = vld [vmem:[%s3 + $0x70] sm:$0xff]
      %v462 = vld [vmem:[%s3 + $0x78] sm:$0xff]
      %v463 = vld [vmem:[%s3 + $0x80] sm:$0xff]
      %v464 = vld [vmem:[%s3 + $0x88] sm:$0xff]
      %v465 = vld [vmem:[%s3 + $0x90] sm:$0xff]
      %v466 = vld [vmem:[%s3 + $0x98] sm:$0xff]
      %v467 = vld [vmem:[%s3 + $0xa0] sm:$0xff]
      %v468 = vld [vmem:[%s3 + $0xa8] sm:$0xff]
      %v469 = vld [vmem:[%s3 + $0xb0] sm:$0xff]
      %v470 = vld [vmem:[%s3 + $0xb8] sm:$0xff]
      %v471 = vld [vmem:[%s3 + $0xc0] sm:$0xff]
      %v472 = vld [vmem:[%s3 + $0xc8] sm:$0xff]
      %v473 = vld [vmem:[%s3 + $0xd0] sm:$0xff]
      %v474 = vld [vmem:[%s3 + $0xd8] sm:$0xff]
      %v475 = vld [vmem:[%s3 + $0xe0] sm:$0xff]
      %v476 = vld [vmem:[%s3 + $0xe8] sm:$0xff]
      %v477 = vld [vmem:[%s3 + $0xf0] sm:$0xff]
      %v478 = vld [vmem:[%s3 + $0xf8] sm:$0xff]
      %v479 = vld [vmem:[%s3 + $0x100] sm:$0xff]
      %v480 = vld [vmem:[%s3 + $0x108] sm:$0xff]
      %v481 = vld [vmem:[%s3 + $0x110] sm:$0xff]
      %v482 = vld [vmem:[%s3 + $0x118] sm:$0xff]
      %v483 = vld [vmem:[%s3 + $0x120] sm:$0xff]
      %v484 = vld [vmem:[%s3 + $0x128] sm:$0xff]
      %v485 = vld [vmem:[%s3 + $0x130] sm:$0xff]
      %v486 = vld [vmem:[%s3 + $0x138] sm:$0xff]
      %v487 = vld [vmem:[%s3 + $0x140] sm:$0xff]
      %v488 = vld [vmem:[%s3 + $0x148] sm:$0xff]
      %v489 = vld [vmem:[%s3 + $0x150] sm:$0xff]
      %v490 = vld [vmem:[%s3 + $0x158] sm:$0xff]
      %v491 = vld [vmem:[%s3 + $0x160] sm:$0xff]
      %v492 = vld [vmem:[%s3 + $0x168] sm:$0xff]
      %v493 = vld [vmem:[%s3 + $0x170] sm:$0xff]
      %v494 = vld [vmem:[%s3 + $0x178] sm:$0xff]
      %v495 = vld [vmem:[%s3 + $0x180] sm:$0xff]
      %v496 = vld [vmem:[%s3 + $0x188] sm:$0xff]
      %v497 = vld [vmem:[%s3 + $0x190] sm:$0xff]
      %v498 = vld [vmem:[%s3 + $0x198] sm:$0xff]
      %v499 = vld [vmem:[%s3 + $0x1a0] sm:$0xff]
      %v500 = vld [vmem:[%s3 + $0x1a8] sm:$0xff]
      %v501 = vld [vmem:[%s3 + $0x1b0] sm:$0xff]
      %v502 = vld [vmem:[%s3 + $0x1b8] sm:$0xff]
      %v503 = vld [vmem:[%s3 + $0x1c0] sm:$0xff]
      %v504 = vld [vmem:[%s3 + $0x1c8] sm:$0xff]
      %v505 = vld [vmem:[%s3 + $0x1d0] sm:$0xff]
      %v506 = vld [vmem:[%s3 + $0x1d8] sm:$0xff]
      %v507 = vld [vmem:[%s3 + $0x1e0] sm:$0xff]
      %v508 = vld [vmem:[%s3 + $0x1e8] sm:$0xff]
      %v509 = vld [vmem:[%s3 + $0x1f0] sm:$0xff]
      %v510 = vld [vmem:[%s3 + $0x1f8] sm:$0xff]
      %v511 = vld [vmem:[%s3 + $0x200] sm:$0xff]
      %v512 = vld [vmem:[%s3 + $0x208] sm:$0xff]
      %v513 = vld [vmem:[%s3 + $0x210] sm:$0xff]
      %v514 = vld [vmem:[%s3 + $0x218] sm:$0xff]
      %v515 = vld [vmem:[%s3 + $0x220] sm:$0xff]
      %v516 = vld [vmem:[%s3 + $0x228] sm:$0xff]
      %v517 = vld [vmem:[%s3 + $0x230] sm:$0xff]
      %v518 = vld [vmem:[%s3 + $0x238] sm:$0xff]
      %v519 = vld [vmem:[%s3 + $0x240] sm:$0xff]
      %v520 = vld [vmem:[%s3 + $0x248] sm:$0xff]
      %v521 = vld [vmem:[%s3 + $0x250] sm:$0xff]
      %v522 = vld [vmem:[%s3 + $0x258] sm:$0xff]
      %v523 = vld [vmem:[%s3 + $0x260] sm:$0xff]
      %v524 = vld [vmem:[%s3 + $0x268] sm:$0xff]
      %v525 = vld [vmem:[%s3 + $0x270] sm:$0xff]
      %v526 = vld [vmem:[%s3 + $0x278] sm:$0xff]
      %v527 = vld [vmem:[%s3 + $0x280] sm:$0xff]
      %v528 = vld [vmem:[%s3 + $0x288] sm:$0xff]
      %v529 = vld [vmem:[%s3 + $0x290] sm:$0xff]
      %v530 = vld [vmem:[%s3 + $0x298] sm:$0xff]
      %v531 = vld [vmem:[%s3 + $0x2a0] sm:$0xff]
      %v532 = vld [vmem:[%s3 + $0x2a8] sm:$0xff]
      %v533 = vld [vmem:[%s3 + $0x2b0] sm:$0xff]
      %v534 = vld [vmem:[%s3 + $0x2b8] sm:$0xff]
      %v535 = vld [vmem:[%s3 + $0x2c0] sm:$0xff]
      %v536 = vld [vmem:[%s3 + $0x2c8] sm:$0xff]
      %v537 = vld [vmem:[%s3 + $0x2d0] sm:$0xff]
      %v538 = vld [vmem:[%s3 + $0x2d8] sm:$0xff]
      %v539 = vld [vmem:[%s3 + $0x2e0] sm:$0xff]
      %v540 = vld [vmem:[%s3 + $0x2e8] sm:$0xff]
      %v541 = vld [vmem:[%s3 + $0x2f0] sm:$0xff]
      %v542 = vld [vmem:[%s3 + $0x2f8] sm:$0xff]
      %v543 = vld [vmem:[%s4] sm:$0x3f]
      %v545 = vlaneseq
      %v546 = vshrl.u32 %v545, 7
      %v547 = vsub.s32 0, %v546
      %v548 = vrot.slane %v543, %v547
      %v549 = vlaneseq
      %v550 = vshrl.u32 %v549, 7
      %v551 = vsub.s32 1, %v550
      %v552 = vrot.slane %v543, %v551
      %v553 = vlaneseq
      %v554 = vshrl.u32 %v553, 7
      %v555 = vsub.s32 2, %v554
      %v556 = vrot.slane %v543, %v555
      %v557 = vlaneseq
      %v558 = vshrl.u32 %v557, 7
      %v559 = vsub.s32 3, %v558
      %v560 = vrot.slane %v543, %v559
      %v561 = vlaneseq
      %v562 = vshrl.u32 %v561, 7
      %v563 = vsub.s32 4, %v562
      %v564 = vrot.slane %v543, %v563
      %v565 = vlaneseq
      %v566 = vshrl.u32 %v565, 7
      %v567 = vsub.s32 5, %v566
      %v568 = vrot.slane %v543, %v567
      %v671 = vunpack.c.l.b16 %v447
      %v672 = vunpack.c.h.b16 %v447
      %v673 = vunpack.c.l.b16 %v448
      %v674 = vunpack.c.h.b16 %v448
      %v675 = vunpack.c.l.b16 %v449
      %v676 = vunpack.c.h.b16 %v449
      %v677 = vunpack.c.l.b16 %v450
      %v678 = vunpack.c.h.b16 %v450
      %v679 = vunpack.c.l.b16 %v451
      %v680 = vunpack.c.h.b16 %v451
      %v681 = vunpack.c.l.b16 %v452
      %v682 = vunpack.c.h.b16 %v452
      %v683 = vunpack.c.l.b16 %v453
      %v684 = vunpack.c.h.b16 %v453
      %v685 = vunpack.c.l.b16 %v454
      %v686 = vunpack.c.h.b16 %v454
      %v687 = vunpack.c.l.b16 %v455
      %v688 = vunpack.c.h.b16 %v455
      %v689 = vunpack.c.l.b16 %v456
      %v690 = vunpack.c.h.b16 %v456
      %v691 = vunpack.c.l.b16 %v457
      %v692 = vunpack.c.h.b16 %v457
      %v693 = vunpack.c.l.b16 %v458
      %v694 = vunpack.c.h.b16 %v458
      %v695 = vunpack.c.l.b16 %v459
      %v696 = vunpack.c.h.b16 %v459
      %v697 = vunpack.c.l.b16 %v460
      %v698 = vunpack.c.h.b16 %v460
      %v699 = vunpack.c.l.b16 %v461
      %v700 = vunpack.c.h.b16 %v461
      %v701 = vunpack.c.l.b16 %v462
      %v702 = vunpack.c.h.b16 %v462
      %v703 = vunpack.c.l.b16 %v463
      %v704 = vunpack.c.h.b16 %v463
      %v705 = vunpack.c.l.b16 %v464
      %v706 = vunpack.c.h.b16 %v464
      %v707 = vunpack.c.l.b16 %v465
      %v708 = vunpack.c.h.b16 %v465
      %v709 = vunpack.c.l.b16 %v466
      %v710 = vunpack.c.h.b16 %v466
      %v711 = vunpack.c.l.b16 %v467
      %v712 = vunpack.c.h.b16 %v467
      %v713 = vunpack.c.l.b16 %v468
      %v714 = vunpack.c.h.b16 %v468
      %v715 = vunpack.c.l.b16 %v469
      %v716 = vunpack.c.h.b16 %v469
      %v717 = vunpack.c.l.b16 %v470
      %v718 = vunpack.c.h.b16 %v470
      %v719 = vunpack.c.l.b16 %v471
      %v720 = vunpack.c.h.b16 %v471
      %v721 = vunpack.c.l.b16 %v472
      %v722 = vunpack.c.h.b16 %v472
      %v723 = vunpack.c.l.b16 %v473
      %v724 = vunpack.c.h.b16 %v473
      %v725 = vunpack.c.l.b16 %v474
      %v726 = vunpack.c.h.b16 %v474
      %v727 = vunpack.c.l.b16 %v475
      %v728 = vunpack.c.h.b16 %v475
      %v729 = vunpack.c.l.b16 %v476
      %v730 = vunpack.c.h.b16 %v476
      %v731 = vunpack.c.l.b16 %v477
      %v732 = vunpack.c.h.b16 %v477
      %v733 = vunpack.c.l.b16 %v478
      %v734 = vunpack.c.h.b16 %v478
      %v735 = vunpack.c.l.b16 %v479
      %v736 = vunpack.c.h.b16 %v479
      %v737 = vunpack.c.l.b16 %v480
      %v738 = vunpack.c.h.b16 %v480
      %v739 = vunpack.c.l.b16 %v481
      %v740 = vunpack.c.h.b16 %v481
      %v741 = vunpack.c.l.b16 %v482
      %v742 = vunpack.c.h.b16 %v482
      %v743 = vunpack.c.l.b16 %v483
      %v744 = vunpack.c.h.b16 %v483
      %v745 = vunpack.c.l.b16 %v484
      %v746 = vunpack.c.h.b16 %v484
      %v747 = vunpack.c.l.b16 %v485
      %v748 = vunpack.c.h.b16 %v485
      %v749 = vunpack.c.l.b16 %v486
      %v750 = vunpack.c.h.b16 %v486
      %v751 = vunpack.c.l.b16 %v487
      %v752 = vunpack.c.h.b16 %v487
      %v753 = vunpack.c.l.b16 %v488
      %v754 = vunpack.c.h.b16 %v488
      %v755 = vunpack.c.l.b16 %v489
      %v756 = vunpack.c.h.b16 %v489
      %v757 = vunpack.c.l.b16 %v490
      %v758 = vunpack.c.h.b16 %v490
      %v759 = vunpack.c.l.b16 %v491
      %v760 = vunpack.c.h.b16 %v491
      %v761 = vunpack.c.l.b16 %v492
      %v762 = vunpack.c.h.b16 %v492
      %v763 = vunpack.c.l.b16 %v493
      %v764 = vunpack.c.h.b16 %v493
      %v765 = vunpack.c.l.b16 %v494
      %v766 = vunpack.c.h.b16 %v494
      %v767 = vunpack.c.l.b16 %v495
      %v768 = vunpack.c.h.b16 %v495
      %v769 = vunpack.c.l.b16 %v496
      %v770 = vunpack.c.h.b16 %v496
      %v771 = vunpack.c.l.b16 %v497
      %v772 = vunpack.c.h.b16 %v497
      %v773 = vunpack.c.l.b16 %v498
      %v774 = vunpack.c.h.b16 %v498
      %v775 = vunpack.c.l.b16 %v499
      %v776 = vunpack.c.h.b16 %v499
      %v777 = vunpack.c.l.b16 %v500
      %v778 = vunpack.c.h.b16 %v500
      %v779 = vunpack.c.l.b16 %v501
      %v780 = vunpack.c.h.b16 %v501
      %v781 = vunpack.c.l.b16 %v502
      %v782 = vunpack.c.h.b16 %v502
      %v783 = vunpack.c.l.b16 %v503
      %v784 = vunpack.c.h.b16 %v503
      %v785 = vunpack.c.l.b16 %v504
      %v786 = vunpack.c.h.b16 %v504
      %v787 = vunpack.c.l.b16 %v505
      %v788 = vunpack.c.h.b16 %v505
      %v789 = vunpack.c.l.b16 %v506
      %v790 = vunpack.c.h.b16 %v506
      %v791 = vunpack.c.l.b16 %v507
      %v792 = vunpack.c.h.b16 %v507
      %v793 = vunpack.c.l.b16 %v508
      %v794 = vunpack.c.h.b16 %v508
      %v795 = vunpack.c.l.b16 %v509
      %v796 = vunpack.c.h.b16 %v509
      %v797 = vunpack.c.l.b16 %v510
      %v798 = vunpack.c.h.b16 %v510
      %v799 = vunpack.c.l.b16 %v511
      %v800 = vunpack.c.h.b16 %v511
      %v801 = vunpack.c.l.b16 %v512
      %v802 = vunpack.c.h.b16 %v512
      %v803 = vunpack.c.l.b16 %v513
      %v804 = vunpack.c.h.b16 %v513
      %v805 = vunpack.c.l.b16 %v514
      %v806 = vunpack.c.h.b16 %v514
      %v807 = vunpack.c.l.b16 %v515
      %v808 = vunpack.c.h.b16 %v515
      %v809 = vunpack.c.l.b16 %v516
      %v810 = vunpack.c.h.b16 %v516
      %v811 = vunpack.c.l.b16 %v517
      %v812 = vunpack.c.h.b16 %v517
      %v813 = vunpack.c.l.b16 %v518
      %v814 = vunpack.c.h.b16 %v518
      %v815 = vunpack.c.l.b16 %v519
      %v816 = vunpack.c.h.b16 %v519
      %v817 = vunpack.c.l.b16 %v520
      %v818 = vunpack.c.h.b16 %v520
      %v819 = vunpack.c.l.b16 %v521
      %v820 = vunpack.c.h.b16 %v521
      %v821 = vunpack.c.l.b16 %v522
      %v822 = vunpack.c.h.b16 %v522
      %v823 = vunpack.c.l.b16 %v523
      %v824 = vunpack.c.h.b16 %v523
      %v825 = vunpack.c.l.b16 %v524
      %v826 = vunpack.c.h.b16 %v524
      %v827 = vunpack.c.l.b16 %v525
      %v828 = vunpack.c.h.b16 %v525
      %v829 = vunpack.c.l.b16 %v526
      %v830 = vunpack.c.h.b16 %v526
      %v831 = vunpack.c.l.b16 %v527
      %v832 = vunpack.c.h.b16 %v527
      %v833 = vunpack.c.l.b16 %v528
      %v834 = vunpack.c.h.b16 %v528
      %v835 = vunpack.c.l.b16 %v529
      %v836 = vunpack.c.h.b16 %v529
      %v837 = vunpack.c.l.b16 %v530
      %v838 = vunpack.c.h.b16 %v530
      %v839 = vunpack.c.l.b16 %v531
      %v840 = vunpack.c.h.b16 %v531
      %v841 = vunpack.c.l.b16 %v532
      %v842 = vunpack.c.h.b16 %v532
      %v843 = vunpack.c.l.b16 %v533
      %v844 = vunpack.c.h.b16 %v533
      %v845 = vunpack.c.l.b16 %v534
      %v846 = vunpack.c.h.b16 %v534
      %v847 = vunpack.c.l.b16 %v535
      %v848 = vunpack.c.h.b16 %v535
      %v849 = vunpack.c.l.b16 %v536
      %v850 = vunpack.c.h.b16 %v536
      %v851 = vunpack.c.l.b16 %v537
      %v852 = vunpack.c.h.b16 %v537
      %v853 = vunpack.c.l.b16 %v538
      %v854 = vunpack.c.h.b16 %v538
      %v855 = vunpack.c.l.b16 %v539
      %v856 = vunpack.c.h.b16 %v539
      %v857 = vunpack.c.l.b16 %v540
      %v858 = vunpack.c.h.b16 %v540
      %v859 = vunpack.c.l.b16 %v541
      %v860 = vunpack.c.h.b16 %v541
      %v861 = vunpack.c.l.b16 %v542
      %v862 = vunpack.c.h.b16 %v542
      %v863 = vpack.c.b16 %v677, %v671
      %v864 = vpack.c.b16 %v678, %v672
      %v865 = vpack.c.b16 %v679, %v673
      %v866 = vpack.c.b16 %v680, %v674
      %v867 = vpack.c.b16 %v681, %v675
      %v868 = vpack.c.b16 %v682, %v676
      %v869 = vpack.c.b16 %v689, %v683
      %v870 = vpack.c.b16 %v690, %v684
      %v871 = vpack.c.b16 %v691, %v685
      %v872 = vpack.c.b16 %v692, %v686
      %v873 = vpack.c.b16 %v693, %v687
      %v874 = vpack.c.b16 %v694, %v688
      %v875 = vpack.c.b16 %v701, %v695
      %v876 = vpack.c.b16 %v702, %v696
      %v877 = vpack.c.b16 %v703, %v697
      %v878 = vpack.c.b16 %v704, %v698
      %v879 = vpack.c.b16 %v705, %v699
      %v880 = vpack.c.b16 %v706, %v700
      %v881 = vpack.c.b16 %v713, %v707
      %v882 = vpack.c.b16 %v714, %v708
      %v883 = vpack.c.b16 %v715, %v709
      %v884 = vpack.c.b16 %v716, %v710
      %v885 = vpack.c.b16 %v717, %v711
      %v886 = vpack.c.b16 %v718, %v712
      %v887 = vpack.c.b16 %v725, %v719
      %v888 = vpack.c.b16 %v726, %v720
      %v889 = vpack.c.b16 %v727, %v721
      %v890 = vpack.c.b16 %v728, %v722
      %v891 = vpack.c.b16 %v729, %v723
      %v892 = vpack.c.b16 %v730, %v724
      %v893 = vpack.c.b16 %v737, %v731
      %v894 = vpack.c.b16 %v738, %v732
      %v895 = vpack.c.b16 %v739, %v733
      %v896 = vpack.c.b16 %v740, %v734
      %v897 = vpack.c.b16 %v741, %v735
      %v898 = vpack.c.b16 %v742, %v736
      %v899 = vpack.c.b16 %v749, %v743
      %v900 = vpack.c.b16 %v750, %v744
      %v901 = vpack.c.b16 %v751, %v745
      %v902 = vpack.c.b16 %v752, %v746
      %v903 = vpack.c.b16 %v753, %v747
      %v904 = vpack.c.b16 %v754, %v748
      %v905 = vpack.c.b16 %v761, %v755
      %v906 = vpack.c.b16 %v762, %v756
      %v907 = vpack.c.b16 %v763, %v757
      %v908 = vpack.c.b16 %v764, %v758
      %v909 = vpack.c.b16 %v765, %v759
      %v910 = vpack.c.b16 %v766, %v760
      %v911 = vpack.c.b16 %v773, %v767
      %v912 = vpack.c.b16 %v774, %v768
      %v913 = vpack.c.b16 %v775, %v769
      %v914 = vpack.c.b16 %v776, %v770
      %v915 = vpack.c.b16 %v777, %v771
      %v916 = vpack.c.b16 %v778, %v772
      %v917 = vpack.c.b16 %v785, %v779
      %v918 = vpack.c.b16 %v786, %v780
      %v919 = vpack.c.b16 %v787, %v781
      %v920 = vpack.c.b16 %v788, %v782
      %v921 = vpack.c.b16 %v789, %v783
      %v922 = vpack.c.b16 %v790, %v784
      %v923 = vpack.c.b16 %v797, %v791
      %v924 = vpack.c.b16 %v798, %v792
      %v925 = vpack.c.b16 %v799, %v793
      %v926 = vpack.c.b16 %v800, %v794
      %v927 = vpack.c.b16 %v801, %v795
      %v928 = vpack.c.b16 %v802, %v796
      %v929 = vpack.c.b16 %v809, %v803
      %v930 = vpack.c.b16 %v810, %v804
      %v931 = vpack.c.b16 %v811, %v805
      %v932 = vpack.c.b16 %v812, %v806
      %v933 = vpack.c.b16 %v813, %v807
      %v934 = vpack.c.b16 %v814, %v808
      %v935 = vpack.c.b16 %v821, %v815
      %v936 = vpack.c.b16 %v822, %v816
      %v937 = vpack.c.b16 %v823, %v817
      %v938 = vpack.c.b16 %v824, %v818
      %v939 = vpack.c.b16 %v825, %v819
      %v940 = vpack.c.b16 %v826, %v820
      %v941 = vpack.c.b16 %v833, %v827
      %v942 = vpack.c.b16 %v834, %v828
      %v943 = vpack.c.b16 %v835, %v829
      %v944 = vpack.c.b16 %v836, %v830
      %v945 = vpack.c.b16 %v837, %v831
      %v946 = vpack.c.b16 %v838, %v832
      %v947 = vpack.c.b16 %v845, %v839
      %v948 = vpack.c.b16 %v846, %v840
      %v949 = vpack.c.b16 %v847, %v841
      %v950 = vpack.c.b16 %v848, %v842
      %v951 = vpack.c.b16 %v849, %v843
      %v952 = vpack.c.b16 %v850, %v844
      %v953 = vpack.c.b16 %v857, %v851
      %v954 = vpack.c.b16 %v858, %v852
      %v955 = vpack.c.b16 %v859, %v853
      %v956 = vpack.c.b16 %v860, %v854
      %v957 = vpack.c.b16 %v861, %v855
      %v958 = vpack.c.b16 %v862, %v856
      %1055 = vmatprep.subr.bf16.mxu0 %v864
      %1056 = vmatpush1.bf16.msra.mxu0 %v863
      %1057 = vmatprep.subr.bf16.mxu0 %v870
      %1058 = vmatpush1.bf16.msra.mxu0 %v869
      %1059 = vmatprep.subr.bf16.mxu0 %v876
      %1060 = vmatpush1.bf16.msra.mxu0 %v875
      %1061 = vmatprep.subr.bf16.mxu0 %v882
      %1062 = vmatpush1.bf16.msra.mxu0 %v881
      %1063 = vmatprep.subr.bf16.mxu0 %v888
      %1064 = vmatpush1.bf16.msra.mxu0 %v887
      %1065 = vmatprep.subr.bf16.mxu0 %v894
      %1066 = vmatpush1.bf16.msra.mxu0 %v893
      %1067 = vmatprep.subr.bf16.mxu0 %v900
      %1068 = vmatpush1.bf16.msra.mxu0 %v899
      %1069 = vmatprep.subr.bf16.mxu0 %v906
      %1070 = vmatpush1.bf16.msra.mxu0 %v905
      %1071 = vmatprep.subr.bf16.mxu0 %v912
      %1072 = vmatpush1.bf16.msra.mxu0 %v911
      %1073 = vmatprep.subr.bf16.mxu0 %v918
      %1074 = vmatpush1.bf16.msra.mxu0 %v917
      %1075 = vmatprep.subr.bf16.mxu0 %v924
      %1076 = vmatpush1.bf16.msra.mxu0 %v923
      %1077 = vmatprep.subr.bf16.mxu0 %v930
      %1078 = vmatpush1.bf16.msra.mxu0 %v929
      %1079 = vmatprep.subr.bf16.mxu0 %v936
      %1080 = vmatpush1.bf16.msra.mxu0 %v935
      %1081 = vmatprep.subr.bf16.mxu0 %v942
      %1082 = vmatpush1.bf16.msra.mxu0 %v941
      %1083 = vmatprep.subr.bf16.mxu0 %v948
      %1084 = vmatpush1.bf16.msra.mxu0 %v947
      %1085 = vmatprep.subr.bf16.mxu0 %v954
      %1086 = vmatpush1.bf16.msra.mxu0 %v953
      %1087 = vmatprep.mubr.bf16.mxu0 %v434
      %1088 = vmatmul.mubr.bf16.gmra.mrb[0].mxu0 %v433
      %v1089 = vpop.f32.mrb[0].mxu0
      %v1090 = vadd.f32 %v548, %v1089
      %v1091 = vpop.f32.mrb[0].mxu0
      %v1092 = vadd.f32 %v552, %v1091
      %v1093 = vpop.f32.mrb[0].mxu0
      %v1094 = vadd.f32 %v548, %v1093
      %v1095 = vpop.f32.mrb[0].mxu0
      %v1096 = vadd.f32 %v552, %v1095
      %1097 = vdwg.mxu0
      %1098 = vmatprep.subr.bf16.mxu0 %v866
      %1099 = vmatpush1.bf16.msra.mxu0 %v865
      %1100 = vmatprep.subr.bf16.mxu0 %v872
      %1101 = vmatpush1.bf16.msra.mxu0 %v871
      %1102 = vmatprep.subr.bf16.mxu0 %v878
      %1103 = vmatpush1.bf16.msra.mxu0 %v877
      %1104 = vmatprep.subr.bf16.mxu0 %v884
      %1105 = vmatpush1.bf16.msra.mxu0 %v883
      %1106 = vmatprep.subr.bf16.mxu0 %v890
      %1107 = vmatpush1.bf16.msra.mxu0 %v889
      %1108 = vmatprep.subr.bf16.mxu0 %v896
      %1109 = vmatpush1.bf16.msra.mxu0 %v895
      %1110 = vmatprep.subr.bf16.mxu0 %v902
      %1111 = vmatpush1.bf16.msra.mxu0 %v901
      %1112 = vmatprep.subr.bf16.mxu0 %v908
      %1113 = vmatpush1.bf16.msra.mxu0 %v907
      %1114 = vmatprep.subr.bf16.mxu0 %v914
      %1115 = vmatpush1.bf16.msra.mxu0 %v913
      %1116 = vmatprep.subr.bf16.mxu0 %v920
      %1117 = vmatpush1.bf16.msra.mxu0 %v919
      %1118 = vmatprep.subr.bf16.mxu0 %v926
      %1119 = vmatpush1.bf16.msra.mxu0 %v925
      %1120 = vmatprep.subr.bf16.mxu0 %v932
      %1121 = vmatpush1.bf16.msra.mxu0 %v931
      %1122 = vmatprep.subr.bf16.mxu0 %v938
      %1123 = vmatpush1.bf16.msra.mxu0 %v937
      %1124 = vmatprep.subr.bf16.mxu0 %v944
      %1125 = vmatpush1.bf16.msra.mxu0 %v943
      %1126 = vmatprep.subr.bf16.mxu0 %v950
      %1127 = vmatpush1.bf16.msra.mxu0 %v949
      %1128 = vmatprep.subr.bf16.mxu0 %v956
      %1129 = vmatpush1.bf16.msra.mxu0 %v955
      %1130 = vmatprep.mubr.bf16.mxu0 %v434
      %1131 = vmatmul.mubr.bf16.gmra.mrb[0].mxu0 %v433
      %v1132 = vpop.f32.mrb[0].mxu0
      %v1133 = vadd.f32 %v556, %v1132
      %v1134 = vpop.f32.mrb[0].mxu0
      %v1135 = vadd.f32 %v560, %v1134
      %v1136 = vpop.f32.mrb[0].mxu0
      %v1137 = vadd.f32 %v556, %v1136
      %v1138 = vpop.f32.mrb[0].mxu0
      %v1139 = vadd.f32 %v560, %v1138
      %1140 = vdwg.mxu0
      %1141 = vmatprep.subr.bf16.mxu0 %v868
      %1142 = vmatpush1.bf16.msra.mxu0 %v867
      %1143 = vmatprep.subr.bf16.mxu0 %v874
      %1144 = vmatpush1.bf16.msra.mxu0 %v873
      %1145 = vmatprep.subr.bf16.mxu0 %v880
      %1146 = vmatpush1.bf16.msra.mxu0 %v879
      %1147 = vmatprep.subr.bf16.mxu0 %v886
      %1148 = vmatpush1.bf16.msra.mxu0 %v885
      %1149 = vmatprep.subr.bf16.mxu0 %v892
      %1150 = vmatpush1.bf16.msra.mxu0 %v891
      %1151 = vmatprep.subr.bf16.mxu0 %v898
      %1152 = vmatpush1.bf16.msra.mxu0 %v897
      %1153 = vmatprep.subr.bf16.mxu0 %v904
      %1154 = vmatpush1.bf16.msra.mxu0 %v903
      %1155 = vmatprep.subr.bf16.mxu0 %v910
      %1156 = vmatpush1.bf16.msra.mxu0 %v909
      %1157 = vmatprep.subr.bf16.mxu0 %v916
      %1158 = vmatpush1.bf16.msra.mxu0 %v915
      %1159 = vmatprep.subr.bf16.mxu0 %v922
      %1160 = vmatpush1.bf16.msra.mxu0 %v921
      %1161 = vmatprep.subr.bf16.mxu0 %v928
      %1162 = vmatpush1.bf16.msra.mxu0 %v927
      %1163 = vmatprep.subr.bf16.mxu0 %v934
      %1164 = vmatpush1.bf16.msra.mxu0 %v933
      %1165 = vmatprep.subr.bf16.mxu0 %v940
      %1166 = vmatpush1.bf16.msra.mxu0 %v939
      %1167 = vmatprep.subr.bf16.mxu0 %v946
      %1168 = vmatpush1.bf16.msra.mxu0 %v945
      %1169 = vmatprep.subr.bf16.mxu0 %v952
      %1170 = vmatpush1.bf16.msra.mxu0 %v951
      %1171 = vmatprep.subr.bf16.mxu0 %v958
      %1172 = vmatpush1.bf16.msra.mxu0 %v957
      %1173 = vmatprep.mubr.bf16.mxu0 %v434
      %1174 = vmatmul.mubr.bf16.gmra.mrb[0].mxu0 %v433
      %v1175 = vpop.f32.mrb[0].mxu0
      %v1176 = vadd.f32 %v564, %v1175
      %v1177 = vpop.f32.mrb[0].mxu0
      %v1178 = vadd.f32 %v568, %v1177
      %v1179 = vpop.f32.mrb[0].mxu0
      %v1180 = vadd.f32 %v564, %v1179
      %v1181 = vpop.f32.mrb[0].mxu0
      %v1182 = vadd.f32 %v568, %v1181
      %1183 = vdwg.mxu0
      %v1184 = vpack.c.bf16 %v1094, %v1090
      %v1185 = vpack.c.bf16 %v1096, %v1092
      %v1186 = vpack.c.bf16 %v1137, %v1133
      %v1187 = vpack.c.bf16 %v1139, %v1135
      %v1188 = vpack.c.bf16 %v1180, %v1176
      %v1189 = vpack.c.bf16 %v1182, %v1178
      %v1196 = vunpack.c.l.b16 %v1184
      %v1197 = vunpack.c.l.b16 %v1185
      %v1198 = vunpack.c.l.b16 %v1186
      %v1199 = vunpack.c.l.b16 %v1187
      %v1200 = vunpack.c.l.b16 %v1188
      %v1201 = vunpack.c.l.b16 %v1189
      %v1202 = vunpack.c.h.b16 %v1184
      %v1203 = vunpack.c.h.b16 %v1185
      %v1204 = vunpack.c.h.b16 %v1186
      %v1205 = vunpack.c.h.b16 %v1187
      %v1206 = vunpack.c.h.b16 %v1188
      %v1207 = vunpack.c.h.b16 %v1189
      %v1208 = vpack.c.b16 %v1197, %v1196
      %v1209 = vpack.c.b16 %v1199, %v1198
      %v1210 = vpack.c.b16 %v1201, %v1200
      %v1211 = vpack.c.b16 %v1203, %v1202
      %v1212 = vpack.c.b16 %v1205, %v1204
      %v1213 = vpack.c.b16 %v1207, %v1206
      %1220 = vst [vmem:[%s271] sm:$0xff] %v1208
      %1221 = vst [vmem:[%s271 + $0x8] sm:$0xff] %v1209
      %1222 = vst [vmem:[%s271 + $0x10] sm:$0xff] %v1210
      %1223 = vst [vmem:[%s271 + $0x18] sm:$0xff] %v1211
      %1224 = vst [vmem:[%s271 + $0x20] sm:$0xff] %v1212
      %1225 = vst [vmem:[%s271 + $0x28] sm:$0xff] %v1213
      %s1226 = smul.u32 2, %s18
      %p1227 = scmp.lt.s32.totalorder %s1226, 3
      %s1228 = scalar_select %p1227, %s1226, 3
      %s1229 = smul.addr %s1228, 2
      %s1230 = smul.addr %s1229, 4
      %s1231 = scalar_lea.vmem %s5, %s1230
      %s1232 = smul.u32 2, %s18
      %p1233 = scmp.lt.s32.totalorder %s1232, 3
      %s1234 = scalar_select %p1233, %s1232, 3
      %s1235 = smul.addr %s1234, 6
      %s1236 = smul.addr %s1235, 4
      %s1237 = scalar_lea.vmem %s6, %s1236
      // Predicated region
      $region41: #{asr_forward.5} parent=39 // pred_check
        %p1238 = pneg %p146
      $region42: #{asr_forward.5} parent=39 // pred_check_branch
        %1240 = sbr.rel (%p1238) target = $region44
      $region43: #{asr_forward.5} parent=39 // pred_region
        %s1241 = smul.u32 2, %s18
      $region44: #{asr_forward.5} parent=39 // pred_fallthru
        _
      // Predicated region
      $region45: #{asr_forward.5} parent=39 // pred_check
        %p1242 = pneg %p172
      $region46: #{asr_forward.5} parent=39 // pred_check_branch
        %1244 = sbr.rel (%p1242) target = $region48
      $region47: #{asr_forward.5} parent=39 // pred_region
        %s1245 = smul.u32 2, %s18
      $region48: #{asr_forward.5} parent=39 // pred_fallthru
        _
    $region40: #{asr_forward.5} parent=5 // pred_fallthru
      _
    %p1246 = scmp.le.s32.totalorder 2, %s13
    // Predicated region
    $region49: #{asr_forward.5} parent=5 // pred_check
      %p1247 = pneg %p1246
    $region50: #{asr_forward.5} parent=5 // pred_check_branch
      %1249 = sbr.rel (%p1247) target = $region52
    $region51: #{asr_forward.5} parent=5 // pred_region
      %s1250 = ssub.s32 %s13, 2
      // Predicated region
      $region53: #{asr_forward.5} parent=51 // pred_check
        %p1251 = pneg %p152
      $region54: #{asr_forward.5} parent=51 // pred_check_branch
        %1253 = sbr.rel (%p1251) target = $region56
      $region55: #{asr_forward.5} parent=51 // pred_region
        %s1254 = smul.u32 2, %s19
        %p1255 = scmp.lt.s32.totalorder %s1254, 3
        %s1256 = scalar_select %p1255, %s1254, 3
        %s1257 = smul.addr %s1256, 2
        %s1258 = smul.addr %s1257, 4
        %s1259 = scalar_lea.vmem %s5, %s1258
      $region56: #{asr_forward.5} parent=51 // pred_fallthru
        _
      // Predicated region
      $region57: #{asr_forward.5} parent=51 // pred_check
        %p1260 = pneg %p178
      $region58: #{asr_forward.5} parent=51 // pred_check_branch
        %1262 = sbr.rel (%p1260) target = $region60
      $region59: #{asr_forward.5} parent=51 // pred_region
        %s1263 = smul.u32 2, %s19
        %p1264 = scmp.lt.s32.totalorder %s1263, 3
        %s1265 = scalar_select %p1264, %s1263, 3
        %s1266 = smul.addr %s1265, 6
        %s1267 = smul.addr %s1266, 4
        %s1268 = scalar_lea.vmem %s6, %s1267
      $region60: #{asr_forward.5} parent=51 // pred_fallthru
        _
    $region52: #{asr_forward.5} parent=5 // pred_fallthru
      _
  $region6: #{asr_forward.5} parent=0 // loop_footer
    %s17 = sadd.s32 1, %s13
  $region7: #{asr_forward.5} parent=0 // loop_footer_branch
    %12 = sbr.rel target = $region3
  $region8: #{asr_forward.5} parent=0 // loop_exit
    _

// kernel: asr_forward.9
$region0: #{asr_forward.9}
  #allocation0 [shape = 'u32[]', space=smem, size = 0x4, offset = 0x4, fixed_abs, tag = 'smem constant byte address 0x4 - core index']
  #allocation1 [shape = 'u32[144,128]{1,0:T(1,128)}', space=vmem, size = 0x12000, scoped, tag = 'internal scratch']
  %s0 = inlined_call_operand.vmem [shape: bf16[32,256], index: 0, kind: input, shape index: {}]
  %s1 = inlined_call_operand.vmem [shape: bf16[256,256], index: 1, kind: input, shape index: {}]
  %s2 = inlined_call_operand.vmem [shape: f32[1,256], index: 2, kind: input, shape index: {}]
  %s3 = inlined_call_operand.vmem [shape: f32[32,256], index: 3, kind: output, shape index: {}]
  %s4 = sld [smem:[#allocation0]]
  $region45: #{asr_forward.9} parent=0
    _
  %s6 = ssub.s32 1, %s4
  %s7 = scalar_select 0, %s6, %s4
  loop: start=0, step=1, limit=4
  $region2: #{asr_forward.9} parent=0 // loop_pre_header
    _
  $region3: #{asr_forward.9} parent=0 // loop_header
    %s9 = sphi 0, %s13
    %p10 = scmp.ge.s32.totalorder %s9, 4
    %s19 = sphi 0, %s21
    %s22 = sphi 0, %s19
    %s23 = sphi 0, %s22
    %s39 = sphi 0, %s23
    %s43 = sphi 0, %s43
    %s45 = sphi 0, %s43
    %s46 = sphi 0, %s45
    %s60 = sphi 0, %s46
    %s64 = sphi 0, %s64
    %s66 = sphi 0, %s64
    %s67 = sphi 0, %s66
    %s81 = sphi 0, %s67
    %s87 = sphi 0, %s89
    %s90 = sphi 0, %s87
    %s91 = sphi 0, %s90
    %s107 = sphi 0, %s91
  $region4: #{asr_forward.9} parent=0 // loop_header_branch
    %12 = sbr.rel (%p10) target = $region8
  $region5: #{asr_forward.9} parent=0 // loop_body
    %s14 = ssub.s32 %s9, 1
    %s15 = ssub.s32 %s9, 2
    %s16 = sadd.s32 %s9, 1
    %s17 = ssub.s32 %s9, %s16
    %p18 = scmp.eq.s32.totalorder %s17, 0
    %s20 = sadd.s32 %s19, 1
    %s21 = scalar_select %p18, %s19, %s20
    %p24 = pneg %p18
    %p25 = scmp.eq.s32.totalorder %s9, 1
    %p26 = por %p24, %p25
    %p27 = scmp.ne.s32.totalorder %s19, %s22
    %p28 = scmp.eq.s32.totalorder %s9, 0
    %p29 = por %p27, %p28
    %p30 = scmp.ne.s32.totalorder %s19, %s22
    %p31 = scmp.eq.s32.totalorder %s14, 1
    %p32 = por %p30, %p31
    %p33 = scmp.ne.s32.totalorder %s22, %s23
    %p34 = scmp.eq.s32.totalorder %s14, 0
    %p35 = por %p33, %p34
    %p36 = scmp.ne.s32.totalorder %s22, %s23
    %p37 = scmp.eq.s32.totalorder %s15, 1
    %p38 = por %p36, %p37
    %p40 = scmp.ne.s32.totalorder %s23, %s39
    %p41 = scmp.eq.s32.totalorder %s15, 0
    %p42 = por %p40, %p41
    %s44 = sadd.s32 %s43, 1
    %p47 = scmp.eq.s32.totalorder %s9, 1
    %p48 = scmp.ne.s32.totalorder %s43, %s45
    %p49 = scmp.eq.s32.totalorder %s9, 0
    %p50 = por %p48, %p49
    %p51 = scmp.ne.s32.totalorder %s43, %s45
    %p52 = scmp.eq.s32.totalorder %s14, 1
    %p53 = por %p51, %p52
    %p54 = scmp.ne.s32.totalorder %s45, %s46
    %p55 = scmp.eq.s32.totalorder %s14, 0
    %p56 = por %p54, %p55
    %p57 = scmp.ne.s32.totalorder %s45, %s46
    %p58 = scmp.eq.s32.totalorder %s15, 1
    %p59 = por %p57, %p58
    %p61 = scmp.ne.s32.totalorder %s46, %s60
    %p62 = scmp.eq.s32.totalorder %s15, 0
    %p63 = por %p61, %p62
    %s65 = sadd.s32 %s64, 1
    %p68 = scmp.eq.s32.totalorder %s9, 1
    %p69 = scmp.ne.s32.totalorder %s64, %s66
    %p70 = scmp.eq.s32.totalorder %s9, 0
    %p71 = por %p69, %p70
    %p72 = scmp.ne.s32.totalorder %s64, %s66
    %p73 = scmp.eq.s32.totalorder %s14, 1
    %p74 = por %p72, %p73
    %p75 = scmp.ne.s32.totalorder %s66, %s67
    %p76 = scmp.eq.s32.totalorder %s14, 0
    %p77 = por %p75, %p76
    %p78 = scmp.ne.s32.totalorder %s66, %s67
    %p79 = scmp.eq.s32.totalorder %s15, 1
    %p80 = por %p78, %p79
    %p82 = scmp.ne.s32.totalorder %s67, %s81
    %p83 = scmp.eq.s32.totalorder %s15, 0
    %p84 = por %p82, %p83
    %s85 = ssub.s32 %s9, %s16
    %p86 = scmp.eq.s32.totalorder %s85, 0
    %s88 = sadd.s32 %s87, 1
    %s89 = scalar_select %p86, %s87, %s88
    %p92 = pneg %p86
    %p93 = scmp.eq.s32.totalorder %s9, 1
    %p94 = por %p92, %p93
    %p95 = scmp.ne.s32.totalorder %s87, %s90
    %p96 = scmp.eq.s32.totalorder %s9, 0
    %p97 = por %p95, %p96
    %p98 = scmp.ne.s32.totalorder %s87, %s90
    %p99 = scmp.eq.s32.totalorder %s14, 1
    %p100 = por %p98, %p99
    %p101 = scmp.ne.s32.totalorder %s90, %s91
    %p102 = scmp.eq.s32.totalorder %s14, 0
    %p103 = por %p101, %p102
    %p104 = scmp.ne.s32.totalorder %s90, %s91
    %p105 = scmp.eq.s32.totalorder %s15, 1
    %p106 = por %p104, %p105
    %p108 = scmp.ne.s32.totalorder %s91, %s107
    %p109 = scmp.eq.s32.totalorder %s15, 0
    %p110 = por %p108, %p109
    %p111 = scmp.le.s32.totalorder 1, %s9
    %p112 = scmp.lt.s32.totalorder %s9, 3
    %p113 = pnand %p111, %p112
    %p114 = pneg %p113
    // Predicated region
    $region9: #{asr_forward.9} parent=5 // pred_check
      _
    $region10: #{asr_forward.9} parent=5 // pred_check_branch
      %116 = sbr.rel (%p113) target = $region12
    $region11: #{asr_forward.9} parent=5 // pred_region
      %s117 = ssub.s32 %s9, 1
      // Predicated region
      $region13: #{asr_forward.9} parent=11 // pred_check
        %p118 = pneg %p56
      $region14: #{asr_forward.9} parent=11 // pred_check_branch
        %120 = sbr.rel (%p118) target = $region16
      $region15: #{asr_forward.9} parent=11 // pred_region
        _
      $region16: #{asr_forward.9} parent=11 // pred_fallthru
        _
      // Predicated region
      $region17: #{asr_forward.9} parent=11 // pred_check
        %p121 = pneg %p77
      $region18: #{asr_forward.9} parent=11 // pred_check_branch
        %123 = sbr.rel (%p121) target = $region20
      $region19: #{asr_forward.9} parent=11 // pred_region
        _
      $region20: #{asr_forward.9} parent=11 // pred_fallthru
        _
    $region12: #{asr_forward.9} parent=5 // pred_fallthru
      _
    %p124 = scmp.lt.s32.totalorder %s9, 2
    // Predicated region
    $region21: #{asr_forward.9} parent=5 // pred_check
      %p125 = pneg %p124
    $region22: #{asr_forward.9} parent=5 // pred_check_branch
      %127 = sbr.rel (%p125) target = $region24
    $region23: #{asr_forward.9} parent=5 // pred_region
      // Predicated region
      $region25: #{asr_forward.9} parent=23 // pred_check
        %p128 = pneg %p29
      $region26: #{asr_forward.9} parent=23 // pred_check_branch
        %130 = sbr.rel (%p128) target = $region28
      $region27: #{asr_forward.9} parent=23 // pred_region
        %s131 = smul.u32 2, %s9
        %p132 = scmp.lt.s32.totalorder %s131, 3
        %s133 = scalar_select %p132, %s131, 3
        %s134 = smul.addr %s133, 2
        %s135 = smul.addr %s134, 4
        %s136 = scalar_lea.vmem %s0, %s135
        %s137 = smul.u32 2, %s9
      $region28: #{asr_forward.9} parent=23 // pred_fallthru
        _
    $region24: #{asr_forward.9} parent=5 // pred_fallthru
      _
    %p138 = scmp.le.s32.totalorder 1, %s9
    %p139 = scmp.lt.s32.totalorder %s9, 3
    %p140 = pnand %p138, %p139
    %p141 = pneg %p140
    // Predicated region
    $region29: #{asr_forward.9} parent=5 // pred_check
      _
    $region30: #{asr_forward.9} parent=5 // pred_check_branch
      %143 = sbr.rel (%p140) target = $region32
    $region31: #{asr_forward.9} parent=5 // pred_region
      %s144 = ssub.s32 %s9, 1
      %s145 = smul.u32 2, %s14
      %p146 = scmp.lt.s32.totalorder %s145, 3
      %s147 = scalar_select %p146, %s145, 3
      %s148 = smul.addr %s147, 2
      %s149 = smul.addr %s148, 4
      %s150 = scalar_lea.vmem %s0, %s149
      %p151 = pneg %p35
      %p152 = pneg %p32
      %p153 = pneg %p56
      %p154 = pneg %p53
      %p155 = pneg %p77
      %p156 = pneg %p74
      %p157 = pneg %p103
      %p158 = pneg %p100
      %s159 = smul.u32 2, %s14
      %p160 = scmp.lt.s32.totalorder %s159, 3
      %s161 = scalar_select %p160, %s159, 3
      %s162 = smul.addr %s161, 2
      %s163 = smul.addr %s162, 8
      %s164 = scalar_lea.vmem %s3, %s163
      %s165 = smul.u32 2, %s14
      %p166 = scmp.lt.s32.totalorder %s165, 3
      %s167 = scalar_select %p166, %s165, 3
      %s168 = smul.addr %s167, 2
      %s169 = smul.addr %s168, 4
      %s170 = scalar_lea.vmem %s0, %s169
      %s171 = smul.u32 2, %s14
      %s172 = smul.u32 2, %s14
      %p173 = scmp.lt.s32.totalorder %s172, 3
      %s174 = scalar_select %p173, %s172, 3
      %s175 = smul.addr %s174, 2
      %s176 = smul.addr %s175, 8
      %s177 = scalar_lea.vmem %s3, %s176
      %s178 = smul.u32 2, %s14
      %v179 = vld [vmem:[%s170] sm:$0xff]
      %v180 = vld [vmem:[%s170 + $0x8] sm:$0xff]
      %v181 = vld [vmem:[%s1] sm:$0xff]
      %v182 = vld [vmem:[%s1 + $0x8] sm:$0xff]
      %v183 = vld [vmem:[%s1 + $0x10] sm:$0xff]
      %v184 = vld [vmem:[%s1 + $0x18] sm:$0xff]
      %v185 = vld [vmem:[%s1 + $0x20] sm:$0xff]
      %v186 = vld [vmem:[%s1 + $0x28] sm:$0xff]
      %v187 = vld [vmem:[%s1 + $0x30] sm:$0xff]
      %v188 = vld [vmem:[%s1 + $0x38] sm:$0xff]
      %v189 = vld [vmem:[%s1 + $0x40] sm:$0xff]
      %v190 = vld [vmem:[%s1 + $0x48] sm:$0xff]
      %v191 = vld [vmem:[%s1 + $0x50] sm:$0xff]
      %v192 = vld [vmem:[%s1 + $0x58] sm:$0xff]
      %v193 = vld [vmem:[%s1 + $0x60] sm:$0xff]
      %v194 = vld [vmem:[%s1 + $0x68] sm:$0xff]
      %v195 = vld [vmem:[%s1 + $0x70] sm:$0xff]
      %v196 = vld [vmem:[%s1 + $0x78] sm:$0xff]
      %v197 = vld [vmem:[%s1 + $0x80] sm:$0xff]
      %v198 = vld [vmem:[%s1 + $0x88] sm:$0xff]
      %v199 = vld [vmem:[%s1 + $0x90] sm:$0xff]
      %v200 = vld [vmem:[%s1 + $0x98] sm:$0xff]
      %v201 = vld [vmem:[%s1 + $0xa0] sm:$0xff]
      %v202 = vld [vmem:[%s1 + $0xa8] sm:$0xff]
      %v203 = vld [vmem:[%s1 + $0xb0] sm:$0xff]
      %v204 = vld [vmem:[%s1 + $0xb8] sm:$0xff]
      %v205 = vld [vmem:[%s1 + $0xc0] sm:$0xff]
      %v206 = vld [vmem:[%s1 + $0xc8] sm:$0xff]
      %v207 = vld [vmem:[%s1 + $0xd0] sm:$0xff]
      %v208 = vld [vmem:[%s1 + $0xd8] sm:$0xff]
      %v209 = vld [vmem:[%s1 + $0xe0] sm:$0xff]
      %v210 = vld [vmem:[%s1 + $0xe8] sm:$0xff]
      %v211 = vld [vmem:[%s1 + $0xf0] sm:$0xff]
      %v212 = vld [vmem:[%s1 + $0xf8] sm:$0xff]
      %v213 = vld [vmem:[%s2] sm:$0x3]
      %v215 = vlaneseq
      %v216 = vshrl.u32 %v215, 7
      %v217 = vsub.s32 0, %v216
      %v218 = vrot.slane %v213, %v217
      %v219 = vlaneseq
      %v220 = vshrl.u32 %v219, 7
      %v221 = vsub.s32 1, %v220
      %v222 = vrot.slane %v213, %v221
      %v227 = vunpack.c.l.b16 %v179
      %v228 = vunpack.c.h.b16 %v179
      %v229 = vunpack.c.l.b16 %v180
      %v230 = vunpack.c.h.b16 %v180
      %v231 = vpack.c.b16 %v229, %v227
      %v232 = vpack.c.b16 %v230, %v228
      %v267 = vunpack.c.l.b16 %v181
      %v268 = vunpack.c.h.b16 %v181
      %v269 = vunpack.c.l.b16 %v182
      %v270 = vunpack.c.h.b16 %v182
      %v271 = vunpack.c.l.b16 %v183
      %v272 = vunpack.c.h.b16 %v183
      %v273 = vunpack.c.l.b16 %v184
      %v274 = vunpack.c.h.b16 %v184
      %v275 = vunpack.c.l.b16 %v185
      %v276 = vunpack.c.h.b16 %v185
      %v277 = vunpack.c.l.b16 %v186
      %v278 = vunpack.c.h.b16 %v186
      %v279 = vunpack.c.l.b16 %v187
      %v280 = vunpack.c.h.b16 %v187
      %v281 = vunpack.c.l.b16 %v188
      %v282 = vunpack.c.h.b16 %v188
      %v283 = vunpack.c.l.b16 %v189
      %v284 = vunpack.c.h.b16 %v189
      %v285 = vunpack.c.l.b16 %v190
      %v286 = vunpack.c.h.b16 %v190
      %v287 = vunpack.c.l.b16 %v191
      %v288 = vunpack.c.h.b16 %v191
      %v289 = vunpack.c.l.b16 %v192
      %v290 = vunpack.c.h.b16 %v192
      %v291 = vunpack.c.l.b16 %v193
      %v292 = vunpack.c.h.b16 %v193
      %v293 = vunpack.c.l.b16 %v194
      %v294 = vunpack.c.h.b16 %v194
      %v295 = vunpack.c.l.b16 %v195
      %v296 = vunpack.c.h.b16 %v195
      %v297 = vunpack.c.l.b16 %v196
      %v298 = vunpack.c.h.b16 %v196
      %v299 = vunpack.c.l.b16 %v197
      %v300 = vunpack.c.h.b16 %v197
      %v301 = vunpack.c.l.b16 %v198
      %v302 = vunpack.c.h.b16 %v198
      %v303 = vunpack.c.l.b16 %v199
      %v304 = vunpack.c.h.b16 %v199
      %v305 = vunpack.c.l.b16 %v200
      %v306 = vunpack.c.h.b16 %v200
      %v307 = vunpack.c.l.b16 %v201
      %v308 = vunpack.c.h.b16 %v201
      %v309 = vunpack.c.l.b16 %v202
      %v310 = vunpack.c.h.b16 %v202
      %v311 = vunpack.c.l.b16 %v203
      %v312 = vunpack.c.h.b16 %v203
      %v313 = vunpack.c.l.b16 %v204
      %v314 = vunpack.c.h.b16 %v204
      %v315 = vunpack.c.l.b16 %v205
      %v316 = vunpack.c.h.b16 %v205
      %v317 = vunpack.c.l.b16 %v206
      %v318 = vunpack.c.h.b16 %v206
      %v319 = vunpack.c.l.b16 %v207
      %v320 = vunpack.c.h.b16 %v207
      %v321 = vunpack.c.l.b16 %v208
      %v322 = vunpack.c.h.b16 %v208
      %v323 = vunpack.c.l.b16 %v209
      %v324 = vunpack.c.h.b16 %v209
      %v325 = vunpack.c.l.b16 %v210
      %v326 = vunpack.c.h.b16 %v210
      %v327 = vunpack.c.l.b16 %v211
      %v328 = vunpack.c.h.b16 %v211
      %v329 = vunpack.c.l.b16 %v212
      %v330 = vunpack.c.h.b16 %v212
      %v331 = vpack.c.b16 %v269, %v267
      %v332 = vpack.c.b16 %v270, %v268
      %v333 = vpack.c.b16 %v273, %v271
      %v334 = vpack.c.b16 %v274, %v272
      %v335 = vpack.c.b16 %v277, %v275
      %v336 = vpack.c.b16 %v278, %v276
      %v337 = vpack.c.b16 %v281, %v279
      %v338 = vpack.c.b16 %v282, %v280
      %v339 = vpack.c.b16 %v285, %v283
      %v340 = vpack.c.b16 %v286, %v284
      %v341 = vpack.c.b16 %v289, %v287
      %v342 = vpack.c.b16 %v290, %v288
      %v343 = vpack.c.b16 %v293, %v291
      %v344 = vpack.c.b16 %v294, %v292
      %v345 = vpack.c.b16 %v297, %v295
      %v346 = vpack.c.b16 %v298, %v296
      %v347 = vpack.c.b16 %v301, %v299
      %v348 = vpack.c.b16 %v302, %v300
      %v349 = vpack.c.b16 %v305, %v303
      %v350 = vpack.c.b16 %v306, %v304
      %v351 = vpack.c.b16 %v309, %v307
      %v352 = vpack.c.b16 %v310, %v308
      %v353 = vpack.c.b16 %v313, %v311
      %v354 = vpack.c.b16 %v314, %v312
      %v355 = vpack.c.b16 %v317, %v315
      %v356 = vpack.c.b16 %v318, %v316
      %v357 = vpack.c.b16 %v321, %v319
      %v358 = vpack.c.b16 %v322, %v320
      %v359 = vpack.c.b16 %v325, %v323
      %v360 = vpack.c.b16 %v326, %v324
      %v361 = vpack.c.b16 %v329, %v327
      %v362 = vpack.c.b16 %v330, %v328
      %395 = vmatprep.subr.bf16.mxu0 %v332
      %396 = vmatpush1.bf16.msra.mxu0 %v331
      %397 = vmatprep.subr.bf16.mxu0 %v334
      %398 = vmatpush1.bf16.msra.mxu0 %v333
      %399 = vmatprep.subr.bf16.mxu0 %v336
      %400 = vmatpush1.bf16.msra.mxu0 %v335
      %401 = vmatprep.subr.bf16.mxu0 %v338
      %402 = vmatpush1.bf16.msra.mxu0 %v337
      %403 = vmatprep.subr.bf16.mxu0 %v340
      %404 = vmatpush1.bf16.msra.mxu0 %v339
      %405 = vmatprep.subr.bf16.mxu0 %v342
      %406 = vmatpush1.bf16.msra.mxu0 %v341
      %407 = vmatprep.subr.bf16.mxu0 %v344
      %408 = vmatpush1.bf16.msra.mxu0 %v343
      %409 = vmatprep.subr.bf16.mxu0 %v346
      %410 = vmatpush1.bf16.msra.mxu0 %v345
      %411 = vmatprep.subr.bf16.mxu0 %v348
      %412 = vmatpush1.bf16.msra.mxu0 %v347
      %413 = vmatprep.subr.bf16.mxu0 %v350
      %414 = vmatpush1.bf16.msra.mxu0 %v349
      %415 = vmatprep.subr.bf16.mxu0 %v352
      %416 = vmatpush1.bf16.msra.mxu0 %v351
      %417 = vmatprep.subr.bf16.mxu0 %v354
      %418 = vmatpush1.bf16.msra.mxu0 %v353
      %419 = vmatprep.subr.bf16.mxu0 %v356
      %420 = vmatpush1.bf16.msra.mxu0 %v355
      %421 = vmatprep.subr.bf16.mxu0 %v358
      %422 = vmatpush1.bf16.msra.mxu0 %v357
      %423 = vmatprep.subr.bf16.mxu0 %v360
      %424 = vmatpush1.bf16.msra.mxu0 %v359
      %425 = vmatprep.subr.bf16.mxu0 %v362
      %426 = vmatpush1.bf16.msra.mxu0 %v361
      %427 = vmatprep.mubr.bf16.mxu0 %v232
      %428 = vmatmul.mubr.bf16.gmra.mrb[0].mxu0 %v231
      %v429 = vpop.f32.mrb[0].mxu0
      %v430 = vadd.f32 %v218, %v429
      %v431 = vpop.f32.mrb[0].mxu0
      %v432 = vadd.f32 %v222, %v431
      %v433 = vpop.f32.mrb[0].mxu0
      %v434 = vadd.f32 %v218, %v433
      %v435 = vpop.f32.mrb[0].mxu0
      %v436 = vadd.f32 %v222, %v435
      %437 = vdwg.mxu0
      %v438 = vmax.f32 %v430, %v432
      %439 = vmax.xlane.f32.xlu0 %v438
      %v440 = vpop.xlane.xlu0 %439
      %v441 = vmax.f32 %v434, %v436
      %442 = vmax.xlane.f32.xlu0 %v441
      %v443 = vpop.xlane.xlu0 %442
      %v444 = vsub.f32 %v430, %v440
      %v445 = vsub.f32 %v432, %v440
      %v446 = vsub.f32 %v434, %v443
      %v447 = vsub.f32 %v436, %v443
      %v448 = vmul.f32 %v444, 1.442695
      %v449 = vpow.pop %v448
      %v450 = vmul.f32 %v445, 1.442695
      %v451 = vpow.pop %v450
      %v452 = vmul.f32 %v446, 1.442695
      %v453 = vpow.pop %v452
      %v454 = vmul.f32 %v447, 1.442695
      %v455 = vpow.pop %v454
      %v456 = vadd.f32 %v449, %v451
      %457 = vadd.xlane.f32.xlu0 %v456
      %v458 = vpop.xlane.xlu0 %457
      %v459 = vadd.f32 %v453, %v455
      %460 = vadd.xlane.f32.xlu0 %v459
      %v461 = vpop.xlane.xlu0 %460
      %v462 = vlog2.pop %v458
      %v463 = vmul.f32 %v462, 0.6931472
      %v464 = vlog2.pop %v461
      %v465 = vmul.f32 %v464, 0.6931472
      %v466 = vsub.f32 %v444, %v463
      %v467 = vsub.f32 %v445, %v463
      %v468 = vsub.f32 %v446, %v465
      %v469 = vsub.f32 %v447, %v465
      %470 = vst [vmem:[%s177] sm:$0xff] %v466
      %471 = vst [vmem:[%s177 + $0x8] sm:$0xff] %v467
      %472 = vst [vmem:[%s177 + $0x10] sm:$0xff] %v468
      %473 = vst [vmem:[%s177 + $0x18] sm:$0xff] %v469
      %s474 = smul.u32 2, %s14
      %p475 = scmp.lt.s32.totalorder %s474, 3
      %s476 = scalar_select %p475, %s474, 3
      %s477 = smul.addr %s476, 2
      %s478 = smul.addr %s477, 8
      %s479 = scalar_lea.vmem %s3, %s478
      // Predicated region
      $region33: #{asr_forward.9} parent=31 // pred_check
        %p480 = pneg %p100
      $region34: #{asr_forward.9} parent=31 // pred_check_branch
        %482 = sbr.rel (%p480) target = $region36
      $region35: #{asr_forward.9} parent=31 // pred_region
        %s483 = smul.u32 2, %s14
      $region36: #{asr_forward.9} parent=31 // pred_fallthru
        _
    $region32: #{asr_forward.9} parent=5 // pred_fallthru
      _
    %p484 = scmp.le.s32.totalorder 2, %s9
    // Predicated region
    $region37: #{asr_forward.9} parent=5 // pred_check
      %p485 = pneg %p484
    $region38: #{asr_forward.9} parent=5 // pred_check_branch
      %487 = sbr.rel (%p485) target = $region40
    $region39: #{asr_forward.9} parent=5 // pred_region
      %s488 = ssub.s32 %s9, 2
      // Predicated region
      $region41: #{asr_forward.9} parent=39 // pred_check
        %p489 = pneg %p106
      $region42: #{asr_forward.9} parent=39 // pred_check_branch
        %491 = sbr.rel (%p489) target = $region44
      $region43: #{asr_forward.9} parent=39 // pred_region
        %s492 = smul.u32 2, %s15
        %p493 = scmp.lt.s32.totalorder %s492, 3
        %s494 = scalar_select %p493, %s492, 3
        %s495 = smul.addr %s494, 2
        %s496 = smul.addr %s495, 8
        %s497 = scalar_lea.vmem %s3, %s496
      $region44: #{asr_forward.9} parent=39 // pred_fallthru
        _
    $region40: #{asr_forward.9} parent=5 // pred_fallthru
      _
  $region6: #{asr_forward.9} parent=0 // loop_footer
    %s13 = sadd.s32 1, %s9
  $region7: #{asr_forward.9} parent=0 // loop_footer_branch
    %8 = sbr.rel target = $region3
  $region8: #{asr_forward.9} parent=0 // loop_exit
    _

// kernel: asr_forward.8
$region0: #{asr_forward.8}
  #allocation0 [shape = 'u32[]', space=smem, size = 0x4, offset = 0x4, fixed_abs, tag = 'smem constant byte address 0x4 - core index']
  #allocation1 [shape = 'u32[144,128]{1,0:T(1,128)}', space=vmem, size = 0x12000, scoped, tag = 'internal scratch']
  %s0 = inlined_call_operand.vmem [shape: bf16[32,256], index: 0, kind: input, shape index: {}]
  %s1 = inlined_call_operand.vmem [shape: bf16[256,512], index: 1, kind: input, shape index: {}]
  %s2 = inlined_call_operand.vmem [shape: f32[1,512], index: 2, kind: input, shape index: {}]
  %s3 = inlined_call_operand.vmem [shape: bf16[512,256], index: 3, kind: input, shape index: {}]
  %s4 = inlined_call_operand.vmem [shape: f32[1,256], index: 4, kind: input, shape index: {}]
  %s5 = inlined_call_operand.vmem [shape: f32[1,256], index: 5, kind: input, shape index: {}]
  %s6 = inlined_call_operand.vmem [shape: f32[1,256], index: 6, kind: input, shape index: {}]
  %s7 = inlined_call_operand.vmem [shape: bf16[32,256], index: 7, kind: output, shape index: {}]
  %s8 = sld [smem:[#allocation0]]
  $region61: #{asr_forward.8} parent=0
    _
  %s10 = ssub.s32 1, %s8
  %s11 = scalar_select 0, %s10, %s8
  loop: start=0, step=1, limit=4
  $region2: #{asr_forward.8} parent=0 // loop_pre_header
    _
  $region3: #{asr_forward.8} parent=0 // loop_header
    %s13 = sphi 0, %s17
    %p14 = scmp.ge.s32.totalorder %s13, 4
    %s23 = sphi 0, %s25
    %s26 = sphi 0, %s23
    %s27 = sphi 0, %s26
    %s43 = sphi 0, %s27
    %s47 = sphi 0, %s47
    %s49 = sphi 0, %s47
    %s50 = sphi 0, %s49
    %s64 = sphi 0, %s50
    %s68 = sphi 0, %s68
    %s70 = sphi 0, %s68
    %s71 = sphi 0, %s70
    %s85 = sphi 0, %s71
    %s89 = sphi 0, %s89
    %s91 = sphi 0, %s89
    %s92 = sphi 0, %s91
    %s106 = sphi 0, %s92
    %s110 = sphi 0, %s110
    %s112 = sphi 0, %s110
    %s113 = sphi 0, %s112
    %s127 = sphi 0, %s113
    %s131 = sphi 0, %s131
    %s133 = sphi 0, %s131
    %s134 = sphi 0, %s133
    %s148 = sphi 0, %s134
    %s152 = sphi 0, %s152
    %s154 = sphi 0, %s152
    %s155 = sphi 0, %s154
    %s169 = sphi 0, %s155
    %s175 = sphi 0, %s177
    %s178 = sphi 0, %s175
    %s179 = sphi 0, %s178
    %s195 = sphi 0, %s179
  $region4: #{asr_forward.8} parent=0 // loop_header_branch
    %16 = sbr.rel (%p14) target = $region8
  $region5: #{asr_forward.8} parent=0 // loop_body
    %s18 = ssub.s32 %s13, 1
    %s19 = ssub.s32 %s13, 2
    %s20 = sadd.s32 %s13, 1
    %s21 = ssub.s32 %s13, %s20
    %p22 = scmp.eq.s32.totalorder %s21, 0
    %s24 = sadd.s32 %s23, 1
    %s25 = scalar_select %p22, %s23, %s24
    %p28 = pneg %p22
    %p29 = scmp.eq.s32.totalorder %s13, 1
    %p30 = por %p28, %p29
    %p31 = scmp.ne.s32.totalorder %s23, %s26
    %p32 = scmp.eq.s32.totalorder %s13, 0
    %p33 = por %p31, %p32
    %p34 = scmp.ne.s32.totalorder %s23, %s26
    %p35 = scmp.eq.s32.totalorder %s18, 1
    %p36 = por %p34, %p35
    %p37 = scmp.ne.s32.totalorder %s26, %s27
    %p38 = scmp.eq.s32.totalorder %s18, 0
    %p39 = por %p37, %p38
    %p40 = scmp.ne.s32.totalorder %s26, %s27
    %p41 = scmp.eq.s32.totalorder %s19, 1
    %p42 = por %p40, %p41
    %p44 = scmp.ne.s32.totalorder %s27, %s43
    %p45 = scmp.eq.s32.totalorder %s19, 0
    %p46 = por %p44, %p45
    %s48 = sadd.s32 %s47, 1
    %p51 = scmp.eq.s32.totalorder %s13, 1
    %p52 = scmp.ne.s32.totalorder %s47, %s49
    %p53 = scmp.eq.s32.totalorder %s13, 0
    %p54 = por %p52, %p53
    %p55 = scmp.ne.s32.totalorder %s47, %s49
    %p56 = scmp.eq.s32.totalorder %s18, 1
    %p57 = por %p55, %p56
    %p58 = scmp.ne.s32.totalorder %s49, %s50
    %p59 = scmp.eq.s32.totalorder %s18, 0
    %p60 = por %p58, %p59
    %p61 = scmp.ne.s32.totalorder %s49, %s50
    %p62 = scmp.eq.s32.totalorder %s19, 1
    %p63 = por %p61, %p62
    %p65 = scmp.ne.s32.totalorder %s50, %s64
    %p66 = scmp.eq.s32.totalorder %s19, 0
    %p67 = por %p65, %p66
    %s69 = sadd.s32 %s68, 1
    %p72 = scmp.eq.s32.totalorder %s13, 1
    %p73 = scmp.ne.s32.totalorder %s68, %s70
    %p74 = scmp.eq.s32.totalorder %s13, 0
    %p75 = por %p73, %p74
    %p76 = scmp.ne.s32.totalorder %s68, %s70
    %p77 = scmp.eq.s32.totalorder %s18, 1
    %p78 = por %p76, %p77
    %p79 = scmp.ne.s32.totalorder %s70, %s71
    %p80 = scmp.eq.s32.totalorder %s18, 0
    %p81 = por %p79, %p80
    %p82 = scmp.ne.s32.totalorder %s70, %s71
    %p83 = scmp.eq.s32.totalorder %s19, 1
    %p84 = por %p82, %p83
    %p86 = scmp.ne.s32.totalorder %s71, %s85
    %p87 = scmp.eq.s32.totalorder %s19, 0
    %p88 = por %p86, %p87
    %s90 = sadd.s32 %s89, 1
    %p93 = scmp.eq.s32.totalorder %s13, 1
    %p94 = scmp.ne.s32.totalorder %s89, %s91
    %p95 = scmp.eq.s32.totalorder %s13, 0
    %p96 = por %p94, %p95
    %p97 = scmp.ne.s32.totalorder %s89, %s91
    %p98 = scmp.eq.s32.totalorder %s18, 1
    %p99 = por %p97, %p98
    %p100 = scmp.ne.s32.totalorder %s91, %s92
    %p101 = scmp.eq.s32.totalorder %s18, 0
    %p102 = por %p100, %p101
    %p103 = scmp.ne.s32.totalorder %s91, %s92
    %p104 = scmp.eq.s32.totalorder %s19, 1
    %p105 = por %p103, %p104
    %p107 = scmp.ne.s32.totalorder %s92, %s106
    %p108 = scmp.eq.s32.totalorder %s19, 0
    %p109 = por %p107, %p108
    %s111 = sadd.s32 %s110, 1
    %p114 = scmp.eq.s32.totalorder %s13, 1
    %p115 = scmp.ne.s32.totalorder %s110, %s112
    %p116 = scmp.eq.s32.totalorder %s13, 0
    %p117 = por %p115, %p116
    %p118 = scmp.ne.s32.totalorder %s110, %s112
    %p119 = scmp.eq.s32.totalorder %s18, 1
    %p120 = por %p118, %p119
    %p121 = scmp.ne.s32.totalorder %s112, %s113
    %p122 = scmp.eq.s32.totalorder %s18, 0
    %p123 = por %p121, %p122
    %p124 = scmp.ne.s32.totalorder %s112, %s113
    %p125 = scmp.eq.s32.totalorder %s19, 1
    %p126 = por %p124, %p125
    %p128 = scmp.ne.s32.totalorder %s113, %s127
    %p129 = scmp.eq.s32.totalorder %s19, 0
    %p130 = por %p128, %p129
    %s132 = sadd.s32 %s131, 1
    %p135 = scmp.eq.s32.totalorder %s13, 1
    %p136 = scmp.ne.s32.totalorder %s131, %s133
    %p137 = scmp.eq.s32.totalorder %s13, 0
    %p138 = por %p136, %p137
    %p139 = scmp.ne.s32.totalorder %s131, %s133
    %p140 = scmp.eq.s32.totalorder %s18, 1
    %p141 = por %p139, %p140
    %p142 = scmp.ne.s32.totalorder %s133, %s134
    %p143 = scmp.eq.s32.totalorder %s18, 0
    %p144 = por %p142, %p143
    %p145 = scmp.ne.s32.totalorder %s133, %s134
    %p146 = scmp.eq.s32.totalorder %s19, 1
    %p147 = por %p145, %p146
    %p149 = scmp.ne.s32.totalorder %s134, %s148
    %p150 = scmp.eq.s32.totalorder %s19, 0
    %p151 = por %p149, %p150
    %s153 = sadd.s32 %s152, 1
    %p156 = scmp.eq.s32.totalorder %s13, 1
    %p157 = scmp.ne.s32.totalorder %s152, %s154
    %p158 = scmp.eq.s32.totalorder %s13, 0
    %p159 = por %p157, %p158
    %p160 = scmp.ne.s32.totalorder %s152, %s154
    %p161 = scmp.eq.s32.totalorder %s18, 1
    %p162 = por %p160, %p161
    %p163 = scmp.ne.s32.totalorder %s154, %s155
    %p164 = scmp.eq.s32.totalorder %s18, 0
    %p165 = por %p163, %p164
    %p166 = scmp.ne.s32.totalorder %s154, %s155
    %p167 = scmp.eq.s32.totalorder %s19, 1
    %p168 = por %p166, %p167
    %p170 = scmp.ne.s32.totalorder %s155, %s169
    %p171 = scmp.eq.s32.totalorder %s19, 0
    %p172 = por %p170, %p171
    %s173 = ssub.s32 %s13, %s20
    %p174 = scmp.eq.s32.totalorder %s173, 0
    %s176 = sadd.s32 %s175, 1
    %s177 = scalar_select %p174, %s175, %s176
    %p180 = pneg %p174
    %p181 = scmp.eq.s32.totalorder %s13, 1
    %p182 = por %p180, %p181
    %p183 = scmp.ne.s32.totalorder %s175, %s178
    %p184 = scmp.eq.s32.totalorder %s13, 0
    %p185 = por %p183, %p184
    %p186 = scmp.ne.s32.totalorder %s175, %s178
    %p187 = scmp.eq.s32.totalorder %s18, 1
    %p188 = por %p186, %p187
    %p189 = scmp.ne.s32.totalorder %s178, %s179
    %p190 = scmp.eq.s32.totalorder %s18, 0
    %p191 = por %p189, %p190
    %p192 = scmp.ne.s32.totalorder %s178, %s179
    %p193 = scmp.eq.s32.totalorder %s19, 1
    %p194 = por %p192, %p193
    %p196 = scmp.ne.s32.totalorder %s179, %s195
    %p197 = scmp.eq.s32.totalorder %s19, 0
    %p198 = por %p196, %p197
    %p199 = scmp.le.s32.totalorder 1, %s13
    %p200 = scmp.lt.s32.totalorder %s13, 3
    %p201 = pnand %p199, %p200
    %p202 = pneg %p201
    // Predicated region
    $region9: #{asr_forward.8} parent=5 // pred_check
      _
    $region10: #{asr_forward.8} parent=5 // pred_check_branch
      %204 = sbr.rel (%p201) target = $region12
    $region11: #{asr_forward.8} parent=5 // pred_region
      %s205 = ssub.s32 %s13, 1
      // Predicated region
      $region13: #{asr_forward.8} parent=11 // pred_check
        %p206 = pneg %p60
      $region14: #{asr_forward.8} parent=11 // pred_check_branch
        %208 = sbr.rel (%p206) target = $region16
      $region15: #{asr_forward.8} parent=11 // pred_region
        _
      $region16: #{asr_forward.8} parent=11 // pred_fallthru
        _
      // Predicated region
      $region17: #{asr_forward.8} parent=11 // pred_check
        %p209 = pneg %p81
      $region18: #{asr_forward.8} parent=11 // pred_check_branch
        %211 = sbr.rel (%p209) target = $region20
      $region19: #{asr_forward.8} parent=11 // pred_region
        _
      $region20: #{asr_forward.8} parent=11 // pred_fallthru
        _
      // Predicated region
      $region21: #{asr_forward.8} parent=11 // pred_check
        %p212 = pneg %p102
      $region22: #{asr_forward.8} parent=11 // pred_check_branch
        %214 = sbr.rel (%p212) target = $region24
      $region23: #{asr_forward.8} parent=11 // pred_region
        _
      $region24: #{asr_forward.8} parent=11 // pred_fallthru
        _
      // Predicated region
      $region25: #{asr_forward.8} parent=11 // pred_check
        %p215 = pneg %p123
      $region26: #{asr_forward.8} parent=11 // pred_check_branch
        %217 = sbr.rel (%p215) target = $region28
      $region27: #{asr_forward.8} parent=11 // pred_region
        _
      $region28: #{asr_forward.8} parent=11 // pred_fallthru
        _
      // Predicated region
      $region29: #{asr_forward.8} parent=11 // pred_check
        %p218 = pneg %p144
      $region30: #{asr_forward.8} parent=11 // pred_check_branch
        %220 = sbr.rel (%p218) target = $region32
      $region31: #{asr_forward.8} parent=11 // pred_region
        _
      $region32: #{asr_forward.8} parent=11 // pred_fallthru
        _
      // Predicated region
      $region33: #{asr_forward.8} parent=11 // pred_check
        %p221 = pneg %p165
      $region34: #{asr_forward.8} parent=11 // pred_check_branch
        %223 = sbr.rel (%p221) target = $region36
      $region35: #{asr_forward.8} parent=11 // pred_region
        _
      $region36: #{asr_forward.8} parent=11 // pred_fallthru
        _
    $region12: #{asr_forward.8} parent=5 // pred_fallthru
      _
    %p224 = scmp.lt.s32.totalorder %s13, 2
    // Predicated region
    $region37: #{asr_forward.8} parent=5 // pred_check
      %p225 = pneg %p224
    $region38: #{asr_forward.8} parent=5 // pred_check_branch
      %227 = sbr.rel (%p225) target = $region40
    $region39: #{asr_forward.8} parent=5 // pred_region
      // Predicated region
      $region41: #{asr_forward.8} parent=39 // pred_check
        %p228 = pneg %p33
      $region42: #{asr_forward.8} parent=39 // pred_check_branch
        %230 = sbr.rel (%p228) target = $region44
      $region43: #{asr_forward.8} parent=39 // pred_region
        %s231 = smul.u32 2, %s13
        %p232 = scmp.lt.s32.totalorder %s231, 3
        %s233 = scalar_select %p232, %s231, 3
        %s234 = smul.addr %s233, 2
        %s235 = smul.addr %s234, 4
        %s236 = scalar_lea.vmem %s0, %s235
        %s237 = smul.u32 2, %s13
      $region44: #{asr_forward.8} parent=39 // pred_fallthru
        _
    $region40: #{asr_forward.8} parent=5 // pred_fallthru
      _
    %p238 = scmp.le.s32.totalorder 1, %s13
    %p239 = scmp.lt.s32.totalorder %s13, 3
    %p240 = pnand %p238, %p239
    %p241 = pneg %p240
    // Predicated region
    $region45: #{asr_forward.8} parent=5 // pred_check
      _
    $region46: #{asr_forward.8} parent=5 // pred_check_branch
      %243 = sbr.rel (%p240) target = $region48
    $region47: #{asr_forward.8} parent=5 // pred_region
      %s244 = ssub.s32 %s13, 1
      %s245 = smul.u32 2, %s18
      %p246 = scmp.lt.s32.totalorder %s245, 3
      %s247 = scalar_select %p246, %s245, 3
      %s248 = smul.addr %s247, 2
      %s249 = smul.addr %s248, 4
      %s250 = scalar_lea.vmem %s0, %s249
      %p251 = pneg %p39
      %p252 = pneg %p36
      %p253 = pneg %p60
      %p254 = pneg %p57
      %p255 = pneg %p81
      %p256 = pneg %p78
      %p257 = pneg %p102
      %p258 = pneg %p99
      %p259 = pneg %p123
      %p260 = pneg %p120
      %p261 = pneg %p144
      %p262 = pneg %p141
      %p263 = pneg %p165
      %p264 = pneg %p162
      %p265 = pneg %p191
      %p266 = pneg %p188
      %s267 = smul.u32 2, %s18
      %p268 = scmp.lt.s32.totalorder %s267, 3
      %s269 = scalar_select %p268, %s267, 3
      %s270 = smul.addr %s269, 2
      %s271 = smul.addr %s270, 4
      %s272 = scalar_lea.vmem %s7, %s271
      %s273 = smul.u32 2, %s18
      %p274 = scmp.lt.s32.totalorder %s273, 3
      %s275 = scalar_select %p274, %s273, 3
      %s276 = smul.addr %s275, 2
      %s277 = smul.addr %s276, 4
      %s278 = scalar_lea.vmem %s0, %s277
      %s279 = smul.u32 2, %s18
      %s280 = smul.u32 2, %s18
      %p281 = scmp.lt.s32.totalorder %s280, 3
      %s282 = scalar_select %p281, %s280, 3
      %s283 = smul.addr %s282, 2
      %s284 = smul.addr %s283, 4
      %s285 = scalar_lea.vmem %s7, %s284
      %s286 = smul.u32 2, %s18
      %v287 = vld [vmem:[%s278] sm:$0xff]
      %v288 = vld [vmem:[%s278 + $0x8] sm:$0xff]
      %v289 = vld [vmem:[%s1] sm:$0xff]
      %v290 = vld [vmem:[%s1 + $0x8] sm:$0xff]
      %v291 = vld [vmem:[%s1 + $0x10] sm:$0xff]
      %v292 = vld [vmem:[%s1 + $0x18] sm:$0xff]
      %v293 = vld [vmem:[%s1 + $0x20] sm:$0xff]
      %v294 = vld [vmem:[%s1 + $0x28] sm:$0xff]
      %v295 = vld [vmem:[%s1 + $0x30] sm:$0xff]
      %v296 = vld [vmem:[%s1 + $0x38] sm:$0xff]
      %v297 = vld [vmem:[%s1 + $0x40] sm:$0xff]
      %v298 = vld [vmem:[%s1 + $0x48] sm:$0xff]
      %v299 = vld [vmem:[%s1 + $0x50] sm:$0xff]
      %v300 = vld [vmem:[%s1 + $0x58] sm:$0xff]
      %v301 = vld [vmem:[%s1 + $0x60] sm:$0xff]
      %v302 = vld [vmem:[%s1 + $0x68] sm:$0xff]
      %v303 = vld [vmem:[%s1 + $0x70] sm:$0xff]
      %v304 = vld [vmem:[%s1 + $0x78] sm:$0xff]
      %v305 = vld [vmem:[%s1 + $0x80] sm:$0xff]
      %v306 = vld [vmem:[%s1 + $0x88] sm:$0xff]
      %v307 = vld [vmem:[%s1 + $0x90] sm:$0xff]
      %v308 = vld [vmem:[%s1 + $0x98] sm:$0xff]
      %v309 = vld [vmem:[%s1 + $0xa0] sm:$0xff]
      %v310 = vld [vmem:[%s1 + $0xa8] sm:$0xff]
      %v311 = vld [vmem:[%s1 + $0xb0] sm:$0xff]
      %v312 = vld [vmem:[%s1 + $0xb8] sm:$0xff]
      %v313 = vld [vmem:[%s1 + $0xc0] sm:$0xff]
      %v314 = vld [vmem:[%s1 + $0xc8] sm:$0xff]
      %v315 = vld [vmem:[%s1 + $0xd0] sm:$0xff]
      %v316 = vld [vmem:[%s1 + $0xd8] sm:$0xff]
      %v317 = vld [vmem:[%s1 + $0xe0] sm:$0xff]
      %v318 = vld [vmem:[%s1 + $0xe8] sm:$0xff]
      %v319 = vld [vmem:[%s1 + $0xf0] sm:$0xff]
      %v320 = vld [vmem:[%s1 + $0xf8] sm:$0xff]
      %v321 = vld [vmem:[%s1 + $0x100] sm:$0xff]
      %v322 = vld [vmem:[%s1 + $0x108] sm:$0xff]
      %v323 = vld [vmem:[%s1 + $0x110] sm:$0xff]
      %v324 = vld [vmem:[%s1 + $0x118] sm:$0xff]
      %v325 = vld [vmem:[%s1 + $0x120] sm:$0xff]
      %v326 = vld [vmem:[%s1 + $0x128] sm:$0xff]
      %v327 = vld [vmem:[%s1 + $0x130] sm:$0xff]
      %v328 = vld [vmem:[%s1 + $0x138] sm:$0xff]
      %v329 = vld [vmem:[%s1 + $0x140] sm:$0xff]
      %v330 = vld [vmem:[%s1 + $0x148] sm:$0xff]
      %v331 = vld [vmem:[%s1 + $0x150] sm:$0xff]
      %v332 = vld [vmem:[%s1 + $0x158] sm:$0xff]
      %v333 = vld [vmem:[%s1 + $0x160] sm:$0xff]
      %v334 = vld [vmem:[%s1 + $0x168] sm:$0xff]
      %v335 = vld [vmem:[%s1 + $0x170] sm:$0xff]
      %v336 = vld [vmem:[%s1 + $0x178] sm:$0xff]
      %v337 = vld [vmem:[%s1 + $0x180] sm:$0xff]
      %v338 = vld [vmem:[%s1 + $0x188] sm:$0xff]
      %v339 = vld [vmem:[%s1 + $0x190] sm:$0xff]
      %v340 = vld [vmem:[%s1 + $0x198] sm:$0xff]
      %v341 = vld [vmem:[%s1 + $0x1a0] sm:$0xff]
      %v342 = vld [vmem:[%s1 + $0x1a8] sm:$0xff]
      %v343 = vld [vmem:[%s1 + $0x1b0] sm:$0xff]
      %v344 = vld [vmem:[%s1 + $0x1b8] sm:$0xff]
      %v345 = vld [vmem:[%s1 + $0x1c0] sm:$0xff]
      %v346 = vld [vmem:[%s1 + $0x1c8] sm:$0xff]
      %v347 = vld [vmem:[%s1 + $0x1d0] sm:$0xff]
      %v348 = vld [vmem:[%s1 + $0x1d8] sm:$0xff]
      %v349 = vld [vmem:[%s1 + $0x1e0] sm:$0xff]
      %v350 = vld [vmem:[%s1 + $0x1e8] sm:$0xff]
      %v351 = vld [vmem:[%s1 + $0x1f0] sm:$0xff]
      %v352 = vld [vmem:[%s1 + $0x1f8] sm:$0xff]
      %v353 = vld [vmem:[%s2] sm:$0xf]
      %v355 = vlaneseq
      %v356 = vshrl.u32 %v355, 7
      %v357 = vsub.s32 0, %v356
      %v358 = vrot.slane %v353, %v357
      %v359 = vlaneseq
      %v360 = vshrl.u32 %v359, 7
      %v361 = vsub.s32 1, %v360
      %v362 = vrot.slane %v353, %v361
      %v363 = vlaneseq
      %v364 = vshrl.u32 %v363, 7
      %v365 = vsub.s32 2, %v364
      %v366 = vrot.slane %v353, %v365
      %v367 = vlaneseq
      %v368 = vshrl.u32 %v367, 7
      %v369 = vsub.s32 3, %v368
      %v370 = vrot.slane %v353, %v369
      %v377 = vunpack.c.l.b16 %v287
      %v378 = vunpack.c.h.b16 %v287
      %v379 = vunpack.c.l.b16 %v288
      %v380 = vunpack.c.h.b16 %v288
      %v381 = vpack.c.b16 %v379, %v377
      %v382 = vpack.c.b16 %v380, %v378
      %v449 = vunpack.c.l.b16 %v289
      %v450 = vunpack.c.h.b16 %v289
      %v451 = vunpack.c.l.b16 %v290
      %v452 = vunpack.c.h.b16 %v290
      %v453 = vunpack.c.l.b16 %v291
      %v454 = vunpack.c.h.b16 %v291
      %v455 = vunpack.c.l.b16 %v292
      %v456 = vunpack.c.h.b16 %v292
      %v457 = vunpack.c.l.b16 %v293
      %v458 = vunpack.c.h.b16 %v293
      %v459 = vunpack.c.l.b16 %v294
      %v460 = vunpack.c.h.b16 %v294
      %v461 = vunpack.c.l.b16 %v295
      %v462 = vunpack.c.h.b16 %v295
      %v463 = vunpack.c.l.b16 %v296
      %v464 = vunpack.c.h.b16 %v296
      %v465 = vunpack.c.l.b16 %v297
      %v466 = vunpack.c.h.b16 %v297
      %v467 = vunpack.c.l.b16 %v298
      %v468 = vunpack.c.h.b16 %v298
      %v469 = vunpack.c.l.b16 %v299
      %v470 = vunpack.c.h.b16 %v299
      %v471 = vunpack.c.l.b16 %v300
      %v472 = vunpack.c.h.b16 %v300
      %v473 = vunpack.c.l.b16 %v301
      %v474 = vunpack.c.h.b16 %v301
      %v475 = vunpack.c.l.b16 %v302
      %v476 = vunpack.c.h.b16 %v302
      %v477 = vunpack.c.l.b16 %v303
      %v478 = vunpack.c.h.b16 %v303
      %v479 = vunpack.c.l.b16 %v304
      %v480 = vunpack.c.h.b16 %v304
      %v481 = vunpack.c.l.b16 %v305
      %v482 = vunpack.c.h.b16 %v305
      %v483 = vunpack.c.l.b16 %v306
      %v484 = vunpack.c.h.b16 %v306
      %v485 = vunpack.c.l.b16 %v307
      %v486 = vunpack.c.h.b16 %v307
      %v487 = vunpack.c.l.b16 %v308
      %v488 = vunpack.c.h.b16 %v308
      %v489 = vunpack.c.l.b16 %v309
      %v490 = vunpack.c.h.b16 %v309
      %v491 = vunpack.c.l.b16 %v310
      %v492 = vunpack.c.h.b16 %v310
      %v493 = vunpack.c.l.b16 %v311
      %v494 = vunpack.c.h.b16 %v311
      %v495 = vunpack.c.l.b16 %v312
      %v496 = vunpack.c.h.b16 %v312
      %v497 = vunpack.c.l.b16 %v313
      %v498 = vunpack.c.h.b16 %v313
      %v499 = vunpack.c.l.b16 %v314
      %v500 = vunpack.c.h.b16 %v314
      %v501 = vunpack.c.l.b16 %v315
      %v502 = vunpack.c.h.b16 %v315
      %v503 = vunpack.c.l.b16 %v316
      %v504 = vunpack.c.h.b16 %v316
      %v505 = vunpack.c.l.b16 %v317
      %v506 = vunpack.c.h.b16 %v317
      %v507 = vunpack.c.l.b16 %v318
      %v508 = vunpack.c.h.b16 %v318
      %v509 = vunpack.c.l.b16 %v319
      %v510 = vunpack.c.h.b16 %v319
      %v511 = vunpack.c.l.b16 %v320
      %v512 = vunpack.c.h.b16 %v320
      %v513 = vunpack.c.l.b16 %v321
      %v514 = vunpack.c.h.b16 %v321
      %v515 = vunpack.c.l.b16 %v322
      %v516 = vunpack.c.h.b16 %v322
      %v517 = vunpack.c.l.b16 %v323
      %v518 = vunpack.c.h.b16 %v323
      %v519 = vunpack.c.l.b16 %v324
      %v520 = vunpack.c.h.b16 %v324
      %v521 = vunpack.c.l.b16 %v325
      %v522 = vunpack.c.h.b16 %v325
      %v523 = vunpack.c.l.b16 %v326
      %v524 = vunpack.c.h.b16 %v326
      %v525 = vunpack.c.l.b16 %v327
      %v526 = vunpack.c.h.b16 %v327
      %v527 = vunpack.c.l.b16 %v328
      %v528 = vunpack.c.h.b16 %v328
      %v529 = vunpack.c.l.b16 %v329
      %v530 = vunpack.c.h.b16 %v329
      %v531 = vunpack.c.l.b16 %v330
      %v532 = vunpack.c.h.b16 %v330
      %v533 = vunpack.c.l.b16 %v331
      %v534 = vunpack.c.h.b16 %v331
      %v535 = vunpack.c.l.b16 %v332
      %v536 = vunpack.c.h.b16 %v332
      %v537 = vunpack.c.l.b16 %v333
      %v538 = vunpack.c.h.b16 %v333
      %v539 = vunpack.c.l.b16 %v334
      %v540 = vunpack.c.h.b16 %v334
      %v541 = vunpack.c.l.b16 %v335
      %v542 = vunpack.c.h.b16 %v335
      %v543 = vunpack.c.l.b16 %v336
      %v544 = vunpack.c.h.b16 %v336
      %v545 = vunpack.c.l.b16 %v337
      %v546 = vunpack.c.h.b16 %v337
      %v547 = vunpack.c.l.b16 %v338
      %v548 = vunpack.c.h.b16 %v338
      %v549 = vunpack.c.l.b16 %v339
      %v550 = vunpack.c.h.b16 %v339
      %v551 = vunpack.c.l.b16 %v340
      %v552 = vunpack.c.h.b16 %v340
      %v553 = vunpack.c.l.b16 %v341
      %v554 = vunpack.c.h.b16 %v341
      %v555 = vunpack.c.l.b16 %v342
      %v556 = vunpack.c.h.b16 %v342
      %v557 = vunpack.c.l.b16 %v343
      %v558 = vunpack.c.h.b16 %v343
      %v559 = vunpack.c.l.b16 %v344
      %v560 = vunpack.c.h.b16 %v344
      %v561 = vunpack.c.l.b16 %v345
      %v562 = vunpack.c.h.b16 %v345
      %v563 = vunpack.c.l.b16 %v346
      %v564 = vunpack.c.h.b16 %v346
      %v565 = vunpack.c.l.b16 %v347
      %v566 = vunpack.c.h.b16 %v347
      %v567 = vunpack.c.l.b16 %v348
      %v568 = vunpack.c.h.b16 %v348
      %v569 = vunpack.c.l.b16 %v349
      %v570 = vunpack.c.h.b16 %v349
      %v571 = vunpack.c.l.b16 %v350
      %v572 = vunpack.c.h.b16 %v350
      %v573 = vunpack.c.l.b16 %v351
      %v574 = vunpack.c.h.b16 %v351
      %v575 = vunpack.c.l.b16 %v352
      %v576 = vunpack.c.h.b16 %v352
      %v577 = vpack.c.b16 %v453, %v449
      %v578 = vpack.c.b16 %v454, %v450
      %v579 = vpack.c.b16 %v455, %v451
      %v580 = vpack.c.b16 %v456, %v452
      %v581 = vpack.c.b16 %v461, %v457
      %v582 = vpack.c.b16 %v462, %v458
      %v583 = vpack.c.b16 %v463, %v459
      %v584 = vpack.c.b16 %v464, %v460
      %v585 = vpack.c.b16 %v469, %v465
      %v586 = vpack.c.b16 %v470, %v466
      %v587 = vpack.c.b16 %v471, %v467
      %v588 = vpack.c.b16 %v472, %v468
      %v589 = vpack.c.b16 %v477, %v473
      %v590 = vpack.c.b16 %v478, %v474
      %v591 = vpack.c.b16 %v479, %v475
      %v592 = vpack.c.b16 %v480, %v476
      %v593 = vpack.c.b16 %v485, %v481
      %v594 = vpack.c.b16 %v486, %v482
      %v595 = vpack.c.b16 %v487, %v483
      %v596 = vpack.c.b16 %v488, %v484
      %v597 = vpack.c.b16 %v493, %v489
      %v598 = vpack.c.b16 %v494, %v490
      %v599 = vpack.c.b16 %v495, %v491
      %v600 = vpack.c.b16 %v496, %v492
      %v601 = vpack.c.b16 %v501, %v497
      %v602 = vpack.c.b16 %v502, %v498
      %v603 = vpack.c.b16 %v503, %v499
      %v604 = vpack.c.b16 %v504, %v500
      %v605 = vpack.c.b16 %v509, %v505
      %v606 = vpack.c.b16 %v510, %v506
      %v607 = vpack.c.b16 %v511, %v507
      %v608 = vpack.c.b16 %v512, %v508
      %v609 = vpack.c.b16 %v517, %v513
      %v610 = vpack.c.b16 %v518, %v514
      %v611 = vpack.c.b16 %v519, %v515
      %v612 = vpack.c.b16 %v520, %v516
      %v613 = vpack.c.b16 %v525, %v521
      %v614 = vpack.c.b16 %v526, %v522
      %v615 = vpack.c.b16 %v527, %v523
      %v616 = vpack.c.b16 %v528, %v524
      %v617 = vpack.c.b16 %v533, %v529
      %v618 = vpack.c.b16 %v534, %v530
      %v619 = vpack.c.b16 %v535, %v531
      %v620 = vpack.c.b16 %v536, %v532
      %v621 = vpack.c.b16 %v541, %v537
      %v622 = vpack.c.b16 %v542, %v538
      %v623 = vpack.c.b16 %v543, %v539
      %v624 = vpack.c.b16 %v544, %v540
      %v625 = vpack.c.b16 %v549, %v545
      %v626 = vpack.c.b16 %v550, %v546
      %v627 = vpack.c.b16 %v551, %v547
      %v628 = vpack.c.b16 %v552, %v548
      %v629 = vpack.c.b16 %v557, %v553
      %v630 = vpack.c.b16 %v558, %v554
      %v631 = vpack.c.b16 %v559, %v555
      %v632 = vpack.c.b16 %v560, %v556
      %v633 = vpack.c.b16 %v565, %v561
      %v634 = vpack.c.b16 %v566, %v562
      %v635 = vpack.c.b16 %v567, %v563
      %v636 = vpack.c.b16 %v568, %v564
      %v637 = vpack.c.b16 %v573, %v569
      %v638 = vpack.c.b16 %v574, %v570
      %v639 = vpack.c.b16 %v575, %v571
      %v640 = vpack.c.b16 %v576, %v572
      %705 = vmatprep.subr.bf16.mxu0 %v578
      %706 = vmatpush1.bf16.msra.mxu0 %v577
      %707 = vmatprep.subr.bf16.mxu0 %v582
      %708 = vmatpush1.bf16.msra.mxu0 %v581
      %709 = vmatprep.subr.bf16.mxu0 %v586
      %710 = vmatpush1.bf16.msra.mxu0 %v585
      %711 = vmatprep.subr.bf16.mxu0 %v590
      %712 = vmatpush1.bf16.msra.mxu0 %v589
      %713 = vmatprep.subr.bf16.mxu0 %v594
      %714 = vmatpush1.bf16.msra.mxu0 %v593
      %715 = vmatprep.subr.bf16.mxu0 %v598
      %716 = vmatpush1.bf16.msra.mxu0 %v597
      %717 = vmatprep.subr.bf16.mxu0 %v602
      %718 = vmatpush1.bf16.msra.mxu0 %v601
      %719 = vmatprep.subr.bf16.mxu0 %v606
      %720 = vmatpush1.bf16.msra.mxu0 %v605
      %721 = vmatprep.subr.bf16.mxu0 %v610
      %722 = vmatpush1.bf16.msra.mxu0 %v609
      %723 = vmatprep.subr.bf16.mxu0 %v614
      %724 = vmatpush1.bf16.msra.mxu0 %v613
      %725 = vmatprep.subr.bf16.mxu0 %v618
      %726 = vmatpush1.bf16.msra.mxu0 %v617
      %727 = vmatprep.subr.bf16.mxu0 %v622
      %728 = vmatpush1.bf16.msra.mxu0 %v621
      %729 = vmatprep.subr.bf16.mxu0 %v626
      %730 = vmatpush1.bf16.msra.mxu0 %v625
      %731 = vmatprep.subr.bf16.mxu0 %v630
      %732 = vmatpush1.bf16.msra.mxu0 %v629
      %733 = vmatprep.subr.bf16.mxu0 %v634
      %734 = vmatpush1.bf16.msra.mxu0 %v633
      %735 = vmatprep.subr.bf16.mxu0 %v638
      %736 = vmatpush1.bf16.msra.mxu0 %v637
      %737 = vmatprep.mubr.bf16.mxu0 %v382
      %738 = vmatmul.mubr.bf16.gmra.mrb[0].mxu0 %v381
      %v739 = vpop.f32.mrb[0].mxu0
      %v740 = vadd.f32 %v358, %v739
      %v741 = vpop.f32.mrb[0].mxu0
      %v742 = vadd.f32 %v362, %v741
      %v743 = vpop.f32.mrb[0].mxu0
      %v744 = vadd.f32 %v358, %v743
      %v745 = vpop.f32.mrb[0].mxu0
      %v746 = vadd.f32 %v362, %v745
      %747 = vdwg.mxu0
      %748 = vmatprep.subr.bf16.mxu0 %v580
      %749 = vmatpush1.bf16.msra.mxu0 %v579
      %750 = vmatprep.subr.bf16.mxu0 %v584
      %751 = vmatpush1.bf16.msra.mxu0 %v583
      %752 = vmatprep.subr.bf16.mxu0 %v588
      %753 = vmatpush1.bf16.msra.mxu0 %v587
      %754 = vmatprep.subr.bf16.mxu0 %v592
      %755 = vmatpush1.bf16.msra.mxu0 %v591
      %756 = vmatprep.subr.bf16.mxu0 %v596
      %757 = vmatpush1.bf16.msra.mxu0 %v595
      %758 = vmatprep.subr.bf16.mxu0 %v600
      %759 = vmatpush1.bf16.msra.mxu0 %v599
      %760 = vmatprep.subr.bf16.mxu0 %v604
      %761 = vmatpush1.bf16.msra.mxu0 %v603
      %762 = vmatprep.subr.bf16.mxu0 %v608
      %763 = vmatpush1.bf16.msra.mxu0 %v607
      %764 = vmatprep.subr.bf16.mxu0 %v612
      %765 = vmatpush1.bf16.msra.mxu0 %v611
      %766 = vmatprep.subr.bf16.mxu0 %v616
      %767 = vmatpush1.bf16.msra.mxu0 %v615
      %768 = vmatprep.subr.bf16.mxu0 %v620
      %769 = vmatpush1.bf16.msra.mxu0 %v619
      %770 = vmatprep.subr.bf16.mxu0 %v624
      %771 = vmatpush1.bf16.msra.mxu0 %v623
      %772 = vmatprep.subr.bf16.mxu0 %v628
      %773 = vmatpush1.bf16.msra.mxu0 %v627
      %774 = vmatprep.subr.bf16.mxu0 %v632
      %775 = vmatpush1.bf16.msra.mxu0 %v631
      %776 = vmatprep.subr.bf16.mxu0 %v636
      %777 = vmatpush1.bf16.msra.mxu0 %v635
      %778 = vmatprep.subr.bf16.mxu0 %v640
      %779 = vmatpush1.bf16.msra.mxu0 %v639
      %780 = vmatprep.mubr.bf16.mxu0 %v382
      %781 = vmatmul.mubr.bf16.gmra.mrb[0].mxu0 %v381
      %v782 = vpop.f32.mrb[0].mxu0
      %v783 = vadd.f32 %v366, %v782
      %v784 = vpop.f32.mrb[0].mxu0
      %v785 = vadd.f32 %v370, %v784
      %v786 = vpop.f32.mrb[0].mxu0
      %v787 = vadd.f32 %v366, %v786
      %v788 = vpop.f32.mrb[0].mxu0
      %v789 = vadd.f32 %v370, %v788
      %790 = vdwg.mxu0
      %v791 = vmax.f32 %v740, 0.0
      %v792 = vmax.f32 %v742, 0.0
      %v793 = vmax.f32 %v783, 0.0
      %v794 = vmax.f32 %v785, 0.0
      %v795 = vmax.f32 %v744, 0.0
      %v796 = vmax.f32 %v746, 0.0
      %v797 = vmax.f32 %v787, 0.0
      %v798 = vmax.f32 %v789, 0.0
      %v799 = vpack.c.bf16 %v795, %v791
      %v800 = vpack.c.bf16 %v796, %v792
      %v801 = vpack.c.bf16 %v797, %v793
      %v802 = vpack.c.bf16 %v798, %v794
      %v803 = vld [vmem:[%s3] sm:$0xff]
      %v804 = vld [vmem:[%s3 + $0x8] sm:$0xff]
      %v805 = vld [vmem:[%s3 + $0x10] sm:$0xff]
      %v806 = vld [vmem:[%s3 + $0x18] sm:$0xff]
      %v807 = vld [vmem:[%s3 + $0x20] sm:$0xff]
      %v808 = vld [vmem:[%s3 + $0x28] sm:$0xff]
      %v809 = vld [vmem:[%s3 + $0x30] sm:$0xff]
      %v810 = vld [vmem:[%s3 + $0x38] sm:$0xff]
      %v811 = vld [vmem:[%s3 + $0x40] sm:$0xff]
      %v812 = vld [vmem:[%s3 + $0x48] sm:$0xff]
      %v813 = vld [vmem:[%s3 + $0x50] sm:$0xff]
      %v814 = vld [vmem:[%s3 + $0x58] sm:$0xff]
      %v815 = vld [vmem:[%s3 + $0x60] sm:$0xff]
      %v816 = vld [vmem:[%s3 + $0x68] sm:$0xff]
      %v817 = vld [vmem:[%s3 + $0x70] sm:$0xff]
      %v818 = vld [vmem:[%s3 + $0x78] sm:$0xff]
      %v819 = vld [vmem:[%s3 + $0x80] sm:$0xff]
      %v820 = vld [vmem:[%s3 + $0x88] sm:$0xff]
      %v821 = vld [vmem:[%s3 + $0x90] sm:$0xff]
      %v822 = vld [vmem:[%s3 + $0x98] sm:$0xff]
      %v823 = vld [vmem:[%s3 + $0xa0] sm:$0xff]
      %v824 = vld [vmem:[%s3 + $0xa8] sm:$0xff]
      %v825 = vld [vmem:[%s3 + $0xb0] sm:$0xff]
      %v826 = vld [vmem:[%s3 + $0xb8] sm:$0xff]
      %v827 = vld [vmem:[%s3 + $0xc0] sm:$0xff]
      %v828 = vld [vmem:[%s3 + $0xc8] sm:$0xff]
      %v829 = vld [vmem:[%s3 + $0xd0] sm:$0xff]
      %v830 = vld [vmem:[%s3 + $0xd8] sm:$0xff]
      %v831 = vld [vmem:[%s3 + $0xe0] sm:$0xff]
      %v832 = vld [vmem:[%s3 + $0xe8] sm:$0xff]
      %v833 = vld [vmem:[%s3 + $0xf0] sm:$0xff]
      %v834 = vld [vmem:[%s3 + $0xf8] sm:$0xff]
      %v835 = vld [vmem:[%s3 + $0x100] sm:$0xff]
      %v836 = vld [vmem:[%s3 + $0x108] sm:$0xff]
      %v837 = vld [vmem:[%s3 + $0x110] sm:$0xff]
      %v838 = vld [vmem:[%s3 + $0x118] sm:$0xff]
      %v839 = vld [vmem:[%s3 + $0x120] sm:$0xff]
      %v840 = vld [vmem:[%s3 + $0x128] sm:$0xff]
      %v841 = vld [vmem:[%s3 + $0x130] sm:$0xff]
      %v842 = vld [vmem:[%s3 + $0x138] sm:$0xff]
      %v843 = vld [vmem:[%s3 + $0x140] sm:$0xff]
      %v844 = vld [vmem:[%s3 + $0x148] sm:$0xff]
      %v845 = vld [vmem:[%s3 + $0x150] sm:$0xff]
      %v846 = vld [vmem:[%s3 + $0x158] sm:$0xff]
      %v847 = vld [vmem:[%s3 + $0x160] sm:$0xff]
      %v848 = vld [vmem:[%s3 + $0x168] sm:$0xff]
      %v849 = vld [vmem:[%s3 + $0x170] sm:$0xff]
      %v850 = vld [vmem:[%s3 + $0x178] sm:$0xff]
      %v851 = vld [vmem:[%s3 + $0x180] sm:$0xff]
      %v852 = vld [vmem:[%s3 + $0x188] sm:$0xff]
      %v853 = vld [vmem:[%s3 + $0x190] sm:$0xff]
      %v854 = vld [vmem:[%s3 + $0x198] sm:$0xff]
      %v855 = vld [vmem:[%s3 + $0x1a0] sm:$0xff]
      %v856 = vld [vmem:[%s3 + $0x1a8] sm:$0xff]
      %v857 = vld [vmem:[%s3 + $0x1b0] sm:$0xff]
      %v858 = vld [vmem:[%s3 + $0x1b8] sm:$0xff]
      %v859 = vld [vmem:[%s3 + $0x1c0] sm:$0xff]
      %v860 = vld [vmem:[%s3 + $0x1c8] sm:$0xff]
      %v861 = vld [vmem:[%s3 + $0x1d0] sm:$0xff]
      %v862 = vld [vmem:[%s3 + $0x1d8] sm:$0xff]
      %v863 = vld [vmem:[%s3 + $0x1e0] sm:$0xff]
      %v864 = vld [vmem:[%s3 + $0x1e8] sm:$0xff]
      %v865 = vld [vmem:[%s3 + $0x1f0] sm:$0xff]
      %v866 = vld [vmem:[%s3 + $0x1f8] sm:$0xff]
      %v867 = vld [vmem:[%s4] sm:$0x3]
      %v869 = vlaneseq
      %v870 = vshrl.u32 %v869, 7
      %v871 = vsub.s32 0, %v870
      %v872 = vrot.slane %v867, %v871
      %v873 = vlaneseq
      %v874 = vshrl.u32 %v873, 7
      %v875 = vsub.s32 1, %v874
      %v876 = vrot.slane %v867, %v875
      %v943 = vunpack.c.l.b16 %v803
      %v944 = vunpack.c.h.b16 %v803
      %v945 = vunpack.c.l.b16 %v804
      %v946 = vunpack.c.h.b16 %v804
      %v947 = vunpack.c.l.b16 %v805
      %v948 = vunpack.c.h.b16 %v805
      %v949 = vunpack.c.l.b16 %v806
      %v950 = vunpack.c.h.b16 %v806
      %v951 = vunpack.c.l.b16 %v807
      %v952 = vunpack.c.h.b16 %v807
      %v953 = vunpack.c.l.b16 %v808
      %v954 = vunpack.c.h.b16 %v808
      %v955 = vunpack.c.l.b16 %v809
      %v956 = vunpack.c.h.b16 %v809
      %v957 = vunpack.c.l.b16 %v810
      %v958 = vunpack.c.h.b16 %v810
      %v959 = vunpack.c.l.b16 %v811
      %v960 = vunpack.c.h.b16 %v811
      %v961 = vunpack.c.l.b16 %v812
      %v962 = vunpack.c.h.b16 %v812
      %v963 = vunpack.c.l.b16 %v813
      %v964 = vunpack.c.h.b16 %v813
      %v965 = vunpack.c.l.b16 %v814
      %v966 = vunpack.c.h.b16 %v814
      %v967 = vunpack.c.l.b16 %v815
      %v968 = vunpack.c.h.b16 %v815
      %v969 = vunpack.c.l.b16 %v816
      %v970 = vunpack.c.h.b16 %v816
      %v971 = vunpack.c.l.b16 %v817
      %v972 = vunpack.c.h.b16 %v817
      %v973 = vunpack.c.l.b16 %v818
      %v974 = vunpack.c.h.b16 %v818
      %v975 = vunpack.c.l.b16 %v819
      %v976 = vunpack.c.h.b16 %v819
      %v977 = vunpack.c.l.b16 %v820
      %v978 = vunpack.c.h.b16 %v820
      %v979 = vunpack.c.l.b16 %v821
      %v980 = vunpack.c.h.b16 %v821
      %v981 = vunpack.c.l.b16 %v822
      %v982 = vunpack.c.h.b16 %v822
      %v983 = vunpack.c.l.b16 %v823
      %v984 = vunpack.c.h.b16 %v823
      %v985 = vunpack.c.l.b16 %v824
      %v986 = vunpack.c.h.b16 %v824
      %v987 = vunpack.c.l.b16 %v825
      %v988 = vunpack.c.h.b16 %v825
      %v989 = vunpack.c.l.b16 %v826
      %v990 = vunpack.c.h.b16 %v826
      %v991 = vunpack.c.l.b16 %v827
      %v992 = vunpack.c.h.b16 %v827
      %v993 = vunpack.c.l.b16 %v828
      %v994 = vunpack.c.h.b16 %v828
      %v995 = vunpack.c.l.b16 %v829
      %v996 = vunpack.c.h.b16 %v829
      %v997 = vunpack.c.l.b16 %v830
      %v998 = vunpack.c.h.b16 %v830
      %v999 = vunpack.c.l.b16 %v831
      %v1000 = vunpack.c.h.b16 %v831
      %v1001 = vunpack.c.l.b16 %v832
      %v1002 = vunpack.c.h.b16 %v832
      %v1003 = vunpack.c.l.b16 %v833
      %v1004 = vunpack.c.h.b16 %v833
      %v1005 = vunpack.c.l.b16 %v834
      %v1006 = vunpack.c.h.b16 %v834
      %v1007 = vunpack.c.l.b16 %v835
      %v1008 = vunpack.c.h.b16 %v835
      %v1009 = vunpack.c.l.b16 %v836
      %v1010 = vunpack.c.h.b16 %v836
      %v1011 = vunpack.c.l.b16 %v837
      %v1012 = vunpack.c.h.b16 %v837
      %v1013 = vunpack.c.l.b16 %v838
      %v1014 = vunpack.c.h.b16 %v838
      %v1015 = vunpack.c.l.b16 %v839
      %v1016 = vunpack.c.h.b16 %v839
      %v1017 = vunpack.c.l.b16 %v840
      %v1018 = vunpack.c.h.b16 %v840
      %v1019 = vunpack.c.l.b16 %v841
      %v1020 = vunpack.c.h.b16 %v841
      %v1021 = vunpack.c.l.b16 %v842
      %v1022 = vunpack.c.h.b16 %v842
      %v1023 = vunpack.c.l.b16 %v843
      %v1024 = vunpack.c.h.b16 %v843
      %v1025 = vunpack.c.l.b16 %v844
      %v1026 = vunpack.c.h.b16 %v844
      %v1027 = vunpack.c.l.b16 %v845
      %v1028 = vunpack.c.h.b16 %v845
      %v1029 = vunpack.c.l.b16 %v846
      %v1030 = vunpack.c.h.b16 %v846
      %v1031 = vunpack.c.l.b16 %v847
      %v1032 = vunpack.c.h.b16 %v847
      %v1033 = vunpack.c.l.b16 %v848
      %v1034 = vunpack.c.h.b16 %v848
      %v1035 = vunpack.c.l.b16 %v849
      %v1036 = vunpack.c.h.b16 %v849
      %v1037 = vunpack.c.l.b16 %v850
      %v1038 = vunpack.c.h.b16 %v850
      %v1039 = vunpack.c.l.b16 %v851
      %v1040 = vunpack.c.h.b16 %v851
      %v1041 = vunpack.c.l.b16 %v852
      %v1042 = vunpack.c.h.b16 %v852
      %v1043 = vunpack.c.l.b16 %v853
      %v1044 = vunpack.c.h.b16 %v853
      %v1045 = vunpack.c.l.b16 %v854
      %v1046 = vunpack.c.h.b16 %v854
      %v1047 = vunpack.c.l.b16 %v855
      %v1048 = vunpack.c.h.b16 %v855
      %v1049 = vunpack.c.l.b16 %v856
      %v1050 = vunpack.c.h.b16 %v856
      %v1051 = vunpack.c.l.b16 %v857
      %v1052 = vunpack.c.h.b16 %v857
      %v1053 = vunpack.c.l.b16 %v858
      %v1054 = vunpack.c.h.b16 %v858
      %v1055 = vunpack.c.l.b16 %v859
      %v1056 = vunpack.c.h.b16 %v859
      %v1057 = vunpack.c.l.b16 %v860
      %v1058 = vunpack.c.h.b16 %v860
      %v1059 = vunpack.c.l.b16 %v861
      %v1060 = vunpack.c.h.b16 %v861
      %v1061 = vunpack.c.l.b16 %v862
      %v1062 = vunpack.c.h.b16 %v862
      %v1063 = vunpack.c.l.b16 %v863
      %v1064 = vunpack.c.h.b16 %v863
      %v1065 = vunpack.c.l.b16 %v864
      %v1066 = vunpack.c.h.b16 %v864
      %v1067 = vunpack.c.l.b16 %v865
      %v1068 = vunpack.c.h.b16 %v865
      %v1069 = vunpack.c.l.b16 %v866
      %v1070 = vunpack.c.h.b16 %v866
      %v1071 = vpack.c.b16 %v945, %v943
      %v1072 = vpack.c.b16 %v946, %v944
      %v1073 = vpack.c.b16 %v949, %v947
      %v1074 = vpack.c.b16 %v950, %v948
      %v1075 = vpack.c.b16 %v953, %v951
      %v1076 = vpack.c.b16 %v954, %v952
      %v1077 = vpack.c.b16 %v957, %v955
      %v1078 = vpack.c.b16 %v958, %v956
      %v1079 = vpack.c.b16 %v961, %v959
      %v1080 = vpack.c.b16 %v962, %v960
      %v1081 = vpack.c.b16 %v965, %v963
      %v1082 = vpack.c.b16 %v966, %v964
      %v1083 = vpack.c.b16 %v969, %v967
      %v1084 = vpack.c.b16 %v970, %v968
      %v1085 = vpack.c.b16 %v973, %v971
      %v1086 = vpack.c.b16 %v974, %v972
      %v1087 = vpack.c.b16 %v977, %v975
      %v1088 = vpack.c.b16 %v978, %v976
      %v1089 = vpack.c.b16 %v981, %v979
      %v1090 = vpack.c.b16 %v982, %v980
      %v1091 = vpack.c.b16 %v985, %v983
      %v1092 = vpack.c.b16 %v986, %v984
      %v1093 = vpack.c.b16 %v989, %v987
      %v1094 = vpack.c.b16 %v990, %v988
      %v1095 = vpack.c.b16 %v993, %v991
      %v1096 = vpack.c.b16 %v994, %v992
      %v1097 = vpack.c.b16 %v997, %v995
      %v1098 = vpack.c.b16 %v998, %v996
      %v1099 = vpack.c.b16 %v1001, %v999
      %v1100 = vpack.c.b16 %v1002, %v1000
      %v1101 = vpack.c.b16 %v1005, %v1003
      %v1102 = vpack.c.b16 %v1006, %v1004
      %v1103 = vpack.c.b16 %v1009, %v1007
      %v1104 = vpack.c.b16 %v1010, %v1008
      %v1105 = vpack.c.b16 %v1013, %v1011
      %v1106 = vpack.c.b16 %v1014, %v1012
      %v1107 = vpack.c.b16 %v1017, %v1015
      %v1108 = vpack.c.b16 %v1018, %v1016
      %v1109 = vpack.c.b16 %v1021, %v1019
      %v1110 = vpack.c.b16 %v1022, %v1020
      %v1111 = vpack.c.b16 %v1025, %v1023
      %v1112 = vpack.c.b16 %v1026, %v1024
      %v1113 = vpack.c.b16 %v1029, %v1027
      %v1114 = vpack.c.b16 %v1030, %v1028
      %v1115 = vpack.c.b16 %v1033, %v1031
      %v1116 = vpack.c.b16 %v1034, %v1032
      %v1117 = vpack.c.b16 %v1037, %v1035
      %v1118 = vpack.c.b16 %v1038, %v1036
      %v1119 = vpack.c.b16 %v1041, %v1039
      %v1120 = vpack.c.b16 %v1042, %v1040
      %v1121 = vpack.c.b16 %v1045, %v1043
      %v1122 = vpack.c.b16 %v1046, %v1044
      %v1123 = vpack.c.b16 %v1049, %v1047
      %v1124 = vpack.c.b16 %v1050, %v1048
      %v1125 = vpack.c.b16 %v1053, %v1051
      %v1126 = vpack.c.b16 %v1054, %v1052
      %v1127 = vpack.c.b16 %v1057, %v1055
      %v1128 = vpack.c.b16 %v1058, %v1056
      %v1129 = vpack.c.b16 %v1061, %v1059
      %v1130 = vpack.c.b16 %v1062, %v1060
      %v1131 = vpack.c.b16 %v1065, %v1063
      %v1132 = vpack.c.b16 %v1066, %v1064
      %v1133 = vpack.c.b16 %v1069, %v1067
      %v1134 = vpack.c.b16 %v1070, %v1068
      %1199 = vmatprep.subr.bf16.mxu0 %v1072
      %1200 = vmatpush1.bf16.msra.mxu0 %v1071
      %1201 = vmatprep.subr.bf16.mxu0 %v1074
      %1202 = vmatpush1.bf16.msra.mxu0 %v1073
      %1203 = vmatprep.subr.bf16.mxu0 %v1076
      %1204 = vmatpush1.bf16.msra.mxu0 %v1075
      %1205 = vmatprep.subr.bf16.mxu0 %v1078
      %1206 = vmatpush1.bf16.msra.mxu0 %v1077
      %1207 = vmatprep.subr.bf16.mxu0 %v1080
      %1208 = vmatpush1.bf16.msra.mxu0 %v1079
      %1209 = vmatprep.subr.bf16.mxu0 %v1082
      %1210 = vmatpush1.bf16.msra.mxu0 %v1081
      %1211 = vmatprep.subr.bf16.mxu0 %v1084
      %1212 = vmatpush1.bf16.msra.mxu0 %v1083
      %1213 = vmatprep.subr.bf16.mxu0 %v1086
      %1214 = vmatpush1.bf16.msra.mxu0 %v1085
      %1215 = vmatprep.subr.bf16.mxu0 %v1088
      %1216 = vmatpush1.bf16.msra.mxu0 %v1087
      %1217 = vmatprep.subr.bf16.mxu0 %v1090
      %1218 = vmatpush1.bf16.msra.mxu0 %v1089
      %1219 = vmatprep.subr.bf16.mxu0 %v1092
      %1220 = vmatpush1.bf16.msra.mxu0 %v1091
      %1221 = vmatprep.subr.bf16.mxu0 %v1094
      %1222 = vmatpush1.bf16.msra.mxu0 %v1093
      %1223 = vmatprep.subr.bf16.mxu0 %v1096
      %1224 = vmatpush1.bf16.msra.mxu0 %v1095
      %1225 = vmatprep.subr.bf16.mxu0 %v1098
      %1226 = vmatpush1.bf16.msra.mxu0 %v1097
      %1227 = vmatprep.subr.bf16.mxu0 %v1100
      %1228 = vmatpush1.bf16.msra.mxu0 %v1099
      %1229 = vmatprep.subr.bf16.mxu0 %v1102
      %1230 = vmatpush1.bf16.msra.mxu0 %v1101
      %1231 = vmatprep.mubr.bf16.mxu0 %v800
      %1232 = vmatmul.mubr.bf16.gmra.mrb[0].mxu0 %v799
      %v1233 = vpop.f32.mrb[0].mxu0
      %v1234 = vadd.f32 %v872, %v1233
      %v1235 = vpop.f32.mrb[0].mxu0
      %v1236 = vadd.f32 %v876, %v1235
      %v1237 = vpop.f32.mrb[0].mxu0
      %v1238 = vadd.f32 %v872, %v1237
      %v1239 = vpop.f32.mrb[0].mxu0
      %v1240 = vadd.f32 %v876, %v1239
      %1241 = vdwg.mxu0
      %1242 = vmatprep.subr.bf16.mxu0 %v1104
      %1243 = vmatpush1.bf16.msra.mxu0 %v1103
      %1244 = vmatprep.subr.bf16.mxu0 %v1106
      %1245 = vmatpush1.bf16.msra.mxu0 %v1105
      %1246 = vmatprep.subr.bf16.mxu0 %v1108
      %1247 = vmatpush1.bf16.msra.mxu0 %v1107
      %1248 = vmatprep.subr.bf16.mxu0 %v1110
      %1249 = vmatpush1.bf16.msra.mxu0 %v1109
      %1250 = vmatprep.subr.bf16.mxu0 %v1112
      %1251 = vmatpush1.bf16.msra.mxu0 %v1111
      %1252 = vmatprep.subr.bf16.mxu0 %v1114
      %1253 = vmatpush1.bf16.msra.mxu0 %v1113
      %1254 = vmatprep.subr.bf16.mxu0 %v1116
      %1255 = vmatpush1.bf16.msra.mxu0 %v1115
      %1256 = vmatprep.subr.bf16.mxu0 %v1118
      %1257 = vmatpush1.bf16.msra.mxu0 %v1117
      %1258 = vmatprep.subr.bf16.mxu0 %v1120
      %1259 = vmatpush1.bf16.msra.mxu0 %v1119
      %1260 = vmatprep.subr.bf16.mxu0 %v1122
      %1261 = vmatpush1.bf16.msra.mxu0 %v1121
      %1262 = vmatprep.subr.bf16.mxu0 %v1124
      %1263 = vmatpush1.bf16.msra.mxu0 %v1123
      %1264 = vmatprep.subr.bf16.mxu0 %v1126
      %1265 = vmatpush1.bf16.msra.mxu0 %v1125
      %1266 = vmatprep.subr.bf16.mxu0 %v1128
      %1267 = vmatpush1.bf16.msra.mxu0 %v1127
      %1268 = vmatprep.subr.bf16.mxu0 %v1130
      %1269 = vmatpush1.bf16.msra.mxu0 %v1129
      %1270 = vmatprep.subr.bf16.mxu0 %v1132
      %1271 = vmatpush1.bf16.msra.mxu0 %v1131
      %1272 = vmatprep.subr.bf16.mxu0 %v1134
      %1273 = vmatpush1.bf16.msra.mxu0 %v1133
      %1274 = vmatprep.mubr.bf16.mxu0 %v802
      %1275 = vmatmul.mubr.bf16.gmra.mrb[0].mxu0 %v801
      %v1276 = vpop.f32.mrb[0].mxu0
      %v1277 = vadd.f32 %v1234, %v1276
      %v1278 = vpop.f32.mrb[0].mxu0
      %v1279 = vadd.f32 %v1236, %v1278
      %v1280 = vpop.f32.mrb[0].mxu0
      %v1281 = vadd.f32 %v1238, %v1280
      %v1282 = vpop.f32.mrb[0].mxu0
      %v1283 = vadd.f32 %v1240, %v1282
      %1284 = vdwg.mxu0
      %v1285 = vunpack.c.l.bf16 %v287
      %v1286 = vunpack.c.h.bf16 %v287
      %v1287 = vunpack.c.l.bf16 %v288
      %v1288 = vunpack.c.h.bf16 %v288
      %v1289 = vadd.f32 %v1277, %v1285
      %v1290 = vadd.f32 %v1279, %v1286
      %v1291 = vadd.f32 %v1281, %v1287
      %v1292 = vadd.f32 %v1283, %v1288
      %v1293 = vadd.f32 %v1289, %v1290
      %1294 = vadd.xlane.f32.xlu0 %v1293
      %v1295 = vpop.xlane.xlu0 %1294
      %v1296 = vadd.f32 %v1291, %v1292
      %1297 = vadd.xlane.f32.xlu0 %v1296
      %v1298 = vpop.xlane.xlu0 %1297
      %v1299 = vrcp.pop 256.0
      %v1300 = vmul.f32 %v1295, %v1299
      %v1301 = vmul.f32 %v1298, %v1299
      %v1302 = vsub.f32 %v1289, %v1300
      %v1303 = vsub.f32 %v1290, %v1300
      %v1304 = vsub.f32 %v1291, %v1301
      %v1305 = vsub.f32 %v1292, %v1301
      %v1306 = vmul.f32 %v1302, %v1302
      %v1307 = vmul.f32 %v1303, %v1303
      %v1308 = vmul.f32 %v1304, %v1304
      %v1309 = vmul.f32 %v1305, %v1305
      %v1310 = vadd.f32 %v1306, %v1307
      %1311 = vadd.xlane.f32.xlu0 %v1310
      %v1312 = vpop.xlane.xlu0 %1311
      %v1313 = vadd.f32 %v1308, %v1309
      %1314 = vadd.xlane.f32.xlu0 %v1313
      %v1315 = vpop.xlane.xlu0 %1314
      %v1316 = vmul.f32 %v1312, %v1299
      %v1317 = vmul.f32 %v1315, %v1299
      %v1318 = vadd.f32 %v1316, 1e-05
      %v1319 = vadd.f32 %v1317, 1e-05
      %v1320 = vrsqrt.pop %v1318
      %v1321 = vrsqrt.pop %v1319
      %v1322 = vmul.f32 %v1302, %v1320
      %v1323 = vmul.f32 %v1303, %v1320
      %v1324 = vmul.f32 %v1304, %v1321
      %v1325 = vmul.f32 %v1305, %v1321
      %v1326 = vld [vmem:[%s5] sm:$0x3]
      %v1328 = vlaneseq
      %v1329 = vshrl.u32 %v1328, 7
      %v1330 = vsub.s32 0, %v1329
      %v1331 = vrot.slane %v1326, %v1330
      %v1332 = vlaneseq
      %v1333 = vshrl.u32 %v1332, 7
      %v1334 = vsub.s32 1, %v1333
      %v1335 = vrot.slane %v1326, %v1334
      %v1338 = vmul.f32 %v1322, %v1331
      %v1339 = vmul.f32 %v1323, %v1335
      %v1340 = vmul.f32 %v1324, %v1331
      %v1341 = vmul.f32 %v1325, %v1335
      %v1342 = vld [vmem:[%s6] sm:$0x3]
      %v1344 = vlaneseq
      %v1345 = vshrl.u32 %v1344, 7
      %v1346 = vsub.s32 0, %v1345
      %v1347 = vrot.slane %v1342, %v1346
      %v1348 = vlaneseq
      %v1349 = vshrl.u32 %v1348, 7
      %v1350 = vsub.s32 1, %v1349
      %v1351 = vrot.slane %v1342, %v1350
      %v1354 = vadd.f32 %v1338, %v1347
      %v1355 = vadd.f32 %v1339, %v1351
      %v1356 = vadd.f32 %v1340, %v1347
      %v1357 = vadd.f32 %v1341, %v1351
      %v1358 = vpack.c.bf16 %v1356, %v1354
      %v1359 = vpack.c.bf16 %v1357, %v1355
      %v1362 = vunpack.c.l.b16 %v1358
      %v1363 = vunpack.c.l.b16 %v1359
      %v1364 = vunpack.c.h.b16 %v1358
      %v1365 = vunpack.c.h.b16 %v1359
      %v1366 = vpack.c.b16 %v1363, %v1362
      %v1367 = vpack.c.b16 %v1365, %v1364
      %1370 = vst [vmem:[%s285] sm:$0xff] %v1366
      %1371 = vst [vmem:[%s285 + $0x8] sm:$0xff] %v1367
      %s1372 = smul.u32 2, %s18
      %p1373 = scmp.lt.s32.totalorder %s1372, 3
      %s1374 = scalar_select %p1373, %s1372, 3
      %s1375 = smul.addr %s1374, 2
      %s1376 = smul.addr %s1375, 4
      %s1377 = scalar_lea.vmem %s7, %s1376
      // Predicated region
      $region49: #{asr_forward.8} parent=47 // pred_check
        %p1378 = pneg %p188
      $region50: #{asr_forward.8} parent=47 // pred_check_branch
        %1380 = sbr.rel (%p1378) target = $region52
      $region51: #{asr_forward.8} parent=47 // pred_region
        %s1381 = smul.u32 2, %s18
      $region52: #{asr_forward.8} parent=47 // pred_fallthru
        _
    $region48: #{asr_forward.8} parent=5 // pred_fallthru
      _
    %p1382 = scmp.le.s32.totalorder 2, %s13
    // Predicated region
    $region53: #{asr_forward.8} parent=5 // pred_check
      %p1383 = pneg %p1382
    $region54: #{asr_forward.8} parent=5 // pred_check_branch
      %1385 = sbr.rel (%p1383) target = $region56
    $region55: #{asr_forward.8} parent=5 // pred_region
      %s1386 = ssub.s32 %s13, 2
      // Predicated region
      $region57: #{asr_forward.8} parent=55 // pred_check
        %p1387 = pneg %p194
      $region58: #{asr_forward.8} parent=55 // pred_check_branch
        %1389 = sbr.rel (%p1387) target = $region60
      $region59: #{asr_forward.8} parent=55 // pred_region
        %s1390 = smul.u32 2, %s19
        %p1391 = scmp.lt.s32.totalorder %s1390, 3
        %s1392 = scalar_select %p1391, %s1390, 3
        %s1393 = smul.addr %s1392, 2
        %s1394 = smul.addr %s1393, 4
        %s1395 = scalar_lea.vmem %s7, %s1394
      $region60: #{asr_forward.8} parent=55 // pred_fallthru
        _
    $region56: #{asr_forward.8} parent=5 // pred_fallthru
      _
  $region6: #{asr_forward.8} parent=0 // loop_footer
    %s17 = sadd.s32 1, %s13
  $region7: #{asr_forward.8} parent=0 // loop_footer_branch
    %12 = sbr.rel target = $region3
  $region8: #{asr_forward.8} parent=0 // loop_exit
    _

</llo_original>
